<compile_context>
chip_gen: v7x
topology: tpu7x:2x2x1
jax: 0.10.0
libtpu: 0.0.40
codegen_flags: <defaults>
</compile_context>

<pallas_src>
import functools

import jax
import jax.numpy as jnp
import numpy as np
from jax.experimental import pallas as pl
from jax.experimental.pallas import tpu as pltpu


def _squash(s):
    # (s/|s|) * |s|^2/(1+|s|^2) == s * |s| / (1 + |s|^2).
    # On padded lanes s == 0 -> sqrt(0) * recip(1) == 0 (NaN-free), unlike the
    # literal s/|s| form in the reference — do not "fix" this back.
    l2sq = jnp.sum(s * s, axis=0, keepdims=True)                 # (1, TL)
    return s * jnp.sqrt(l2sq) * pl.reciprocal(1.0 + l2sq, approx=True)


def _capsule_fc_kernel(w_ref, x_ref, o_ref, *, routing_iterations, d_in, n_out):
    """One lane-tile of TL input capsules (routing is independent per input capsule).

    w_ref: (d_in, n_out, d_out, TL)  -- bf16 or f32, cast to f32 on load
    x_ref: (d_in, TL)                -- f32
    o_ref: (d_out, TL)
    """
    xv = x_ref[...].astype(jnp.float32)                          # hoisted load + cast

    # u[j][o, l] = sum_k W[k, j, o, l] * x[k, l], kept as n_out separate (d_out, TL)
    # slabs so the routing loop never materializes an (n_out, d_out, TL) temp.
    u = []
    for j in range(n_out):
        acc = w_ref[0, j].astype(jnp.float32) * xv[0:1, :]
        for k in range(1, d_in):
            acc = acc + w_ref[k, j].astype(jnp.float32) * xv[k:k + 1, :]
        u.append(acc)

    # ---- routing iteration 1: b == 0 -> uniform softmax -> s = mean_j u[j].
    s = u[0]
    for j in range(1, n_out):
        s = s + u[j]
    v = _squash(s * (1.0 / n_out))

    # ---- routing iterations 2..R (b-update deferred from the previous iteration).
    b = None                                                      # list of (1, TL) logits
    for _ in range(2, routing_iterations + 1):
        if b is None:
            b = [jnp.sum(v * u[j], axis=0, keepdims=True) for j in range(n_out)]
        else:
            b = [b[j] + jnp.sum(v * u[j], axis=0, keepdims=True)
                 for j in range(n_out)]
        # softmax over the n_out slabs
        m = b[0]
        for j in range(1, n_out):
            m = jnp.maximum(m, b[j])
        e = [jnp.exp(b[j] - m) for j in range(n_out)]
        denom = e[0]
        for j in range(1, n_out):
            denom = denom + e[j]
        inv = pl.reciprocal(denom, approx=True)                   # EUP slot, ~free
        # s = sum_j c[j] * u[j], accumulated slab-by-slab ((d_out, TL) temps only)
        s = (e[0] * inv) * u[0]
        for j in range(1, n_out):
            s = s + (e[j] * inv) * u[j]
        v = _squash(s)

    o_ref[...] = v.astype(o_ref.dtype)


def _vmem_capacity_bytes():
    try:
        cap = getattr(pltpu.get_tpu_info(), "vmem_capacity_bytes", None)
        if cap:
            return int(cap)
    except Exception:
        pass
    return 64 * 1024 * 1024          # conservative: v7x per-TensorCore VMEM


def prepare_capsule_fc_weights(W, dtype=jnp.bfloat16):
    """One-time (parameter-init / amortized) re-layout of W for the kernel.

    (n_in, n_out, d_out, d_in) -> (d_in, n_out, d_out, n_in_padded_to_128), cast to
    `dtype` (bf16 halves the HBM bytes of the dominant W stream; the kernel
    accumulates in f32 regardless).  Must NOT be run per forward pass.
    """
    n_in, n_out, d_out, d_in = W.shape
    W_t = jnp.transpose(W, (3, 1, 2, 0)).astype(dtype)            # (d_in, n_out, d_out, n_in)
    n_pad = -(-n_in // 128) * 128
    if n_pad != n_in:
        W_t = jnp.pad(W_t, ((0, 0), (0, 0), (0, 0), (0, n_pad - n_in)))
    return W_t


def capsule_fc_pallas(W_prep, x, routing_iterations=3, tile_lanes=None,
                      vmem_budget_bytes=None):
    """W_prep: output of prepare_capsule_fc_weights; x: (num_in_caps, in_cap_dim).

    Returns (num_in_caps, out_cap_dim), matching Capsule_fc.forward (v.squeeze()).
    """
    d_in, n_out, d_out, n_pad = W_prep.shape
    n_in, d_in_x = x.shape
    assert d_in_x == d_in and n_pad % 128 == 0 and n_pad >= n_in

    # x is tiny (n_in x d_in); per-call transpose/pad of it is negligible.
    x_t = jnp.transpose(x, (1, 0)).astype(jnp.float32)            # (d_in, n_in)
    if n_pad != n_in:
        x_t = jnp.pad(x_t, ((0, 0), (0, n_pad - n_in)))

    # ---- full VMEM footprint per lane-tile (bytes), incl. double buffering.
    w_itemsize = jnp.dtype(W_prep.dtype).itemsize
    out_itemsize = jnp.dtype(x.dtype).itemsize

    def footprint(tl):
        w_blk = 2 * d_in * n_out * d_out * tl * w_itemsize        # double-buffered W
        x_blk = 2 * d_in * tl * 4
        o_blk = 2 * d_out * tl * out_itemsize
        u_byt = n_out * d_out * tl * 4                            # u slabs (VMEM-resident)
        temps = (3 * d_out + 4 * n_out + 8) * tl * 4              # s, v, b, e, misc rows
        return w_blk + x_blk + o_blk + u_byt + temps

    capacity = _vmem_capacity_bytes()
    if vmem_budget_bytes is None:
        # ~24 MiB on a 64 MiB v7x TensorCore, ~48 MiB on 128 MiB v5e/v6e.
        vmem_budget_bytes = int(0.375 * capacity)

    if tile_lanes is None:
        cands = [t for t in range(128, n_pad + 1, 128) if n_pad % t == 0]
        fits = [t for t in cands if footprint(t) <= vmem_budget_bytes]
        if not fits:
            # Nothing fits the budget: take the minimum tile; vmem_limit_bytes below
            # is derived from the true footprint (loud compile failure if it cannot
            # physically fit, never silent corruption).
            fits = [128]
        # Prefer >= 4 grid steps (>= 2 per TensorCore on v7x), then >= 2, then any;
        # among the preferred group take the largest tile (fewest fixed overheads).
        for min_steps in (4, 2, 1):
            group = [t for t in fits if n_pad // t >= min_steps]
            if group:
                tile_lanes = max(group)
                break
    assert tile_lanes % 128 == 0 and n_pad % tile_lanes == 0

    vmem_limit = int(min(0.9 * capacity,
                         max(1.5 * footprint(tile_lanes), 16 * 1024 * 1024)))

    kernel = functools.partial(_capsule_fc_kernel,
                               routing_iterations=routing_iterations,
                               d_in=d_in, n_out=n_out)
    out_t = pl.pallas_call(
        kernel,
        out_shape=jax.ShapeDtypeStruct((d_out, n_pad), x.dtype),
        grid_spec=pltpu.PrefetchScalarGridSpec(
            num_scalar_prefetch=0,
            grid=(n_pad // tile_lanes,),
            in_specs=[
                # Contiguous W stream: keep default double buffering; only raise to
                # pl.Buffered(3) if an xprof trace shows exposed per-step W DMA.
                pl.BlockSpec((d_in, n_out, d_out, tile_lanes),
                             lambda i: (0, 0, 0, i)),
                pl.BlockSpec((d_in, tile_lanes), lambda i: (0, i)),
            ],
            out_specs=pl.BlockSpec((d_out, tile_lanes), lambda i: (0, i)),
        ),
        compiler_params=pltpu.CompilerParams(
            # "parallel" shards the lane-tile grid across TensorCores; switch to
            # pltpu.CORE_PARALLEL only if an xprof trace shows no cross-core split.
            dimension_semantics=("parallel",),
            vmem_limit_bytes=vmem_limit,
        ),
    )(W_prep, x_t)

    return jnp.transpose(out_t[:, :n_in], (1, 0))                 # (n_in, d_out)


def capsule_fc_ref(W, x, routing_iterations=3):
    """Pure-JAX reference mirroring the PyTorch forward exactly."""
    u = jnp.einsum("ijok,ik->ijo", W, x)                          # (N_in, N_out, D_out)
    b = jnp.zeros(u.shape[:-1] + (1,), jnp.float32)
    v = None
    for r in range(1, routing_iterations + 1):
        c = jax.nn.softmax(b, axis=1)
        s = jnp.sum(c * u, axis=1, keepdims=True)                 # sum over N_out
        l2 = jnp.linalg.norm(s, axis=-1, keepdims=True)
        v = (s / l2) * (l2 * l2 / (1.0 + l2 * l2))
        if r != routing_iterations:
            b = b + jnp.sum(v * u, axis=-1, keepdims=True)
    return jnp.squeeze(v, axis=1)                                 # (N_in, D_out)


if __name__ == "__main__":
    key = jax.random.PRNGKey(0)

    def run_case(n_in, d_in, n_out, d_out, r, k, w_dtype):
        kw, kx = jax.random.split(k)
        W = jax.random.normal(kw, (n_in, n_out, d_out, d_in), jnp.float32)
        x = jax.random.normal(kx, (n_in, d_in), jnp.float32)
        # One-time weight re-layout (parameter-init time), NOT per forward.
        W_prep = prepare_capsule_fc_weights(W, dtype=w_dtype)
        out = jax.block_until_ready(
            capsule_fc_pallas(W_prep, x, routing_iterations=r))
        # Reference uses the same (possibly bf16-rounded) weight values so the check
        # isolates the kernel's own approximation (EUP approx reciprocals ~5e-3).
        W_ref = W_prep[..., :n_in].transpose(3, 1, 2, 0).astype(jnp.float32)
        ref = capsule_fc_ref(W_ref, x, routing_iterations=r)
        np.testing.assert_allclose(np.asarray(out), np.asarray(ref),
                                   rtol=5e-3, atol=5e-3)

    k1, k2 = jax.random.split(key)
    # CapsNet-style fc layer with bf16 weight streaming: 256 input caps (dim 8) ->
    # 16 out caps (dim 16), 3 routing iterations.
    run_case(256, 8, 16, 16, 3, k1, jnp.bfloat16)
    # Non-multiple-of-128 n_in exercises the lane-padding path; f32 weights.
    run_case(40, 8, 10, 16, 3, k2, jnp.float32)

    print("KERNEL_OK")
</pallas_src>

<mosaic_0001>
module attributes {stable_mosaic.version = 11 : i64} {
  func.func @_capsule_fc_kernel(%arg0: i32, %arg1: memref<8x16x16x128xbf16, #tpu.memory_space<vmem>>, %arg2: memref<8x128xf32, #tpu.memory_space<vmem>>, %arg3: memref<16x128xf32, #tpu.memory_space<vmem>>) attributes {dimension_semantics = [#tpu.dimension_semantics<parallel>], iteration_bounds = array<i64: 2>, scalar_prefetch = 0 : i64, scratch_operands = 0 : i64, tpu.core_type = #tpu.core_type<tc>, window_params = [{transform_indices = @transform_0, window_bounds = array<i64: 8, 16, 16, 128>}, {transform_indices = @transform_1, window_bounds = array<i64: 8, 128>}, {transform_indices = @transform_2, window_bounds = array<i64: 16, 128>}]} {
    %c0 = arith.constant 0 : index
    %c0_0 = arith.constant 0 : index
    %0 = vector.load %arg2[%c0, %c0_0] : memref<8x128xf32, #tpu.memory_space<vmem>>, vector<8x128xf32>
    %c0_1 = arith.constant 0 : index
    %c0_2 = arith.constant 0 : index
    %c0_3 = arith.constant 0 : index
    %c0_4 = arith.constant 0 : index
    %1 = vector.load %arg1[%c0_1, %c0_2, %c0_3, %c0_4] : memref<8x16x16x128xbf16, #tpu.memory_space<vmem>>, vector<1x1x16x128xbf16>
    %2 = vector.shape_cast %1 : vector<1x1x16x128xbf16> to vector<16x128xbf16>
    %3 = arith.extf %2 : vector<16x128xbf16> to vector<16x128xf32>
    %4 = vector.extract_strided_slice %0 {offsets = [0, 0], sizes = [1, 128], strides = [1, 1]} : vector<8x128xf32> to vector<1x128xf32>
    %5 = vector.broadcast %4 : vector<1x128xf32> to vector<16x128xf32>
    %6 = arith.mulf %3, %5 : vector<16x128xf32>
    %c1 = arith.constant 1 : index
    %c0_5 = arith.constant 0 : index
    %c0_6 = arith.constant 0 : index
    %c0_7 = arith.constant 0 : index
    %7 = vector.load %arg1[%c1, %c0_5, %c0_6, %c0_7] : memref<8x16x16x128xbf16, #tpu.memory_space<vmem>>, vector<1x1x16x128xbf16>
    %8 = vector.shape_cast %7 : vector<1x1x16x128xbf16> to vector<16x128xbf16>
    %9 = arith.extf %8 : vector<16x128xbf16> to vector<16x128xf32>
    %10 = vector.extract_strided_slice %0 {offsets = [1, 0], sizes = [1, 128], strides = [1, 1]} : vector<8x128xf32> to vector<1x128xf32>
    %11 = vector.broadcast %10 : vector<1x128xf32> to vector<16x128xf32>
    %12 = arith.mulf %9, %11 : vector<16x128xf32>
    %13 = arith.addf %6, %12 : vector<16x128xf32>
    %c2 = arith.constant 2 : index
    %c0_8 = arith.constant 0 : index
    %c0_9 = arith.constant 0 : index
    %c0_10 = arith.constant 0 : index
    %14 = vector.load %arg1[%c2, %c0_8, %c0_9, %c0_10] : memref<8x16x16x128xbf16, #tpu.memory_space<vmem>>, vector<1x1x16x128xbf16>
    %15 = vector.shape_cast %14 : vector<1x1x16x128xbf16> to vector<16x128xbf16>
    %16 = arith.extf %15 : vector<16x128xbf16> to vector<16x128xf32>
    %17 = vector.extract_strided_slice %0 {offsets = [2, 0], sizes = [1, 128], strides = [1, 1]} : vector<8x128xf32> to vector<1x128xf32>
    %18 = vector.broadcast %17 : vector<1x128xf32> to vector<16x128xf32>
    %19 = arith.mulf %16, %18 : vector<16x128xf32>
    %20 = arith.addf %13, %19 : vector<16x128xf32>
    %c3 = arith.constant 3 : index
    %c0_11 = arith.constant 0 : index
    %c0_12 = arith.constant 0 : index
    %c0_13 = arith.constant 0 : index
    %21 = vector.load %arg1[%c3, %c0_11, %c0_12, %c0_13] : memref<8x16x16x128xbf16, #tpu.memory_space<vmem>>, vector<1x1x16x128xbf16>
    %22 = vector.shape_cast %21 : vector<1x1x16x128xbf16> to vector<16x128xbf16>
    %23 = arith.extf %22 : vector<16x128xbf16> to vector<16x128xf32>
    %24 = vector.extract_strided_slice %0 {offsets = [3, 0], sizes = [1, 128], strides = [1, 1]} : vector<8x128xf32> to vector<1x128xf32>
    %25 = vector.broadcast %24 : vector<1x128xf32> to vector<16x128xf32>
    %26 = arith.mulf %23, %25 : vector<16x128xf32>
    %27 = arith.addf %20, %26 : vector<16x128xf32>
    %c4 = arith.constant 4 : index
    %c0_14 = arith.constant 0 : index
    %c0_15 = arith.constant 0 : index
    %c0_16 = arith.constant 0 : index
    %28 = vector.load %arg1[%c4, %c0_14, %c0_15, %c0_16] : memref<8x16x16x128xbf16, #tpu.memory_space<vmem>>, vector<1x1x16x128xbf16>
    %29 = vector.shape_cast %28 : vector<1x1x16x128xbf16> to vector<16x128xbf16>
    %30 = arith.extf %29 : vector<16x128xbf16> to vector<16x128xf32>
    %31 = vector.extract_strided_slice %0 {offsets = [4, 0], sizes = [1, 128], strides = [1, 1]} : vector<8x128xf32> to vector<1x128xf32>
    %32 = vector.broadcast %31 : vector<1x128xf32> to vector<16x128xf32>
    %33 = arith.mulf %30, %32 : vector<16x128xf32>
    %34 = arith.addf %27, %33 : vector<16x128xf32>
    %c5 = arith.constant 5 : index
    %c0_17 = arith.constant 0 : index
    %c0_18 = arith.constant 0 : index
    %c0_19 = arith.constant 0 : index
    %35 = vector.load %arg1[%c5, %c0_17, %c0_18, %c0_19] : memref<8x16x16x128xbf16, #tpu.memory_space<vmem>>, vector<1x1x16x128xbf16>
    %36 = vector.shape_cast %35 : vector<1x1x16x128xbf16> to vector<16x128xbf16>
    %37 = arith.extf %36 : vector<16x128xbf16> to vector<16x128xf32>
    %38 = vector.extract_strided_slice %0 {offsets = [5, 0], sizes = [1, 128], strides = [1, 1]} : vector<8x128xf32> to vector<1x128xf32>
    %39 = vector.broadcast %38 : vector<1x128xf32> to vector<16x128xf32>
    %40 = arith.mulf %37, %39 : vector<16x128xf32>
    %41 = arith.addf %34, %40 : vector<16x128xf32>
    %c6 = arith.constant 6 : index
    %c0_20 = arith.constant 0 : index
    %c0_21 = arith.constant 0 : index
    %c0_22 = arith.constant 0 : index
    %42 = vector.load %arg1[%c6, %c0_20, %c0_21, %c0_22] : memref<8x16x16x128xbf16, #tpu.memory_space<vmem>>, vector<1x1x16x128xbf16>
    %43 = vector.shape_cast %42 : vector<1x1x16x128xbf16> to vector<16x128xbf16>
    %44 = arith.extf %43 : vector<16x128xbf16> to vector<16x128xf32>
    %45 = vector.extract_strided_slice %0 {offsets = [6, 0], sizes = [1, 128], strides = [1, 1]} : vector<8x128xf32> to vector<1x128xf32>
    %46 = vector.broadcast %45 : vector<1x128xf32> to vector<16x128xf32>
    %47 = arith.mulf %44, %46 : vector<16x128xf32>
    %48 = arith.addf %41, %47 : vector<16x128xf32>
    %c7 = arith.constant 7 : index
    %c0_23 = arith.constant 0 : index
    %c0_24 = arith.constant 0 : index
    %c0_25 = arith.constant 0 : index
    %49 = vector.load %arg1[%c7, %c0_23, %c0_24, %c0_25] : memref<8x16x16x128xbf16, #tpu.memory_space<vmem>>, vector<1x1x16x128xbf16>
    %50 = vector.shape_cast %49 : vector<1x1x16x128xbf16> to vector<16x128xbf16>
    %51 = arith.extf %50 : vector<16x128xbf16> to vector<16x128xf32>
    %52 = vector.extract_strided_slice %0 {offsets = [7, 0], sizes = [1, 128], strides = [1, 1]} : vector<8x128xf32> to vector<1x128xf32>
    %53 = vector.broadcast %52 : vector<1x128xf32> to vector<16x128xf32>
    %54 = arith.mulf %51, %53 : vector<16x128xf32>
    %55 = arith.addf %48, %54 : vector<16x128xf32>
    %c0_26 = arith.constant 0 : index
    %c1_27 = arith.constant 1 : index
    %c0_28 = arith.constant 0 : index
    %c0_29 = arith.constant 0 : index
    %56 = vector.load %arg1[%c0_26, %c1_27, %c0_28, %c0_29] : memref<8x16x16x128xbf16, #tpu.memory_space<vmem>>, vector<1x1x16x128xbf16>
    %57 = vector.shape_cast %56 : vector<1x1x16x128xbf16> to vector<16x128xbf16>
    %58 = arith.extf %57 : vector<16x128xbf16> to vector<16x128xf32>
    %59 = vector.extract_strided_slice %0 {offsets = [0, 0], sizes = [1, 128], strides = [1, 1]} : vector<8x128xf32> to vector<1x128xf32>
    %60 = vector.broadcast %59 : vector<1x128xf32> to vector<16x128xf32>
    %61 = arith.mulf %58, %60 : vector<16x128xf32>
    %c1_30 = arith.constant 1 : index
    %c1_31 = arith.constant 1 : index
    %c0_32 = arith.constant 0 : index
    %c0_33 = arith.constant 0 : index
    %62 = vector.load %arg1[%c1_30, %c1_31, %c0_32, %c0_33] : memref<8x16x16x128xbf16, #tpu.memory_space<vmem>>, vector<1x1x16x128xbf16>
    %63 = vector.shape_cast %62 : vector<1x1x16x128xbf16> to vector<16x128xbf16>
    %64 = arith.extf %63 : vector<16x128xbf16> to vector<16x128xf32>
    %65 = vector.extract_strided_slice %0 {offsets = [1, 0], sizes = [1, 128], strides = [1, 1]} : vector<8x128xf32> to vector<1x128xf32>
    %66 = vector.broadcast %65 : vector<1x128xf32> to vector<16x128xf32>
    %67 = arith.mulf %64, %66 : vector<16x128xf32>
    %68 = arith.addf %61, %67 : vector<16x128xf32>
    %c2_34 = arith.constant 2 : index
    %c1_35 = arith.constant 1 : index
    %c0_36 = arith.constant 0 : index
    %c0_37 = arith.constant 0 : index
    %69 = vector.load %arg1[%c2_34, %c1_35, %c0_36, %c0_37] : memref<8x16x16x128xbf16, #tpu.memory_space<vmem>>, vector<1x1x16x128xbf16>
    %70 = vector.shape_cast %69 : vector<1x1x16x128xbf16> to vector<16x128xbf16>
    %71 = arith.extf %70 : vector<16x128xbf16> to vector<16x128xf32>
    %72 = vector.extract_strided_slice %0 {offsets = [2, 0], sizes = [1, 128], strides = [1, 1]} : vector<8x128xf32> to vector<1x128xf32>
    %73 = vector.broadcast %72 : vector<1x128xf32> to vector<16x128xf32>
    %74 = arith.mulf %71, %73 : vector<16x128xf32>
    %75 = arith.addf %68, %74 : vector<16x128xf32>
    %c3_38 = arith.constant 3 : index
    %c1_39 = arith.constant 1 : index
    %c0_40 = arith.constant 0 : index
    %c0_41 = arith.constant 0 : index
    %76 = vector.load %arg1[%c3_38, %c1_39, %c0_40, %c0_41] : memref<8x16x16x128xbf16, #tpu.memory_space<vmem>>, vector<1x1x16x128xbf16>
    %77 = vector.shape_cast %76 : vector<1x1x16x128xbf16> to vector<16x128xbf16>
    %78 = arith.extf %77 : vector<16x128xbf16> to vector<16x128xf32>
    %79 = vector.extract_strided_slice %0 {offsets = [3, 0], sizes = [1, 128], strides = [1, 1]} : vector<8x128xf32> to vector<1x128xf32>
    %80 = vector.broadcast %79 : vector<1x128xf32> to vector<16x128xf32>
    %81 = arith.mulf %78, %80 : vector<16x128xf32>
    %82 = arith.addf %75, %81 : vector<16x128xf32>
    %c4_42 = arith.constant 4 : index
    %c1_43 = arith.constant 1 : index
    %c0_44 = arith.constant 0 : index
    %c0_45 = arith.constant 0 : index
    %83 = vector.load %arg1[%c4_42, %c1_43, %c0_44, %c0_45] : memref<8x16x16x128xbf16, #tpu.memory_space<vmem>>, vector<1x1x16x128xbf16>
    %84 = vector.shape_cast %83 : vector<1x1x16x128xbf16> to vector<16x128xbf16>
    %85 = arith.extf %84 : vector<16x128xbf16> to vector<16x128xf32>
    %86 = vector.extract_strided_slice %0 {offsets = [4, 0], sizes = [1, 128], strides = [1, 1]} : vector<8x128xf32> to vector<1x128xf32>
    %87 = vector.broadcast %86 : vector<1x128xf32> to vector<16x128xf32>
    %88 = arith.mulf %85, %87 : vector<16x128xf32>
    %89 = arith.addf %82, %88 : vector<16x128xf32>
    %c5_46 = arith.constant 5 : index
    %c1_47 = arith.constant 1 : index
    %c0_48 = arith.constant 0 : index
    %c0_49 = arith.constant 0 : index
    %90 = vector.load %arg1[%c5_46, %c1_47, %c0_48, %c0_49] : memref<8x16x16x128xbf16, #tpu.memory_space<vmem>>, vector<1x1x16x128xbf16>
    %91 = vector.shape_cast %90 : vector<1x1x16x128xbf16> to vector<16x128xbf16>
    %92 = arith.extf %91 : vector<16x128xbf16> to vector<16x128xf32>
    %93 = vector.extract_strided_slice %0 {offsets = [5, 0], sizes = [1, 128], strides = [1, 1]} : vector<8x128xf32> to vector<1x128xf32>
    %94 = vector.broadcast %93 : vector<1x128xf32> to vector<16x128xf32>
    %95 = arith.mulf %92, %94 : vector<16x128xf32>
    %96 = arith.addf %89, %95 : vector<16x128xf32>
    %c6_50 = arith.constant 6 : index
    %c1_51 = arith.constant 1 : index
    %c0_52 = arith.constant 0 : index
    %c0_53 = arith.constant 0 : index
    %97 = vector.load %arg1[%c6_50, %c1_51, %c0_52, %c0_53] : memref<8x16x16x128xbf16, #tpu.memory_space<vmem>>, vector<1x1x16x128xbf16>
    %98 = vector.shape_cast %97 : vector<1x1x16x128xbf16> to vector<16x128xbf16>
    %99 = arith.extf %98 : vector<16x128xbf16> to vector<16x128xf32>
    %100 = vector.extract_strided_slice %0 {offsets = [6, 0], sizes = [1, 128], strides = [1, 1]} : vector<8x128xf32> to vector<1x128xf32>
    %101 = vector.broadcast %100 : vector<1x128xf32> to vector<16x128xf32>
    %102 = arith.mulf %99, %101 : vector<16x128xf32>
    %103 = arith.addf %96, %102 : vector<16x128xf32>
    %c7_54 = arith.constant 7 : index
    %c1_55 = arith.constant 1 : index
    %c0_56 = arith.constant 0 : index
    %c0_57 = arith.constant 0 : index
    %104 = vector.load %arg1[%c7_54, %c1_55, %c0_56, %c0_57] : memref<8x16x16x128xbf16, #tpu.memory_space<vmem>>, vector<1x1x16x128xbf16>
    %105 = vector.shape_cast %104 : vector<1x1x16x128xbf16> to vector<16x128xbf16>
    %106 = arith.extf %105 : vector<16x128xbf16> to vector<16x128xf32>
    %107 = vector.extract_strided_slice %0 {offsets = [7, 0], sizes = [1, 128], strides = [1, 1]} : vector<8x128xf32> to vector<1x128xf32>
    %108 = vector.broadcast %107 : vector<1x128xf32> to vector<16x128xf32>
    %109 = arith.mulf %106, %108 : vector<16x128xf32>
    %110 = arith.addf %103, %109 : vector<16x128xf32>
    %c0_58 = arith.constant 0 : index
    %c2_59 = arith.constant 2 : index
    %c0_60 = arith.constant 0 : index
    %c0_61 = arith.constant 0 : index
    %111 = vector.load %arg1[%c0_58, %c2_59, %c0_60, %c0_61] : memref<8x16x16x128xbf16, #tpu.memory_space<vmem>>, vector<1x1x16x128xbf16>
    %112 = vector.shape_cast %111 : vector<1x1x16x128xbf16> to vector<16x128xbf16>
    %113 = arith.extf %112 : vector<16x128xbf16> to vector<16x128xf32>
    %114 = vector.extract_strided_slice %0 {offsets = [0, 0], sizes = [1, 128], strides = [1, 1]} : vector<8x128xf32> to vector<1x128xf32>
    %115 = vector.broadcast %114 : vector<1x128xf32> to vector<16x128xf32>
    %116 = arith.mulf %113, %115 : vector<16x128xf32>
    %c1_62 = arith.constant 1 : index
    %c2_63 = arith.constant 2 : index
    %c0_64 = arith.constant 0 : index
    %c0_65 = arith.constant 0 : index
    %117 = vector.load %arg1[%c1_62, %c2_63, %c0_64, %c0_65] : memref<8x16x16x128xbf16, #tpu.memory_space<vmem>>, vector<1x1x16x128xbf16>
    %118 = vector.shape_cast %117 : vector<1x1x16x128xbf16> to vector<16x128xbf16>
    %119 = arith.extf %118 : vector<16x128xbf16> to vector<16x128xf32>
    %120 = vector.extract_strided_slice %0 {offsets = [1, 0], sizes = [1, 128], strides = [1, 1]} : vector<8x128xf32> to vector<1x128xf32>
    %121 = vector.broadcast %120 : vector<1x128xf32> to vector<16x128xf32>
    %122 = arith.mulf %119, %121 : vector<16x128xf32>
    %123 = arith.addf %116, %122 : vector<16x128xf32>
    %c2_66 = arith.constant 2 : index
    %c2_67 = arith.constant 2 : index
    %c0_68 = arith.constant 0 : index
    %c0_69 = arith.constant 0 : index
    %124 = vector.load %arg1[%c2_66, %c2_67, %c0_68, %c0_69] : memref<8x16x16x128xbf16, #tpu.memory_space<vmem>>, vector<1x1x16x128xbf16>
    %125 = vector.shape_cast %124 : vector<1x1x16x128xbf16> to vector<16x128xbf16>
    %126 = arith.extf %125 : vector<16x128xbf16> to vector<16x128xf32>
    %127 = vector.extract_strided_slice %0 {offsets = [2, 0], sizes = [1, 128], strides = [1, 1]} : vector<8x128xf32> to vector<1x128xf32>
    %128 = vector.broadcast %127 : vector<1x128xf32> to vector<16x128xf32>
    %129 = arith.mulf %126, %128 : vector<16x128xf32>
    %130 = arith.addf %123, %129 : vector<16x128xf32>
    %c3_70 = arith.constant 3 : index
    %c2_71 = arith.constant 2 : index
    %c0_72 = arith.constant 0 : index
    %c0_73 = arith.constant 0 : index
    %131 = vector.load %arg1[%c3_70, %c2_71, %c0_72, %c0_73] : memref<8x16x16x128xbf16, #tpu.memory_space<vmem>>, vector<1x1x16x128xbf16>
    %132 = vector.shape_cast %131 : vector<1x1x16x128xbf16> to vector<16x128xbf16>
    %133 = arith.extf %132 : vector<16x128xbf16> to vector<16x128xf32>
    %134 = vector.extract_strided_slice %0 {offsets = [3, 0], sizes = [1, 128], strides = [1, 1]} : vector<8x128xf32> to vector<1x128xf32>
    %135 = vector.broadcast %134 : vector<1x128xf32> to vector<16x128xf32>
    %136 = arith.mulf %133, %135 : vector<16x128xf32>
    %137 = arith.addf %130, %136 : vector<16x128xf32>
    %c4_74 = arith.constant 4 : index
    %c2_75 = arith.constant 2 : index
    %c0_76 = arith.constant 0 : index
    %c0_77 = arith.constant 0 : index
    %138 = vector.load %arg1[%c4_74, %c2_75, %c0_76, %c0_77] : memref<8x16x16x128xbf16, #tpu.memory_space<vmem>>, vector<1x1x16x128xbf16>
    %139 = vector.shape_cast %138 : vector<1x1x16x128xbf16> to vector<16x128xbf16>
    %140 = arith.extf %139 : vector<16x128xbf16> to vector<16x128xf32>
    %141 = vector.extract_strided_slice %0 {offsets = [4, 0], sizes = [1, 128], strides = [1, 1]} : vector<8x128xf32> to vector<1x128xf32>
    %142 = vector.broadcast %141 : vector<1x128xf32> to vector<16x128xf32>
    %143 = arith.mulf %140, %142 : vector<16x128xf32>
    %144 = arith.addf %137, %143 : vector<16x128xf32>
    %c5_78 = arith.constant 5 : index
    %c2_79 = arith.constant 2 : index
    %c0_80 = arith.constant 0 : index
    %c0_81 = arith.constant 0 : index
    %145 = vector.load %arg1[%c5_78, %c2_79, %c0_80, %c0_81] : memref<8x16x16x128xbf16, #tpu.memory_space<vmem>>, vector<1x1x16x128xbf16>
    %146 = vector.shape_cast %145 : vector<1x1x16x128xbf16> to vector<16x128xbf16>
    %147 = arith.extf %146 : vector<16x128xbf16> to vector<16x128xf32>
    %148 = vector.extract_strided_slice %0 {offsets = [5, 0], sizes = [1, 128], strides = [1, 1]} : vector<8x128xf32> to vector<1x128xf32>
    %149 = vector.broadcast %148 : vector<1x128xf32> to vector<16x128xf32>
    %150 = arith.mulf %147, %149 : vector<16x128xf32>
    %151 = arith.addf %144, %150 : vector<16x128xf32>
    %c6_82 = arith.constant 6 : index
    %c2_83 = arith.constant 2 : index
    %c0_84 = arith.constant 0 : index
    %c0_85 = arith.constant 0 : index
    %152 = vector.load %arg1[%c6_82, %c2_83, %c0_84, %c0_85] : memref<8x16x16x128xbf16, #tpu.memory_space<vmem>>, vector<1x1x16x128xbf16>
    %153 = vector.shape_cast %152 : vector<1x1x16x128xbf16> to vector<16x128xbf16>
    %154 = arith.extf %153 : vector<16x128xbf16> to vector<16x128xf32>
    %155 = vector.extract_strided_slice %0 {offsets = [6, 0], sizes = [1, 128], strides = [1, 1]} : vector<8x128xf32> to vector<1x128xf32>
    %156 = vector.broadcast %155 : vector<1x128xf32> to vector<16x128xf32>
    %157 = arith.mulf %154, %156 : vector<16x128xf32>
    %158 = arith.addf %151, %157 : vector<16x128xf32>
    %c7_86 = arith.constant 7 : index
    %c2_87 = arith.constant 2 : index
    %c0_88 = arith.constant 0 : index
    %c0_89 = arith.constant 0 : index
    %159 = vector.load %arg1[%c7_86, %c2_87, %c0_88, %c0_89] : memref<8x16x16x128xbf16, #tpu.memory_space<vmem>>, vector<1x1x16x128xbf16>
    %160 = vector.shape_cast %159 : vector<1x1x16x128xbf16> to vector<16x128xbf16>
    %161 = arith.extf %160 : vector<16x128xbf16> to vector<16x128xf32>
    %162 = vector.extract_strided_slice %0 {offsets = [7, 0], sizes = [1, 128], strides = [1, 1]} : vector<8x128xf32> to vector<1x128xf32>
    %163 = vector.broadcast %162 : vector<1x128xf32> to vector<16x128xf32>
    %164 = arith.mulf %161, %163 : vector<16x128xf32>
    %165 = arith.addf %158, %164 : vector<16x128xf32>
    %c0_90 = arith.constant 0 : index
    %c3_91 = arith.constant 3 : index
    %c0_92 = arith.constant 0 : index
    %c0_93 = arith.constant 0 : index
    %166 = vector.load %arg1[%c0_90, %c3_91, %c0_92, %c0_93] : memref<8x16x16x128xbf16, #tpu.memory_space<vmem>>, vector<1x1x16x128xbf16>
    %167 = vector.shape_cast %166 : vector<1x1x16x128xbf16> to vector<16x128xbf16>
    %168 = arith.extf %167 : vector<16x128xbf16> to vector<16x128xf32>
    %169 = vector.extract_strided_slice %0 {offsets = [0, 0], sizes = [1, 128], strides = [1, 1]} : vector<8x128xf32> to vector<1x128xf32>
    %170 = vector.broadcast %169 : vector<1x128xf32> to vector<16x128xf32>
    %171 = arith.mulf %168, %170 : vector<16x128xf32>
    %c1_94 = arith.constant 1 : index
    %c3_95 = arith.constant 3 : index
    %c0_96 = arith.constant 0 : index
    %c0_97 = arith.constant 0 : index
    %172 = vector.load %arg1[%c1_94, %c3_95, %c0_96, %c0_97] : memref<8x16x16x128xbf16, #tpu.memory_space<vmem>>, vector<1x1x16x128xbf16>
    %173 = vector.shape_cast %172 : vector<1x1x16x128xbf16> to vector<16x128xbf16>
    %174 = arith.extf %173 : vector<16x128xbf16> to vector<16x128xf32>
    %175 = vector.extract_strided_slice %0 {offsets = [1, 0], sizes = [1, 128], strides = [1, 1]} : vector<8x128xf32> to vector<1x128xf32>
    %176 = vector.broadcast %175 : vector<1x128xf32> to vector<16x128xf32>
    %177 = arith.mulf %174, %176 : vector<16x128xf32>
    %178 = arith.addf %171, %177 : vector<16x128xf32>
    %c2_98 = arith.constant 2 : index
    %c3_99 = arith.constant 3 : index
    %c0_100 = arith.constant 0 : index
    %c0_101 = arith.constant 0 : index
    %179 = vector.load %arg1[%c2_98, %c3_99, %c0_100, %c0_101] : memref<8x16x16x128xbf16, #tpu.memory_space<vmem>>, vector<1x1x16x128xbf16>
    %180 = vector.shape_cast %179 : vector<1x1x16x128xbf16> to vector<16x128xbf16>
    %181 = arith.extf %180 : vector<16x128xbf16> to vector<16x128xf32>
    %182 = vector.extract_strided_slice %0 {offsets = [2, 0], sizes = [1, 128], strides = [1, 1]} : vector<8x128xf32> to vector<1x128xf32>
    %183 = vector.broadcast %182 : vector<1x128xf32> to vector<16x128xf32>
    %184 = arith.mulf %181, %183 : vector<16x128xf32>
    %185 = arith.addf %178, %184 : vector<16x128xf32>
    %c3_102 = arith.constant 3 : index
    %c3_103 = arith.constant 3 : index
    %c0_104 = arith.constant 0 : index
    %c0_105 = arith.constant 0 : index
    %186 = vector.load %arg1[%c3_102, %c3_103, %c0_104, %c0_105] : memref<8x16x16x128xbf16, #tpu.memory_space<vmem>>, vector<1x1x16x128xbf16>
    %187 = vector.shape_cast %186 : vector<1x1x16x128xbf16> to vector<16x128xbf16>
    %188 = arith.extf %187 : vector<16x128xbf16> to vector<16x128xf32>
    %189 = vector.extract_strided_slice %0 {offsets = [3, 0], sizes = [1, 128], strides = [1, 1]} : vector<8x128xf32> to vector<1x128xf32>
    %190 = vector.broadcast %189 : vector<1x128xf32> to vector<16x128xf32>
    %191 = arith.mulf %188, %190 : vector<16x128xf32>
    %192 = arith.addf %185, %191 : vector<16x128xf32>
    %c4_106 = arith.constant 4 : index
    %c3_107 = arith.constant 3 : index
    %c0_108 = arith.constant 0 : index
    %c0_109 = arith.constant 0 : index
    %193 = vector.load %arg1[%c4_106, %c3_107, %c0_108, %c0_109] : memref<8x16x16x128xbf16, #tpu.memory_space<vmem>>, vector<1x1x16x128xbf16>
    %194 = vector.shape_cast %193 : vector<1x1x16x128xbf16> to vector<16x128xbf16>
    %195 = arith.extf %194 : vector<16x128xbf16> to vector<16x128xf32>
    %196 = vector.extract_strided_slice %0 {offsets = [4, 0], sizes = [1, 128], strides = [1, 1]} : vector<8x128xf32> to vector<1x128xf32>
    %197 = vector.broadcast %196 : vector<1x128xf32> to vector<16x128xf32>
    %198 = arith.mulf %195, %197 : vector<16x128xf32>
    %199 = arith.addf %192, %198 : vector<16x128xf32>
    %c5_110 = arith.constant 5 : index
    %c3_111 = arith.constant 3 : index
    %c0_112 = arith.constant 0 : index
    %c0_113 = arith.constant 0 : index
    %200 = vector.load %arg1[%c5_110, %c3_111, %c0_112, %c0_113] : memref<8x16x16x128xbf16, #tpu.memory_space<vmem>>, vector<1x1x16x128xbf16>
    %201 = vector.shape_cast %200 : vector<1x1x16x128xbf16> to vector<16x128xbf16>
    %202 = arith.extf %201 : vector<16x128xbf16> to vector<16x128xf32>
    %203 = vector.extract_strided_slice %0 {offsets = [5, 0], sizes = [1, 128], strides = [1, 1]} : vector<8x128xf32> to vector<1x128xf32>
    %204 = vector.broadcast %203 : vector<1x128xf32> to vector<16x128xf32>
    %205 = arith.mulf %202, %204 : vector<16x128xf32>
    %206 = arith.addf %199, %205 : vector<16x128xf32>
    %c6_114 = arith.constant 6 : index
    %c3_115 = arith.constant 3 : index
    %c0_116 = arith.constant 0 : index
    %c0_117 = arith.constant 0 : index
    %207 = vector.load %arg1[%c6_114, %c3_115, %c0_116, %c0_117] : memref<8x16x16x128xbf16, #tpu.memory_space<vmem>>, vector<1x1x16x128xbf16>
    %208 = vector.shape_cast %207 : vector<1x1x16x128xbf16> to vector<16x128xbf16>
    %209 = arith.extf %208 : vector<16x128xbf16> to vector<16x128xf32>
    %210 = vector.extract_strided_slice %0 {offsets = [6, 0], sizes = [1, 128], strides = [1, 1]} : vector<8x128xf32> to vector<1x128xf32>
    %211 = vector.broadcast %210 : vector<1x128xf32> to vector<16x128xf32>
    %212 = arith.mulf %209, %211 : vector<16x128xf32>
    %213 = arith.addf %206, %212 : vector<16x128xf32>
    %c7_118 = arith.constant 7 : index
    %c3_119 = arith.constant 3 : index
    %c0_120 = arith.constant 0 : index
    %c0_121 = arith.constant 0 : index
    %214 = vector.load %arg1[%c7_118, %c3_119, %c0_120, %c0_121] : memref<8x16x16x128xbf16, #tpu.memory_space<vmem>>, vector<1x1x16x128xbf16>
    %215 = vector.shape_cast %214 : vector<1x1x16x128xbf16> to vector<16x128xbf16>
    %216 = arith.extf %215 : vector<16x128xbf16> to vector<16x128xf32>
    %217 = vector.extract_strided_slice %0 {offsets = [7, 0], sizes = [1, 128], strides = [1, 1]} : vector<8x128xf32> to vector<1x128xf32>
    %218 = vector.broadcast %217 : vector<1x128xf32> to vector<16x128xf32>
    %219 = arith.mulf %216, %218 : vector<16x128xf32>
    %220 = arith.addf %213, %219 : vector<16x128xf32>
    %c0_122 = arith.constant 0 : index
    %c4_123 = arith.constant 4 : index
    %c0_124 = arith.constant 0 : index
    %c0_125 = arith.constant 0 : index
    %221 = vector.load %arg1[%c0_122, %c4_123, %c0_124, %c0_125] : memref<8x16x16x128xbf16, #tpu.memory_space<vmem>>, vector<1x1x16x128xbf16>
    %222 = vector.shape_cast %221 : vector<1x1x16x128xbf16> to vector<16x128xbf16>
    %223 = arith.extf %222 : vector<16x128xbf16> to vector<16x128xf32>
    %224 = vector.extract_strided_slice %0 {offsets = [0, 0], sizes = [1, 128], strides = [1, 1]} : vector<8x128xf32> to vector<1x128xf32>
    %225 = vector.broadcast %224 : vector<1x128xf32> to vector<16x128xf32>
    %226 = arith.mulf %223, %225 : vector<16x128xf32>
    %c1_126 = arith.constant 1 : index
    %c4_127 = arith.constant 4 : index
    %c0_128 = arith.constant 0 : index
    %c0_129 = arith.constant 0 : index
    %227 = vector.load %arg1[%c1_126, %c4_127, %c0_128, %c0_129] : memref<8x16x16x128xbf16, #tpu.memory_space<vmem>>, vector<1x1x16x128xbf16>
    %228 = vector.shape_cast %227 : vector<1x1x16x128xbf16> to vector<16x128xbf16>
    %229 = arith.extf %228 : vector<16x128xbf16> to vector<16x128xf32>
    %230 = vector.extract_strided_slice %0 {offsets = [1, 0], sizes = [1, 128], strides = [1, 1]} : vector<8x128xf32> to vector<1x128xf32>
    %231 = vector.broadcast %230 : vector<1x128xf32> to vector<16x128xf32>
    %232 = arith.mulf %229, %231 : vector<16x128xf32>
    %233 = arith.addf %226, %232 : vector<16x128xf32>
    %c2_130 = arith.constant 2 : index
    %c4_131 = arith.constant 4 : index
    %c0_132 = arith.constant 0 : index
    %c0_133 = arith.constant 0 : index
    %234 = vector.load %arg1[%c2_130, %c4_131, %c0_132, %c0_133] : memref<8x16x16x128xbf16, #tpu.memory_space<vmem>>, vector<1x1x16x128xbf16>
    %235 = vector.shape_cast %234 : vector<1x1x16x128xbf16> to vector<16x128xbf16>
    %236 = arith.extf %235 : vector<16x128xbf16> to vector<16x128xf32>
    %237 = vector.extract_strided_slice %0 {offsets = [2, 0], sizes = [1, 128], strides = [1, 1]} : vector<8x128xf32> to vector<1x128xf32>
    %238 = vector.broadcast %237 : vector<1x128xf32> to vector<16x128xf32>
    %239 = arith.mulf %236, %238 : vector<16x128xf32>
    %240 = arith.addf %233, %239 : vector<16x128xf32>
    %c3_134 = arith.constant 3 : index
    %c4_135 = arith.constant 4 : index
    %c0_136 = arith.constant 0 : index
    %c0_137 = arith.constant 0 : index
    %241 = vector.load %arg1[%c3_134, %c4_135, %c0_136, %c0_137] : memref<8x16x16x128xbf16, #tpu.memory_space<vmem>>, vector<1x1x16x128xbf16>
    %242 = vector.shape_cast %241 : vector<1x1x16x128xbf16> to vector<16x128xbf16>
    %243 = arith.extf %242 : vector<16x128xbf16> to vector<16x128xf32>
    %244 = vector.extract_strided_slice %0 {offsets = [3, 0], sizes = [1, 128], strides = [1, 1]} : vector<8x128xf32> to vector<1x128xf32>
    %245 = vector.broadcast %244 : vector<1x128xf32> to vector<16x128xf32>
    %246 = arith.mulf %243, %245 : vector<16x128xf32>
    %247 = arith.addf %240, %246 : vector<16x128xf32>
    %c4_138 = arith.constant 4 : index
    %c4_139 = arith.constant 4 : index
    %c0_140 = arith.constant 0 : index
    %c0_141 = arith.constant 0 : index
    %248 = vector.load %arg1[%c4_138, %c4_139, %c0_140, %c0_141] : memref<8x16x16x128xbf16, #tpu.memory_space<vmem>>, vector<1x1x16x128xbf16>
    %249 = vector.shape_cast %248 : vector<1x1x16x128xbf16> to vector<16x128xbf16>
    %250 = arith.extf %249 : vector<16x128xbf16> to vector<16x128xf32>
    %251 = vector.extract_strided_slice %0 {offsets = [4, 0], sizes = [1, 128], strides = [1, 1]} : vector<8x128xf32> to vector<1x128xf32>
    %252 = vector.broadcast %251 : vector<1x128xf32> to vector<16x128xf32>
    %253 = arith.mulf %250, %252 : vector<16x128xf32>
    %254 = arith.addf %247, %253 : vector<16x128xf32>
    %c5_142 = arith.constant 5 : index
    %c4_143 = arith.constant 4 : index
    %c0_144 = arith.constant 0 : index
    %c0_145 = arith.constant 0 : index
    %255 = vector.load %arg1[%c5_142, %c4_143, %c0_144, %c0_145] : memref<8x16x16x128xbf16, #tpu.memory_space<vmem>>, vector<1x1x16x128xbf16>
    %256 = vector.shape_cast %255 : vector<1x1x16x128xbf16> to vector<16x128xbf16>
    %257 = arith.extf %256 : vector<16x128xbf16> to vector<16x128xf32>
    %258 = vector.extract_strided_slice %0 {offsets = [5, 0], sizes = [1, 128], strides = [1, 1]} : vector<8x128xf32> to vector<1x128xf32>
    %259 = vector.broadcast %258 : vector<1x128xf32> to vector<16x128xf32>
    %260 = arith.mulf %257, %259 : vector<16x128xf32>
    %261 = arith.addf %254, %260 : vector<16x128xf32>
    %c6_146 = arith.constant 6 : index
    %c4_147 = arith.constant 4 : index
    %c0_148 = arith.constant 0 : index
    %c0_149 = arith.constant 0 : index
    %262 = vector.load %arg1[%c6_146, %c4_147, %c0_148, %c0_149] : memref<8x16x16x128xbf16, #tpu.memory_space<vmem>>, vector<1x1x16x128xbf16>
    %263 = vector.shape_cast %262 : vector<1x1x16x128xbf16> to vector<16x128xbf16>
    %264 = arith.extf %263 : vector<16x128xbf16> to vector<16x128xf32>
    %265 = vector.extract_strided_slice %0 {offsets = [6, 0], sizes = [1, 128], strides = [1, 1]} : vector<8x128xf32> to vector<1x128xf32>
    %266 = vector.broadcast %265 : vector<1x128xf32> to vector<16x128xf32>
    %267 = arith.mulf %264, %266 : vector<16x128xf32>
    %268 = arith.addf %261, %267 : vector<16x128xf32>
    %c7_150 = arith.constant 7 : index
    %c4_151 = arith.constant 4 : index
    %c0_152 = arith.constant 0 : index
    %c0_153 = arith.constant 0 : index
    %269 = vector.load %arg1[%c7_150, %c4_151, %c0_152, %c0_153] : memref<8x16x16x128xbf16, #tpu.memory_space<vmem>>, vector<1x1x16x128xbf16>
    %270 = vector.shape_cast %269 : vector<1x1x16x128xbf16> to vector<16x128xbf16>
    %271 = arith.extf %270 : vector<16x128xbf16> to vector<16x128xf32>
    %272 = vector.extract_strided_slice %0 {offsets = [7, 0], sizes = [1, 128], strides = [1, 1]} : vector<8x128xf32> to vector<1x128xf32>
    %273 = vector.broadcast %272 : vector<1x128xf32> to vector<16x128xf32>
    %274 = arith.mulf %271, %273 : vector<16x128xf32>
    %275 = arith.addf %268, %274 : vector<16x128xf32>
    %c0_154 = arith.constant 0 : index
    %c5_155 = arith.constant 5 : index
    %c0_156 = arith.constant 0 : index
    %c0_157 = arith.constant 0 : index
    %276 = vector.load %arg1[%c0_154, %c5_155, %c0_156, %c0_157] : memref<8x16x16x128xbf16, #tpu.memory_space<vmem>>, vector<1x1x16x128xbf16>
    %277 = vector.shape_cast %276 : vector<1x1x16x128xbf16> to vector<16x128xbf16>
    %278 = arith.extf %277 : vector<16x128xbf16> to vector<16x128xf32>
    %279 = vector.extract_strided_slice %0 {offsets = [0, 0], sizes = [1, 128], strides = [1, 1]} : vector<8x128xf32> to vector<1x128xf32>
    %280 = vector.broadcast %279 : vector<1x128xf32> to vector<16x128xf32>
    %281 = arith.mulf %278, %280 : vector<16x128xf32>
    %c1_158 = arith.constant 1 : index
    %c5_159 = arith.constant 5 : index
    %c0_160 = arith.constant 0 : index
    %c0_161 = arith.constant 0 : index
    %282 = vector.load %arg1[%c1_158, %c5_159, %c0_160, %c0_161] : memref<8x16x16x128xbf16, #tpu.memory_space<vmem>>, vector<1x1x16x128xbf16>
    %283 = vector.shape_cast %282 : vector<1x1x16x128xbf16> to vector<16x128xbf16>
    %284 = arith.extf %283 : vector<16x128xbf16> to vector<16x128xf32>
    %285 = vector.extract_strided_slice %0 {offsets = [1, 0], sizes = [1, 128], strides = [1, 1]} : vector<8x128xf32> to vector<1x128xf32>
    %286 = vector.broadcast %285 : vector<1x128xf32> to vector<16x128xf32>
    %287 = arith.mulf %284, %286 : vector<16x128xf32>
    %288 = arith.addf %281, %287 : vector<16x128xf32>
    %c2_162 = arith.constant 2 : index
    %c5_163 = arith.constant 5 : index
    %c0_164 = arith.constant 0 : index
    %c0_165 = arith.constant 0 : index
    %289 = vector.load %arg1[%c2_162, %c5_163, %c0_164, %c0_165] : memref<8x16x16x128xbf16, #tpu.memory_space<vmem>>, vector<1x1x16x128xbf16>
    %290 = vector.shape_cast %289 : vector<1x1x16x128xbf16> to vector<16x128xbf16>
    %291 = arith.extf %290 : vector<16x128xbf16> to vector<16x128xf32>
    %292 = vector.extract_strided_slice %0 {offsets = [2, 0], sizes = [1, 128], strides = [1, 1]} : vector<8x128xf32> to vector<1x128xf32>
    %293 = vector.broadcast %292 : vector<1x128xf32> to vector<16x128xf32>
    %294 = arith.mulf %291, %293 : vector<16x128xf32>
    %295 = arith.addf %288, %294 : vector<16x128xf32>
    %c3_166 = arith.constant 3 : index
    %c5_167 = arith.constant 5 : index
    %c0_168 = arith.constant 0 : index
    %c0_169 = arith.constant 0 : index
    %296 = vector.load %arg1[%c3_166, %c5_167, %c0_168, %c0_169] : memref<8x16x16x128xbf16, #tpu.memory_space<vmem>>, vector<1x1x16x128xbf16>
    %297 = vector.shape_cast %296 : vector<1x1x16x128xbf16> to vector<16x128xbf16>
    %298 = arith.extf %297 : vector<16x128xbf16> to vector<16x128xf32>
    %299 = vector.extract_strided_slice %0 {offsets = [3, 0], sizes = [1, 128], strides = [1, 1]} : vector<8x128xf32> to vector<1x128xf32>
    %300 = vector.broadcast %299 : vector<1x128xf32> to vector<16x128xf32>
    %301 = arith.mulf %298, %300 : vector<16x128xf32>
    %302 = arith.addf %295, %301 : vector<16x128xf32>
    %c4_170 = arith.constant 4 : index
    %c5_171 = arith.constant 5 : index
    %c0_172 = arith.constant 0 : index
    %c0_173 = arith.constant 0 : index
    %303 = vector.load %arg1[%c4_170, %c5_171, %c0_172, %c0_173] : memref<8x16x16x128xbf16, #tpu.memory_space<vmem>>, vector<1x1x16x128xbf16>
    %304 = vector.shape_cast %303 : vector<1x1x16x128xbf16> to vector<16x128xbf16>
    %305 = arith.extf %304 : vector<16x128xbf16> to vector<16x128xf32>
    %306 = vector.extract_strided_slice %0 {offsets = [4, 0], sizes = [1, 128], strides = [1, 1]} : vector<8x128xf32> to vector<1x128xf32>
    %307 = vector.broadcast %306 : vector<1x128xf32> to vector<16x128xf32>
    %308 = arith.mulf %305, %307 : vector<16x128xf32>
    %309 = arith.addf %302, %308 : vector<16x128xf32>
    %c5_174 = arith.constant 5 : index
    %c5_175 = arith.constant 5 : index
    %c0_176 = arith.constant 0 : index
    %c0_177 = arith.constant 0 : index
    %310 = vector.load %arg1[%c5_174, %c5_175, %c0_176, %c0_177] : memref<8x16x16x128xbf16, #tpu.memory_space<vmem>>, vector<1x1x16x128xbf16>
    %311 = vector.shape_cast %310 : vector<1x1x16x128xbf16> to vector<16x128xbf16>
    %312 = arith.extf %311 : vector<16x128xbf16> to vector<16x128xf32>
    %313 = vector.extract_strided_slice %0 {offsets = [5, 0], sizes = [1, 128], strides = [1, 1]} : vector<8x128xf32> to vector<1x128xf32>
    %314 = vector.broadcast %313 : vector<1x128xf32> to vector<16x128xf32>
    %315 = arith.mulf %312, %314 : vector<16x128xf32>
    %316 = arith.addf %309, %315 : vector<16x128xf32>
    %c6_178 = arith.constant 6 : index
    %c5_179 = arith.constant 5 : index
    %c0_180 = arith.constant 0 : index
    %c0_181 = arith.constant 0 : index
    %317 = vector.load %arg1[%c6_178, %c5_179, %c0_180, %c0_181] : memref<8x16x16x128xbf16, #tpu.memory_space<vmem>>, vector<1x1x16x128xbf16>
    %318 = vector.shape_cast %317 : vector<1x1x16x128xbf16> to vector<16x128xbf16>
    %319 = arith.extf %318 : vector<16x128xbf16> to vector<16x128xf32>
    %320 = vector.extract_strided_slice %0 {offsets = [6, 0], sizes = [1, 128], strides = [1, 1]} : vector<8x128xf32> to vector<1x128xf32>
    %321 = vector.broadcast %320 : vector<1x128xf32> to vector<16x128xf32>
    %322 = arith.mulf %319, %321 : vector<16x128xf32>
    %323 = arith.addf %316, %322 : vector<16x128xf32>
    %c7_182 = arith.constant 7 : index
    %c5_183 = arith.constant 5 : index
    %c0_184 = arith.constant 0 : index
    %c0_185 = arith.constant 0 : index
    %324 = vector.load %arg1[%c7_182, %c5_183, %c0_184, %c0_185] : memref<8x16x16x128xbf16, #tpu.memory_space<vmem>>, vector<1x1x16x128xbf16>
    %325 = vector.shape_cast %324 : vector<1x1x16x128xbf16> to vector<16x128xbf16>
    %326 = arith.extf %325 : vector<16x128xbf16> to vector<16x128xf32>
    %327 = vector.extract_strided_slice %0 {offsets = [7, 0], sizes = [1, 128], strides = [1, 1]} : vector<8x128xf32> to vector<1x128xf32>
    %328 = vector.broadcast %327 : vector<1x128xf32> to vector<16x128xf32>
    %329 = arith.mulf %326, %328 : vector<16x128xf32>
    %330 = arith.addf %323, %329 : vector<16x128xf32>
    %c0_186 = arith.constant 0 : index
    %c6_187 = arith.constant 6 : index
    %c0_188 = arith.constant 0 : index
    %c0_189 = arith.constant 0 : index
    %331 = vector.load %arg1[%c0_186, %c6_187, %c0_188, %c0_189] : memref<8x16x16x128xbf16, #tpu.memory_space<vmem>>, vector<1x1x16x128xbf16>
    %332 = vector.shape_cast %331 : vector<1x1x16x128xbf16> to vector<16x128xbf16>
    %333 = arith.extf %332 : vector<16x128xbf16> to vector<16x128xf32>
    %334 = vector.extract_strided_slice %0 {offsets = [0, 0], sizes = [1, 128], strides = [1, 1]} : vector<8x128xf32> to vector<1x128xf32>
    %335 = vector.broadcast %334 : vector<1x128xf32> to vector<16x128xf32>
    %336 = arith.mulf %333, %335 : vector<16x128xf32>
    %c1_190 = arith.constant 1 : index
    %c6_191 = arith.constant 6 : index
    %c0_192 = arith.constant 0 : index
    %c0_193 = arith.constant 0 : index
    %337 = vector.load %arg1[%c1_190, %c6_191, %c0_192, %c0_193] : memref<8x16x16x128xbf16, #tpu.memory_space<vmem>>, vector<1x1x16x128xbf16>
    %338 = vector.shape_cast %337 : vector<1x1x16x128xbf16> to vector<16x128xbf16>
    %339 = arith.extf %338 : vector<16x128xbf16> to vector<16x128xf32>
    %340 = vector.extract_strided_slice %0 {offsets = [1, 0], sizes = [1, 128], strides = [1, 1]} : vector<8x128xf32> to vector<1x128xf32>
    %341 = vector.broadcast %340 : vector<1x128xf32> to vector<16x128xf32>
    %342 = arith.mulf %339, %341 : vector<16x128xf32>
    %343 = arith.addf %336, %342 : vector<16x128xf32>
    %c2_194 = arith.constant 2 : index
    %c6_195 = arith.constant 6 : index
    %c0_196 = arith.constant 0 : index
    %c0_197 = arith.constant 0 : index
    %344 = vector.load %arg1[%c2_194, %c6_195, %c0_196, %c0_197] : memref<8x16x16x128xbf16, #tpu.memory_space<vmem>>, vector<1x1x16x128xbf16>
    %345 = vector.shape_cast %344 : vector<1x1x16x128xbf16> to vector<16x128xbf16>
    %346 = arith.extf %345 : vector<16x128xbf16> to vector<16x128xf32>
    %347 = vector.extract_strided_slice %0 {offsets = [2, 0], sizes = [1, 128], strides = [1, 1]} : vector<8x128xf32> to vector<1x128xf32>
    %348 = vector.broadcast %347 : vector<1x128xf32> to vector<16x128xf32>
    %349 = arith.mulf %346, %348 : vector<16x128xf32>
    %350 = arith.addf %343, %349 : vector<16x128xf32>
    %c3_198 = arith.constant 3 : index
    %c6_199 = arith.constant 6 : index
    %c0_200 = arith.constant 0 : index
    %c0_201 = arith.constant 0 : index
    %351 = vector.load %arg1[%c3_198, %c6_199, %c0_200, %c0_201] : memref<8x16x16x128xbf16, #tpu.memory_space<vmem>>, vector<1x1x16x128xbf16>
    %352 = vector.shape_cast %351 : vector<1x1x16x128xbf16> to vector<16x128xbf16>
    %353 = arith.extf %352 : vector<16x128xbf16> to vector<16x128xf32>
    %354 = vector.extract_strided_slice %0 {offsets = [3, 0], sizes = [1, 128], strides = [1, 1]} : vector<8x128xf32> to vector<1x128xf32>
    %355 = vector.broadcast %354 : vector<1x128xf32> to vector<16x128xf32>
    %356 = arith.mulf %353, %355 : vector<16x128xf32>
    %357 = arith.addf %350, %356 : vector<16x128xf32>
    %c4_202 = arith.constant 4 : index
    %c6_203 = arith.constant 6 : index
    %c0_204 = arith.constant 0 : index
    %c0_205 = arith.constant 0 : index
    %358 = vector.load %arg1[%c4_202, %c6_203, %c0_204, %c0_205] : memref<8x16x16x128xbf16, #tpu.memory_space<vmem>>, vector<1x1x16x128xbf16>
    %359 = vector.shape_cast %358 : vector<1x1x16x128xbf16> to vector<16x128xbf16>
    %360 = arith.extf %359 : vector<16x128xbf16> to vector<16x128xf32>
    %361 = vector.extract_strided_slice %0 {offsets = [4, 0], sizes = [1, 128], strides = [1, 1]} : vector<8x128xf32> to vector<1x128xf32>
    %362 = vector.broadcast %361 : vector<1x128xf32> to vector<16x128xf32>
    %363 = arith.mulf %360, %362 : vector<16x128xf32>
    %364 = arith.addf %357, %363 : vector<16x128xf32>
    %c5_206 = arith.constant 5 : index
    %c6_207 = arith.constant 6 : index
    %c0_208 = arith.constant 0 : index
    %c0_209 = arith.constant 0 : index
    %365 = vector.load %arg1[%c5_206, %c6_207, %c0_208, %c0_209] : memref<8x16x16x128xbf16, #tpu.memory_space<vmem>>, vector<1x1x16x128xbf16>
    %366 = vector.shape_cast %365 : vector<1x1x16x128xbf16> to vector<16x128xbf16>
    %367 = arith.extf %366 : vector<16x128xbf16> to vector<16x128xf32>
    %368 = vector.extract_strided_slice %0 {offsets = [5, 0], sizes = [1, 128], strides = [1, 1]} : vector<8x128xf32> to vector<1x128xf32>
    %369 = vector.broadcast %368 : vector<1x128xf32> to vector<16x128xf32>
    %370 = arith.mulf %367, %369 : vector<16x128xf32>
    %371 = arith.addf %364, %370 : vector<16x128xf32>
    %c6_210 = arith.constant 6 : index
    %c6_211 = arith.constant 6 : index
    %c0_212 = arith.constant 0 : index
    %c0_213 = arith.constant 0 : index
    %372 = vector.load %arg1[%c6_210, %c6_211, %c0_212, %c0_213] : memref<8x16x16x128xbf16, #tpu.memory_space<vmem>>, vector<1x1x16x128xbf16>
    %373 = vector.shape_cast %372 : vector<1x1x16x128xbf16> to vector<16x128xbf16>
    %374 = arith.extf %373 : vector<16x128xbf16> to vector<16x128xf32>
    %375 = vector.extract_strided_slice %0 {offsets = [6, 0], sizes = [1, 128], strides = [1, 1]} : vector<8x128xf32> to vector<1x128xf32>
    %376 = vector.broadcast %375 : vector<1x128xf32> to vector<16x128xf32>
    %377 = arith.mulf %374, %376 : vector<16x128xf32>
    %378 = arith.addf %371, %377 : vector<16x128xf32>
    %c7_214 = arith.constant 7 : index
    %c6_215 = arith.constant 6 : index
    %c0_216 = arith.constant 0 : index
    %c0_217 = arith.constant 0 : index
    %379 = vector.load %arg1[%c7_214, %c6_215, %c0_216, %c0_217] : memref<8x16x16x128xbf16, #tpu.memory_space<vmem>>, vector<1x1x16x128xbf16>
    %380 = vector.shape_cast %379 : vector<1x1x16x128xbf16> to vector<16x128xbf16>
    %381 = arith.extf %380 : vector<16x128xbf16> to vector<16x128xf32>
    %382 = vector.extract_strided_slice %0 {offsets = [7, 0], sizes = [1, 128], strides = [1, 1]} : vector<8x128xf32> to vector<1x128xf32>
    %383 = vector.broadcast %382 : vector<1x128xf32> to vector<16x128xf32>
    %384 = arith.mulf %381, %383 : vector<16x128xf32>
    %385 = arith.addf %378, %384 : vector<16x128xf32>
    %c0_218 = arith.constant 0 : index
    %c7_219 = arith.constant 7 : index
    %c0_220 = arith.constant 0 : index
    %c0_221 = arith.constant 0 : index
    %386 = vector.load %arg1[%c0_218, %c7_219, %c0_220, %c0_221] : memref<8x16x16x128xbf16, #tpu.memory_space<vmem>>, vector<1x1x16x128xbf16>
    %387 = vector.shape_cast %386 : vector<1x1x16x128xbf16> to vector<16x128xbf16>
    %388 = arith.extf %387 : vector<16x128xbf16> to vector<16x128xf32>
    %389 = vector.extract_strided_slice %0 {offsets = [0, 0], sizes = [1, 128], strides = [1, 1]} : vector<8x128xf32> to vector<1x128xf32>
    %390 = vector.broadcast %389 : vector<1x128xf32> to vector<16x128xf32>
    %391 = arith.mulf %388, %390 : vector<16x128xf32>
    %c1_222 = arith.constant 1 : index
    %c7_223 = arith.constant 7 : index
    %c0_224 = arith.constant 0 : index
    %c0_225 = arith.constant 0 : index
    %392 = vector.load %arg1[%c1_222, %c7_223, %c0_224, %c0_225] : memref<8x16x16x128xbf16, #tpu.memory_space<vmem>>, vector<1x1x16x128xbf16>
    %393 = vector.shape_cast %392 : vector<1x1x16x128xbf16> to vector<16x128xbf16>
    %394 = arith.extf %393 : vector<16x128xbf16> to vector<16x128xf32>
    %395 = vector.extract_strided_slice %0 {offsets = [1, 0], sizes = [1, 128], strides = [1, 1]} : vector<8x128xf32> to vector<1x128xf32>
    %396 = vector.broadcast %395 : vector<1x128xf32> to vector<16x128xf32>
    %397 = arith.mulf %394, %396 : vector<16x128xf32>
    %398 = arith.addf %391, %397 : vector<16x128xf32>
    %c2_226 = arith.constant 2 : index
    %c7_227 = arith.constant 7 : index
    %c0_228 = arith.constant 0 : index
    %c0_229 = arith.constant 0 : index
    %399 = vector.load %arg1[%c2_226, %c7_227, %c0_228, %c0_229] : memref<8x16x16x128xbf16, #tpu.memory_space<vmem>>, vector<1x1x16x128xbf16>
    %400 = vector.shape_cast %399 : vector<1x1x16x128xbf16> to vector<16x128xbf16>
    %401 = arith.extf %400 : vector<16x128xbf16> to vector<16x128xf32>
    %402 = vector.extract_strided_slice %0 {offsets = [2, 0], sizes = [1, 128], strides = [1, 1]} : vector<8x128xf32> to vector<1x128xf32>
    %403 = vector.broadcast %402 : vector<1x128xf32> to vector<16x128xf32>
    %404 = arith.mulf %401, %403 : vector<16x128xf32>
    %405 = arith.addf %398, %404 : vector<16x128xf32>
    %c3_230 = arith.constant 3 : index
    %c7_231 = arith.constant 7 : index
    %c0_232 = arith.constant 0 : index
    %c0_233 = arith.constant 0 : index
    %406 = vector.load %arg1[%c3_230, %c7_231, %c0_232, %c0_233] : memref<8x16x16x128xbf16, #tpu.memory_space<vmem>>, vector<1x1x16x128xbf16>
    %407 = vector.shape_cast %406 : vector<1x1x16x128xbf16> to vector<16x128xbf16>
    %408 = arith.extf %407 : vector<16x128xbf16> to vector<16x128xf32>
    %409 = vector.extract_strided_slice %0 {offsets = [3, 0], sizes = [1, 128], strides = [1, 1]} : vector<8x128xf32> to vector<1x128xf32>
    %410 = vector.broadcast %409 : vector<1x128xf32> to vector<16x128xf32>
    %411 = arith.mulf %408, %410 : vector<16x128xf32>
    %412 = arith.addf %405, %411 : vector<16x128xf32>
    %c4_234 = arith.constant 4 : index
    %c7_235 = arith.constant 7 : index
    %c0_236 = arith.constant 0 : index
    %c0_237 = arith.constant 0 : index
    %413 = vector.load %arg1[%c4_234, %c7_235, %c0_236, %c0_237] : memref<8x16x16x128xbf16, #tpu.memory_space<vmem>>, vector<1x1x16x128xbf16>
    %414 = vector.shape_cast %413 : vector<1x1x16x128xbf16> to vector<16x128xbf16>
    %415 = arith.extf %414 : vector<16x128xbf16> to vector<16x128xf32>
    %416 = vector.extract_strided_slice %0 {offsets = [4, 0], sizes = [1, 128], strides = [1, 1]} : vector<8x128xf32> to vector<1x128xf32>
    %417 = vector.broadcast %416 : vector<1x128xf32> to vector<16x128xf32>
    %418 = arith.mulf %415, %417 : vector<16x128xf32>
    %419 = arith.addf %412, %418 : vector<16x128xf32>
    %c5_238 = arith.constant 5 : index
    %c7_239 = arith.constant 7 : index
    %c0_240 = arith.constant 0 : index
    %c0_241 = arith.constant 0 : index
    %420 = vector.load %arg1[%c5_238, %c7_239, %c0_240, %c0_241] : memref<8x16x16x128xbf16, #tpu.memory_space<vmem>>, vector<1x1x16x128xbf16>
    %421 = vector.shape_cast %420 : vector<1x1x16x128xbf16> to vector<16x128xbf16>
    %422 = arith.extf %421 : vector<16x128xbf16> to vector<16x128xf32>
    %423 = vector.extract_strided_slice %0 {offsets = [5, 0], sizes = [1, 128], strides = [1, 1]} : vector<8x128xf32> to vector<1x128xf32>
    %424 = vector.broadcast %423 : vector<1x128xf32> to vector<16x128xf32>
    %425 = arith.mulf %422, %424 : vector<16x128xf32>
    %426 = arith.addf %419, %425 : vector<16x128xf32>
    %c6_242 = arith.constant 6 : index
    %c7_243 = arith.constant 7 : index
    %c0_244 = arith.constant 0 : index
    %c0_245 = arith.constant 0 : index
    %427 = vector.load %arg1[%c6_242, %c7_243, %c0_244, %c0_245] : memref<8x16x16x128xbf16, #tpu.memory_space<vmem>>, vector<1x1x16x128xbf16>
    %428 = vector.shape_cast %427 : vector<1x1x16x128xbf16> to vector<16x128xbf16>
    %429 = arith.extf %428 : vector<16x128xbf16> to vector<16x128xf32>
    %430 = vector.extract_strided_slice %0 {offsets = [6, 0], sizes = [1, 128], strides = [1, 1]} : vector<8x128xf32> to vector<1x128xf32>
    %431 = vector.broadcast %430 : vector<1x128xf32> to vector<16x128xf32>
    %432 = arith.mulf %429, %431 : vector<16x128xf32>
    %433 = arith.addf %426, %432 : vector<16x128xf32>
    %c7_246 = arith.constant 7 : index
    %c7_247 = arith.constant 7 : index
    %c0_248 = arith.constant 0 : index
    %c0_249 = arith.constant 0 : index
    %434 = vector.load %arg1[%c7_246, %c7_247, %c0_248, %c0_249] : memref<8x16x16x128xbf16, #tpu.memory_space<vmem>>, vector<1x1x16x128xbf16>
    %435 = vector.shape_cast %434 : vector<1x1x16x128xbf16> to vector<16x128xbf16>
    %436 = arith.extf %435 : vector<16x128xbf16> to vector<16x128xf32>
    %437 = vector.extract_strided_slice %0 {offsets = [7, 0], sizes = [1, 128], strides = [1, 1]} : vector<8x128xf32> to vector<1x128xf32>
    %438 = vector.broadcast %437 : vector<1x128xf32> to vector<16x128xf32>
    %439 = arith.mulf %436, %438 : vector<16x128xf32>
    %440 = arith.addf %433, %439 : vector<16x128xf32>
    %c0_250 = arith.constant 0 : index
    %c8 = arith.constant 8 : index
    %c0_251 = arith.constant 0 : index
    %c0_252 = arith.constant 0 : index
    %441 = vector.load %arg1[%c0_250, %c8, %c0_251, %c0_252] : memref<8x16x16x128xbf16, #tpu.memory_space<vmem>>, vector<1x1x16x128xbf16>
    %442 = vector.shape_cast %441 : vector<1x1x16x128xbf16> to vector<16x128xbf16>
    %443 = arith.extf %442 : vector<16x128xbf16> to vector<16x128xf32>
    %444 = vector.extract_strided_slice %0 {offsets = [0, 0], sizes = [1, 128], strides = [1, 1]} : vector<8x128xf32> to vector<1x128xf32>
    %445 = vector.broadcast %444 : vector<1x128xf32> to vector<16x128xf32>
    %446 = arith.mulf %443, %445 : vector<16x128xf32>
    %c1_253 = arith.constant 1 : index
    %c8_254 = arith.constant 8 : index
    %c0_255 = arith.constant 0 : index
    %c0_256 = arith.constant 0 : index
    %447 = vector.load %arg1[%c1_253, %c8_254, %c0_255, %c0_256] : memref<8x16x16x128xbf16, #tpu.memory_space<vmem>>, vector<1x1x16x128xbf16>
    %448 = vector.shape_cast %447 : vector<1x1x16x128xbf16> to vector<16x128xbf16>
    %449 = arith.extf %448 : vector<16x128xbf16> to vector<16x128xf32>
    %450 = vector.extract_strided_slice %0 {offsets = [1, 0], sizes = [1, 128], strides = [1, 1]} : vector<8x128xf32> to vector<1x128xf32>
    %451 = vector.broadcast %450 : vector<1x128xf32> to vector<16x128xf32>
    %452 = arith.mulf %449, %451 : vector<16x128xf32>
    %453 = arith.addf %446, %452 : vector<16x128xf32>
    %c2_257 = arith.constant 2 : index
    %c8_258 = arith.constant 8 : index
    %c0_259 = arith.constant 0 : index
    %c0_260 = arith.constant 0 : index
    %454 = vector.load %arg1[%c2_257, %c8_258, %c0_259, %c0_260] : memref<8x16x16x128xbf16, #tpu.memory_space<vmem>>, vector<1x1x16x128xbf16>
    %455 = vector.shape_cast %454 : vector<1x1x16x128xbf16> to vector<16x128xbf16>
    %456 = arith.extf %455 : vector<16x128xbf16> to vector<16x128xf32>
    %457 = vector.extract_strided_slice %0 {offsets = [2, 0], sizes = [1, 128], strides = [1, 1]} : vector<8x128xf32> to vector<1x128xf32>
    %458 = vector.broadcast %457 : vector<1x128xf32> to vector<16x128xf32>
    %459 = arith.mulf %456, %458 : vector<16x128xf32>
    %460 = arith.addf %453, %459 : vector<16x128xf32>
    %c3_261 = arith.constant 3 : index
    %c8_262 = arith.constant 8 : index
    %c0_263 = arith.constant 0 : index
    %c0_264 = arith.constant 0 : index
    %461 = vector.load %arg1[%c3_261, %c8_262, %c0_263, %c0_264] : memref<8x16x16x128xbf16, #tpu.memory_space<vmem>>, vector<1x1x16x128xbf16>
    %462 = vector.shape_cast %461 : vector<1x1x16x128xbf16> to vector<16x128xbf16>
    %463 = arith.extf %462 : vector<16x128xbf16> to vector<16x128xf32>
    %464 = vector.extract_strided_slice %0 {offsets = [3, 0], sizes = [1, 128], strides = [1, 1]} : vector<8x128xf32> to vector<1x128xf32>
    %465 = vector.broadcast %464 : vector<1x128xf32> to vector<16x128xf32>
    %466 = arith.mulf %463, %465 : vector<16x128xf32>
    %467 = arith.addf %460, %466 : vector<16x128xf32>
    %c4_265 = arith.constant 4 : index
    %c8_266 = arith.constant 8 : index
    %c0_267 = arith.constant 0 : index
    %c0_268 = arith.constant 0 : index
    %468 = vector.load %arg1[%c4_265, %c8_266, %c0_267, %c0_268] : memref<8x16x16x128xbf16, #tpu.memory_space<vmem>>, vector<1x1x16x128xbf16>
    %469 = vector.shape_cast %468 : vector<1x1x16x128xbf16> to vector<16x128xbf16>
    %470 = arith.extf %469 : vector<16x128xbf16> to vector<16x128xf32>
    %471 = vector.extract_strided_slice %0 {offsets = [4, 0], sizes = [1, 128], strides = [1, 1]} : vector<8x128xf32> to vector<1x128xf32>
    %472 = vector.broadcast %471 : vector<1x128xf32> to vector<16x128xf32>
    %473 = arith.mulf %470, %472 : vector<16x128xf32>
    %474 = arith.addf %467, %473 : vector<16x128xf32>
    %c5_269 = arith.constant 5 : index
    %c8_270 = arith.constant 8 : index
    %c0_271 = arith.constant 0 : index
    %c0_272 = arith.constant 0 : index
    %475 = vector.load %arg1[%c5_269, %c8_270, %c0_271, %c0_272] : memref<8x16x16x128xbf16, #tpu.memory_space<vmem>>, vector<1x1x16x128xbf16>
    %476 = vector.shape_cast %475 : vector<1x1x16x128xbf16> to vector<16x128xbf16>
    %477 = arith.extf %476 : vector<16x128xbf16> to vector<16x128xf32>
    %478 = vector.extract_strided_slice %0 {offsets = [5, 0], sizes = [1, 128], strides = [1, 1]} : vector<8x128xf32> to vector<1x128xf32>
    %479 = vector.broadcast %478 : vector<1x128xf32> to vector<16x128xf32>
    %480 = arith.mulf %477, %479 : vector<16x128xf32>
    %481 = arith.addf %474, %480 : vector<16x128xf32>
    %c6_273 = arith.constant 6 : index
    %c8_274 = arith.constant 8 : index
    %c0_275 = arith.constant 0 : index
    %c0_276 = arith.constant 0 : index
    %482 = vector.load %arg1[%c6_273, %c8_274, %c0_275, %c0_276] : memref<8x16x16x128xbf16, #tpu.memory_space<vmem>>, vector<1x1x16x128xbf16>
    %483 = vector.shape_cast %482 : vector<1x1x16x128xbf16> to vector<16x128xbf16>
    %484 = arith.extf %483 : vector<16x128xbf16> to vector<16x128xf32>
    %485 = vector.extract_strided_slice %0 {offsets = [6, 0], sizes = [1, 128], strides = [1, 1]} : vector<8x128xf32> to vector<1x128xf32>
    %486 = vector.broadcast %485 : vector<1x128xf32> to vector<16x128xf32>
    %487 = arith.mulf %484, %486 : vector<16x128xf32>
    %488 = arith.addf %481, %487 : vector<16x128xf32>
    %c7_277 = arith.constant 7 : index
    %c8_278 = arith.constant 8 : index
    %c0_279 = arith.constant 0 : index
    %c0_280 = arith.constant 0 : index
    %489 = vector.load %arg1[%c7_277, %c8_278, %c0_279, %c0_280] : memref<8x16x16x128xbf16, #tpu.memory_space<vmem>>, vector<1x1x16x128xbf16>
    %490 = vector.shape_cast %489 : vector<1x1x16x128xbf16> to vector<16x128xbf16>
    %491 = arith.extf %490 : vector<16x128xbf16> to vector<16x128xf32>
    %492 = vector.extract_strided_slice %0 {offsets = [7, 0], sizes = [1, 128], strides = [1, 1]} : vector<8x128xf32> to vector<1x128xf32>
    %493 = vector.broadcast %492 : vector<1x128xf32> to vector<16x128xf32>
    %494 = arith.mulf %491, %493 : vector<16x128xf32>
    %495 = arith.addf %488, %494 : vector<16x128xf32>
    %c0_281 = arith.constant 0 : index
    %c9 = arith.constant 9 : index
    %c0_282 = arith.constant 0 : index
    %c0_283 = arith.constant 0 : index
    %496 = vector.load %arg1[%c0_281, %c9, %c0_282, %c0_283] : memref<8x16x16x128xbf16, #tpu.memory_space<vmem>>, vector<1x1x16x128xbf16>
    %497 = vector.shape_cast %496 : vector<1x1x16x128xbf16> to vector<16x128xbf16>
    %498 = arith.extf %497 : vector<16x128xbf16> to vector<16x128xf32>
    %499 = vector.extract_strided_slice %0 {offsets = [0, 0], sizes = [1, 128], strides = [1, 1]} : vector<8x128xf32> to vector<1x128xf32>
    %500 = vector.broadcast %499 : vector<1x128xf32> to vector<16x128xf32>
    %501 = arith.mulf %498, %500 : vector<16x128xf32>
    %c1_284 = arith.constant 1 : index
    %c9_285 = arith.constant 9 : index
    %c0_286 = arith.constant 0 : index
    %c0_287 = arith.constant 0 : index
    %502 = vector.load %arg1[%c1_284, %c9_285, %c0_286, %c0_287] : memref<8x16x16x128xbf16, #tpu.memory_space<vmem>>, vector<1x1x16x128xbf16>
    %503 = vector.shape_cast %502 : vector<1x1x16x128xbf16> to vector<16x128xbf16>
    %504 = arith.extf %503 : vector<16x128xbf16> to vector<16x128xf32>
    %505 = vector.extract_strided_slice %0 {offsets = [1, 0], sizes = [1, 128], strides = [1, 1]} : vector<8x128xf32> to vector<1x128xf32>
    %506 = vector.broadcast %505 : vector<1x128xf32> to vector<16x128xf32>
    %507 = arith.mulf %504, %506 : vector<16x128xf32>
    %508 = arith.addf %501, %507 : vector<16x128xf32>
    %c2_288 = arith.constant 2 : index
    %c9_289 = arith.constant 9 : index
    %c0_290 = arith.constant 0 : index
    %c0_291 = arith.constant 0 : index
    %509 = vector.load %arg1[%c2_288, %c9_289, %c0_290, %c0_291] : memref<8x16x16x128xbf16, #tpu.memory_space<vmem>>, vector<1x1x16x128xbf16>
    %510 = vector.shape_cast %509 : vector<1x1x16x128xbf16> to vector<16x128xbf16>
    %511 = arith.extf %510 : vector<16x128xbf16> to vector<16x128xf32>
    %512 = vector.extract_strided_slice %0 {offsets = [2, 0], sizes = [1, 128], strides = [1, 1]} : vector<8x128xf32> to vector<1x128xf32>
    %513 = vector.broadcast %512 : vector<1x128xf32> to vector<16x128xf32>
    %514 = arith.mulf %511, %513 : vector<16x128xf32>
    %515 = arith.addf %508, %514 : vector<16x128xf32>
    %c3_292 = arith.constant 3 : index
    %c9_293 = arith.constant 9 : index
    %c0_294 = arith.constant 0 : index
    %c0_295 = arith.constant 0 : index
    %516 = vector.load %arg1[%c3_292, %c9_293, %c0_294, %c0_295] : memref<8x16x16x128xbf16, #tpu.memory_space<vmem>>, vector<1x1x16x128xbf16>
    %517 = vector.shape_cast %516 : vector<1x1x16x128xbf16> to vector<16x128xbf16>
    %518 = arith.extf %517 : vector<16x128xbf16> to vector<16x128xf32>
    %519 = vector.extract_strided_slice %0 {offsets = [3, 0], sizes = [1, 128], strides = [1, 1]} : vector<8x128xf32> to vector<1x128xf32>
    %520 = vector.broadcast %519 : vector<1x128xf32> to vector<16x128xf32>
    %521 = arith.mulf %518, %520 : vector<16x128xf32>
    %522 = arith.addf %515, %521 : vector<16x128xf32>
    %c4_296 = arith.constant 4 : index
    %c9_297 = arith.constant 9 : index
    %c0_298 = arith.constant 0 : index
    %c0_299 = arith.constant 0 : index
    %523 = vector.load %arg1[%c4_296, %c9_297, %c0_298, %c0_299] : memref<8x16x16x128xbf16, #tpu.memory_space<vmem>>, vector<1x1x16x128xbf16>
    %524 = vector.shape_cast %523 : vector<1x1x16x128xbf16> to vector<16x128xbf16>
    %525 = arith.extf %524 : vector<16x128xbf16> to vector<16x128xf32>
    %526 = vector.extract_strided_slice %0 {offsets = [4, 0], sizes = [1, 128], strides = [1, 1]} : vector<8x128xf32> to vector<1x128xf32>
    %527 = vector.broadcast %526 : vector<1x128xf32> to vector<16x128xf32>
    %528 = arith.mulf %525, %527 : vector<16x128xf32>
    %529 = arith.addf %522, %528 : vector<16x128xf32>
    %c5_300 = arith.constant 5 : index
    %c9_301 = arith.constant 9 : index
    %c0_302 = arith.constant 0 : index
    %c0_303 = arith.constant 0 : index
    %530 = vector.load %arg1[%c5_300, %c9_301, %c0_302, %c0_303] : memref<8x16x16x128xbf16, #tpu.memory_space<vmem>>, vector<1x1x16x128xbf16>
    %531 = vector.shape_cast %530 : vector<1x1x16x128xbf16> to vector<16x128xbf16>
    %532 = arith.extf %531 : vector<16x128xbf16> to vector<16x128xf32>
    %533 = vector.extract_strided_slice %0 {offsets = [5, 0], sizes = [1, 128], strides = [1, 1]} : vector<8x128xf32> to vector<1x128xf32>
    %534 = vector.broadcast %533 : vector<1x128xf32> to vector<16x128xf32>
    %535 = arith.mulf %532, %534 : vector<16x128xf32>
    %536 = arith.addf %529, %535 : vector<16x128xf32>
    %c6_304 = arith.constant 6 : index
    %c9_305 = arith.constant 9 : index
    %c0_306 = arith.constant 0 : index
    %c0_307 = arith.constant 0 : index
    %537 = vector.load %arg1[%c6_304, %c9_305, %c0_306, %c0_307] : memref<8x16x16x128xbf16, #tpu.memory_space<vmem>>, vector<1x1x16x128xbf16>
    %538 = vector.shape_cast %537 : vector<1x1x16x128xbf16> to vector<16x128xbf16>
    %539 = arith.extf %538 : vector<16x128xbf16> to vector<16x128xf32>
    %540 = vector.extract_strided_slice %0 {offsets = [6, 0], sizes = [1, 128], strides = [1, 1]} : vector<8x128xf32> to vector<1x128xf32>
    %541 = vector.broadcast %540 : vector<1x128xf32> to vector<16x128xf32>
    %542 = arith.mulf %539, %541 : vector<16x128xf32>
    %543 = arith.addf %536, %542 : vector<16x128xf32>
    %c7_308 = arith.constant 7 : index
    %c9_309 = arith.constant 9 : index
    %c0_310 = arith.constant 0 : index
    %c0_311 = arith.constant 0 : index
    %544 = vector.load %arg1[%c7_308, %c9_309, %c0_310, %c0_311] : memref<8x16x16x128xbf16, #tpu.memory_space<vmem>>, vector<1x1x16x128xbf16>
    %545 = vector.shape_cast %544 : vector<1x1x16x128xbf16> to vector<16x128xbf16>
    %546 = arith.extf %545 : vector<16x128xbf16> to vector<16x128xf32>
    %547 = vector.extract_strided_slice %0 {offsets = [7, 0], sizes = [1, 128], strides = [1, 1]} : vector<8x128xf32> to vector<1x128xf32>
    %548 = vector.broadcast %547 : vector<1x128xf32> to vector<16x128xf32>
    %549 = arith.mulf %546, %548 : vector<16x128xf32>
    %550 = arith.addf %543, %549 : vector<16x128xf32>
    %c0_312 = arith.constant 0 : index
    %c10 = arith.constant 10 : index
    %c0_313 = arith.constant 0 : index
    %c0_314 = arith.constant 0 : index
    %551 = vector.load %arg1[%c0_312, %c10, %c0_313, %c0_314] : memref<8x16x16x128xbf16, #tpu.memory_space<vmem>>, vector<1x1x16x128xbf16>
    %552 = vector.shape_cast %551 : vector<1x1x16x128xbf16> to vector<16x128xbf16>
    %553 = arith.extf %552 : vector<16x128xbf16> to vector<16x128xf32>
    %554 = vector.extract_strided_slice %0 {offsets = [0, 0], sizes = [1, 128], strides = [1, 1]} : vector<8x128xf32> to vector<1x128xf32>
    %555 = vector.broadcast %554 : vector<1x128xf32> to vector<16x128xf32>
    %556 = arith.mulf %553, %555 : vector<16x128xf32>
    %c1_315 = arith.constant 1 : index
    %c10_316 = arith.constant 10 : index
    %c0_317 = arith.constant 0 : index
    %c0_318 = arith.constant 0 : index
    %557 = vector.load %arg1[%c1_315, %c10_316, %c0_317, %c0_318] : memref<8x16x16x128xbf16, #tpu.memory_space<vmem>>, vector<1x1x16x128xbf16>
    %558 = vector.shape_cast %557 : vector<1x1x16x128xbf16> to vector<16x128xbf16>
    %559 = arith.extf %558 : vector<16x128xbf16> to vector<16x128xf32>
    %560 = vector.extract_strided_slice %0 {offsets = [1, 0], sizes = [1, 128], strides = [1, 1]} : vector<8x128xf32> to vector<1x128xf32>
    %561 = vector.broadcast %560 : vector<1x128xf32> to vector<16x128xf32>
    %562 = arith.mulf %559, %561 : vector<16x128xf32>
    %563 = arith.addf %556, %562 : vector<16x128xf32>
    %c2_319 = arith.constant 2 : index
    %c10_320 = arith.constant 10 : index
    %c0_321 = arith.constant 0 : index
    %c0_322 = arith.constant 0 : index
    %564 = vector.load %arg1[%c2_319, %c10_320, %c0_321, %c0_322] : memref<8x16x16x128xbf16, #tpu.memory_space<vmem>>, vector<1x1x16x128xbf16>
    %565 = vector.shape_cast %564 : vector<1x1x16x128xbf16> to vector<16x128xbf16>
    %566 = arith.extf %565 : vector<16x128xbf16> to vector<16x128xf32>
    %567 = vector.extract_strided_slice %0 {offsets = [2, 0], sizes = [1, 128], strides = [1, 1]} : vector<8x128xf32> to vector<1x128xf32>
    %568 = vector.broadcast %567 : vector<1x128xf32> to vector<16x128xf32>
    %569 = arith.mulf %566, %568 : vector<16x128xf32>
    %570 = arith.addf %563, %569 : vector<16x128xf32>
    %c3_323 = arith.constant 3 : index
    %c10_324 = arith.constant 10 : index
    %c0_325 = arith.constant 0 : index
    %c0_326 = arith.constant 0 : index
    %571 = vector.load %arg1[%c3_323, %c10_324, %c0_325, %c0_326] : memref<8x16x16x128xbf16, #tpu.memory_space<vmem>>, vector<1x1x16x128xbf16>
    %572 = vector.shape_cast %571 : vector<1x1x16x128xbf16> to vector<16x128xbf16>
    %573 = arith.extf %572 : vector<16x128xbf16> to vector<16x128xf32>
    %574 = vector.extract_strided_slice %0 {offsets = [3, 0], sizes = [1, 128], strides = [1, 1]} : vector<8x128xf32> to vector<1x128xf32>
    %575 = vector.broadcast %574 : vector<1x128xf32> to vector<16x128xf32>
    %576 = arith.mulf %573, %575 : vector<16x128xf32>
    %577 = arith.addf %570, %576 : vector<16x128xf32>
    %c4_327 = arith.constant 4 : index
    %c10_328 = arith.constant 10 : index
    %c0_329 = arith.constant 0 : index
    %c0_330 = arith.constant 0 : index
    %578 = vector.load %arg1[%c4_327, %c10_328, %c0_329, %c0_330] : memref<8x16x16x128xbf16, #tpu.memory_space<vmem>>, vector<1x1x16x128xbf16>
    %579 = vector.shape_cast %578 : vector<1x1x16x128xbf16> to vector<16x128xbf16>
    %580 = arith.extf %579 : vector<16x128xbf16> to vector<16x128xf32>
    %581 = vector.extract_strided_slice %0 {offsets = [4, 0], sizes = [1, 128], strides = [1, 1]} : vector<8x128xf32> to vector<1x128xf32>
    %582 = vector.broadcast %581 : vector<1x128xf32> to vector<16x128xf32>
    %583 = arith.mulf %580, %582 : vector<16x128xf32>
    %584 = arith.addf %577, %583 : vector<16x128xf32>
    %c5_331 = arith.constant 5 : index
    %c10_332 = arith.constant 10 : index
    %c0_333 = arith.constant 0 : index
    %c0_334 = arith.constant 0 : index
    %585 = vector.load %arg1[%c5_331, %c10_332, %c0_333, %c0_334] : memref<8x16x16x128xbf16, #tpu.memory_space<vmem>>, vector<1x1x16x128xbf16>
    %586 = vector.shape_cast %585 : vector<1x1x16x128xbf16> to vector<16x128xbf16>
    %587 = arith.extf %586 : vector<16x128xbf16> to vector<16x128xf32>
    %588 = vector.extract_strided_slice %0 {offsets = [5, 0], sizes = [1, 128], strides = [1, 1]} : vector<8x128xf32> to vector<1x128xf32>
    %589 = vector.broadcast %588 : vector<1x128xf32> to vector<16x128xf32>
    %590 = arith.mulf %587, %589 : vector<16x128xf32>
    %591 = arith.addf %584, %590 : vector<16x128xf32>
    %c6_335 = arith.constant 6 : index
    %c10_336 = arith.constant 10 : index
    %c0_337 = arith.constant 0 : index
    %c0_338 = arith.constant 0 : index
    %592 = vector.load %arg1[%c6_335, %c10_336, %c0_337, %c0_338] : memref<8x16x16x128xbf16, #tpu.memory_space<vmem>>, vector<1x1x16x128xbf16>
    %593 = vector.shape_cast %592 : vector<1x1x16x128xbf16> to vector<16x128xbf16>
    %594 = arith.extf %593 : vector<16x128xbf16> to vector<16x128xf32>
    %595 = vector.extract_strided_slice %0 {offsets = [6, 0], sizes = [1, 128], strides = [1, 1]} : vector<8x128xf32> to vector<1x128xf32>
    %596 = vector.broadcast %595 : vector<1x128xf32> to vector<16x128xf32>
    %597 = arith.mulf %594, %596 : vector<16x128xf32>
    %598 = arith.addf %591, %597 : vector<16x128xf32>
    %c7_339 = arith.constant 7 : index
    %c10_340 = arith.constant 10 : index
    %c0_341 = arith.constant 0 : index
    %c0_342 = arith.constant 0 : index
    %599 = vector.load %arg1[%c7_339, %c10_340, %c0_341, %c0_342] : memref<8x16x16x128xbf16, #tpu.memory_space<vmem>>, vector<1x1x16x128xbf16>
    %600 = vector.shape_cast %599 : vector<1x1x16x128xbf16> to vector<16x128xbf16>
    %601 = arith.extf %600 : vector<16x128xbf16> to vector<16x128xf32>
    %602 = vector.extract_strided_slice %0 {offsets = [7, 0], sizes = [1, 128], strides = [1, 1]} : vector<8x128xf32> to vector<1x128xf32>
    %603 = vector.broadcast %602 : vector<1x128xf32> to vector<16x128xf32>
    %604 = arith.mulf %601, %603 : vector<16x128xf32>
    %605 = arith.addf %598, %604 : vector<16x128xf32>
    %c0_343 = arith.constant 0 : index
    %c11 = arith.constant 11 : index
    %c0_344 = arith.constant 0 : index
    %c0_345 = arith.constant 0 : index
    %606 = vector.load %arg1[%c0_343, %c11, %c0_344, %c0_345] : memref<8x16x16x128xbf16, #tpu.memory_space<vmem>>, vector<1x1x16x128xbf16>
    %607 = vector.shape_cast %606 : vector<1x1x16x128xbf16> to vector<16x128xbf16>
    %608 = arith.extf %607 : vector<16x128xbf16> to vector<16x128xf32>
    %609 = vector.extract_strided_slice %0 {offsets = [0, 0], sizes = [1, 128], strides = [1, 1]} : vector<8x128xf32> to vector<1x128xf32>
    %610 = vector.broadcast %609 : vector<1x128xf32> to vector<16x128xf32>
    %611 = arith.mulf %608, %610 : vector<16x128xf32>
    %c1_346 = arith.constant 1 : index
    %c11_347 = arith.constant 11 : index
    %c0_348 = arith.constant 0 : index
    %c0_349 = arith.constant 0 : index
    %612 = vector.load %arg1[%c1_346, %c11_347, %c0_348, %c0_349] : memref<8x16x16x128xbf16, #tpu.memory_space<vmem>>, vector<1x1x16x128xbf16>
    %613 = vector.shape_cast %612 : vector<1x1x16x128xbf16> to vector<16x128xbf16>
    %614 = arith.extf %613 : vector<16x128xbf16> to vector<16x128xf32>
    %615 = vector.extract_strided_slice %0 {offsets = [1, 0], sizes = [1, 128], strides = [1, 1]} : vector<8x128xf32> to vector<1x128xf32>
    %616 = vector.broadcast %615 : vector<1x128xf32> to vector<16x128xf32>
    %617 = arith.mulf %614, %616 : vector<16x128xf32>
    %618 = arith.addf %611, %617 : vector<16x128xf32>
    %c2_350 = arith.constant 2 : index
    %c11_351 = arith.constant 11 : index
    %c0_352 = arith.constant 0 : index
    %c0_353 = arith.constant 0 : index
    %619 = vector.load %arg1[%c2_350, %c11_351, %c0_352, %c0_353] : memref<8x16x16x128xbf16, #tpu.memory_space<vmem>>, vector<1x1x16x128xbf16>
    %620 = vector.shape_cast %619 : vector<1x1x16x128xbf16> to vector<16x128xbf16>
    %621 = arith.extf %620 : vector<16x128xbf16> to vector<16x128xf32>
    %622 = vector.extract_strided_slice %0 {offsets = [2, 0], sizes = [1, 128], strides = [1, 1]} : vector<8x128xf32> to vector<1x128xf32>
    %623 = vector.broadcast %622 : vector<1x128xf32> to vector<16x128xf32>
    %624 = arith.mulf %621, %623 : vector<16x128xf32>
    %625 = arith.addf %618, %624 : vector<16x128xf32>
    %c3_354 = arith.constant 3 : index
    %c11_355 = arith.constant 11 : index
    %c0_356 = arith.constant 0 : index
    %c0_357 = arith.constant 0 : index
    %626 = vector.load %arg1[%c3_354, %c11_355, %c0_356, %c0_357] : memref<8x16x16x128xbf16, #tpu.memory_space<vmem>>, vector<1x1x16x128xbf16>
    %627 = vector.shape_cast %626 : vector<1x1x16x128xbf16> to vector<16x128xbf16>
    %628 = arith.extf %627 : vector<16x128xbf16> to vector<16x128xf32>
    %629 = vector.extract_strided_slice %0 {offsets = [3, 0], sizes = [1, 128], strides = [1, 1]} : vector<8x128xf32> to vector<1x128xf32>
    %630 = vector.broadcast %629 : vector<1x128xf32> to vector<16x128xf32>
    %631 = arith.mulf %628, %630 : vector<16x128xf32>
    %632 = arith.addf %625, %631 : vector<16x128xf32>
    %c4_358 = arith.constant 4 : index
    %c11_359 = arith.constant 11 : index
    %c0_360 = arith.constant 0 : index
    %c0_361 = arith.constant 0 : index
    %633 = vector.load %arg1[%c4_358, %c11_359, %c0_360, %c0_361] : memref<8x16x16x128xbf16, #tpu.memory_space<vmem>>, vector<1x1x16x128xbf16>
    %634 = vector.shape_cast %633 : vector<1x1x16x128xbf16> to vector<16x128xbf16>
    %635 = arith.extf %634 : vector<16x128xbf16> to vector<16x128xf32>
    %636 = vector.extract_strided_slice %0 {offsets = [4, 0], sizes = [1, 128], strides = [1, 1]} : vector<8x128xf32> to vector<1x128xf32>
    %637 = vector.broadcast %636 : vector<1x128xf32> to vector<16x128xf32>
    %638 = arith.mulf %635, %637 : vector<16x128xf32>
    %639 = arith.addf %632, %638 : vector<16x128xf32>
    %c5_362 = arith.constant 5 : index
    %c11_363 = arith.constant 11 : index
    %c0_364 = arith.constant 0 : index
    %c0_365 = arith.constant 0 : index
    %640 = vector.load %arg1[%c5_362, %c11_363, %c0_364, %c0_365] : memref<8x16x16x128xbf16, #tpu.memory_space<vmem>>, vector<1x1x16x128xbf16>
    %641 = vector.shape_cast %640 : vector<1x1x16x128xbf16> to vector<16x128xbf16>
    %642 = arith.extf %641 : vector<16x128xbf16> to vector<16x128xf32>
    %643 = vector.extract_strided_slice %0 {offsets = [5, 0], sizes = [1, 128], strides = [1, 1]} : vector<8x128xf32> to vector<1x128xf32>
    %644 = vector.broadcast %643 : vector<1x128xf32> to vector<16x128xf32>
    %645 = arith.mulf %642, %644 : vector<16x128xf32>
    %646 = arith.addf %639, %645 : vector<16x128xf32>
    %c6_366 = arith.constant 6 : index
    %c11_367 = arith.constant 11 : index
    %c0_368 = arith.constant 0 : index
    %c0_369 = arith.constant 0 : index
    %647 = vector.load %arg1[%c6_366, %c11_367, %c0_368, %c0_369] : memref<8x16x16x128xbf16, #tpu.memory_space<vmem>>, vector<1x1x16x128xbf16>
    %648 = vector.shape_cast %647 : vector<1x1x16x128xbf16> to vector<16x128xbf16>
    %649 = arith.extf %648 : vector<16x128xbf16> to vector<16x128xf32>
    %650 = vector.extract_strided_slice %0 {offsets = [6, 0], sizes = [1, 128], strides = [1, 1]} : vector<8x128xf32> to vector<1x128xf32>
    %651 = vector.broadcast %650 : vector<1x128xf32> to vector<16x128xf32>
    %652 = arith.mulf %649, %651 : vector<16x128xf32>
    %653 = arith.addf %646, %652 : vector<16x128xf32>
    %c7_370 = arith.constant 7 : index
    %c11_371 = arith.constant 11 : index
    %c0_372 = arith.constant 0 : index
    %c0_373 = arith.constant 0 : index
    %654 = vector.load %arg1[%c7_370, %c11_371, %c0_372, %c0_373] : memref<8x16x16x128xbf16, #tpu.memory_space<vmem>>, vector<1x1x16x128xbf16>
    %655 = vector.shape_cast %654 : vector<1x1x16x128xbf16> to vector<16x128xbf16>
    %656 = arith.extf %655 : vector<16x128xbf16> to vector<16x128xf32>
    %657 = vector.extract_strided_slice %0 {offsets = [7, 0], sizes = [1, 128], strides = [1, 1]} : vector<8x128xf32> to vector<1x128xf32>
    %658 = vector.broadcast %657 : vector<1x128xf32> to vector<16x128xf32>
    %659 = arith.mulf %656, %658 : vector<16x128xf32>
    %660 = arith.addf %653, %659 : vector<16x128xf32>
    %c0_374 = arith.constant 0 : index
    %c12 = arith.constant 12 : index
    %c0_375 = arith.constant 0 : index
    %c0_376 = arith.constant 0 : index
    %661 = vector.load %arg1[%c0_374, %c12, %c0_375, %c0_376] : memref<8x16x16x128xbf16, #tpu.memory_space<vmem>>, vector<1x1x16x128xbf16>
    %662 = vector.shape_cast %661 : vector<1x1x16x128xbf16> to vector<16x128xbf16>
    %663 = arith.extf %662 : vector<16x128xbf16> to vector<16x128xf32>
    %664 = vector.extract_strided_slice %0 {offsets = [0, 0], sizes = [1, 128], strides = [1, 1]} : vector<8x128xf32> to vector<1x128xf32>
    %665 = vector.broadcast %664 : vector<1x128xf32> to vector<16x128xf32>
    %666 = arith.mulf %663, %665 : vector<16x128xf32>
    %c1_377 = arith.constant 1 : index
    %c12_378 = arith.constant 12 : index
    %c0_379 = arith.constant 0 : index
    %c0_380 = arith.constant 0 : index
    %667 = vector.load %arg1[%c1_377, %c12_378, %c0_379, %c0_380] : memref<8x16x16x128xbf16, #tpu.memory_space<vmem>>, vector<1x1x16x128xbf16>
    %668 = vector.shape_cast %667 : vector<1x1x16x128xbf16> to vector<16x128xbf16>
    %669 = arith.extf %668 : vector<16x128xbf16> to vector<16x128xf32>
    %670 = vector.extract_strided_slice %0 {offsets = [1, 0], sizes = [1, 128], strides = [1, 1]} : vector<8x128xf32> to vector<1x128xf32>
    %671 = vector.broadcast %670 : vector<1x128xf32> to vector<16x128xf32>
    %672 = arith.mulf %669, %671 : vector<16x128xf32>
    %673 = arith.addf %666, %672 : vector<16x128xf32>
    %c2_381 = arith.constant 2 : index
    %c12_382 = arith.constant 12 : index
    %c0_383 = arith.constant 0 : index
    %c0_384 = arith.constant 0 : index
    %674 = vector.load %arg1[%c2_381, %c12_382, %c0_383, %c0_384] : memref<8x16x16x128xbf16, #tpu.memory_space<vmem>>, vector<1x1x16x128xbf16>
    %675 = vector.shape_cast %674 : vector<1x1x16x128xbf16> to vector<16x128xbf16>
    %676 = arith.extf %675 : vector<16x128xbf16> to vector<16x128xf32>
    %677 = vector.extract_strided_slice %0 {offsets = [2, 0], sizes = [1, 128], strides = [1, 1]} : vector<8x128xf32> to vector<1x128xf32>
    %678 = vector.broadcast %677 : vector<1x128xf32> to vector<16x128xf32>
    %679 = arith.mulf %676, %678 : vector<16x128xf32>
    %680 = arith.addf %673, %679 : vector<16x128xf32>
    %c3_385 = arith.constant 3 : index
    %c12_386 = arith.constant 12 : index
    %c0_387 = arith.constant 0 : index
    %c0_388 = arith.constant 0 : index
    %681 = vector.load %arg1[%c3_385, %c12_386, %c0_387, %c0_388] : memref<8x16x16x128xbf16, #tpu.memory_space<vmem>>, vector<1x1x16x128xbf16>
    %682 = vector.shape_cast %681 : vector<1x1x16x128xbf16> to vector<16x128xbf16>
    %683 = arith.extf %682 : vector<16x128xbf16> to vector<16x128xf32>
    %684 = vector.extract_strided_slice %0 {offsets = [3, 0], sizes = [1, 128], strides = [1, 1]} : vector<8x128xf32> to vector<1x128xf32>
    %685 = vector.broadcast %684 : vector<1x128xf32> to vector<16x128xf32>
    %686 = arith.mulf %683, %685 : vector<16x128xf32>
    %687 = arith.addf %680, %686 : vector<16x128xf32>
    %c4_389 = arith.constant 4 : index
    %c12_390 = arith.constant 12 : index
    %c0_391 = arith.constant 0 : index
    %c0_392 = arith.constant 0 : index
    %688 = vector.load %arg1[%c4_389, %c12_390, %c0_391, %c0_392] : memref<8x16x16x128xbf16, #tpu.memory_space<vmem>>, vector<1x1x16x128xbf16>
    %689 = vector.shape_cast %688 : vector<1x1x16x128xbf16> to vector<16x128xbf16>
    %690 = arith.extf %689 : vector<16x128xbf16> to vector<16x128xf32>
    %691 = vector.extract_strided_slice %0 {offsets = [4, 0], sizes = [1, 128], strides = [1, 1]} : vector<8x128xf32> to vector<1x128xf32>
    %692 = vector.broadcast %691 : vector<1x128xf32> to vector<16x128xf32>
    %693 = arith.mulf %690, %692 : vector<16x128xf32>
    %694 = arith.addf %687, %693 : vector<16x128xf32>
    %c5_393 = arith.constant 5 : index
    %c12_394 = arith.constant 12 : index
    %c0_395 = arith.constant 0 : index
    %c0_396 = arith.constant 0 : index
    %695 = vector.load %arg1[%c5_393, %c12_394, %c0_395, %c0_396] : memref<8x16x16x128xbf16, #tpu.memory_space<vmem>>, vector<1x1x16x128xbf16>
    %696 = vector.shape_cast %695 : vector<1x1x16x128xbf16> to vector<16x128xbf16>
    %697 = arith.extf %696 : vector<16x128xbf16> to vector<16x128xf32>
    %698 = vector.extract_strided_slice %0 {offsets = [5, 0], sizes = [1, 128], strides = [1, 1]} : vector<8x128xf32> to vector<1x128xf32>
    %699 = vector.broadcast %698 : vector<1x128xf32> to vector<16x128xf32>
    %700 = arith.mulf %697, %699 : vector<16x128xf32>
    %701 = arith.addf %694, %700 : vector<16x128xf32>
    %c6_397 = arith.constant 6 : index
    %c12_398 = arith.constant 12 : index
    %c0_399 = arith.constant 0 : index
    %c0_400 = arith.constant 0 : index
    %702 = vector.load %arg1[%c6_397, %c12_398, %c0_399, %c0_400] : memref<8x16x16x128xbf16, #tpu.memory_space<vmem>>, vector<1x1x16x128xbf16>
    %703 = vector.shape_cast %702 : vector<1x1x16x128xbf16> to vector<16x128xbf16>
    %704 = arith.extf %703 : vector<16x128xbf16> to vector<16x128xf32>
    %705 = vector.extract_strided_slice %0 {offsets = [6, 0], sizes = [1, 128], strides = [1, 1]} : vector<8x128xf32> to vector<1x128xf32>
    %706 = vector.broadcast %705 : vector<1x128xf32> to vector<16x128xf32>
    %707 = arith.mulf %704, %706 : vector<16x128xf32>
    %708 = arith.addf %701, %707 : vector<16x128xf32>
    %c7_401 = arith.constant 7 : index
    %c12_402 = arith.constant 12 : index
    %c0_403 = arith.constant 0 : index
    %c0_404 = arith.constant 0 : index
    %709 = vector.load %arg1[%c7_401, %c12_402, %c0_403, %c0_404] : memref<8x16x16x128xbf16, #tpu.memory_space<vmem>>, vector<1x1x16x128xbf16>
    %710 = vector.shape_cast %709 : vector<1x1x16x128xbf16> to vector<16x128xbf16>
    %711 = arith.extf %710 : vector<16x128xbf16> to vector<16x128xf32>
    %712 = vector.extract_strided_slice %0 {offsets = [7, 0], sizes = [1, 128], strides = [1, 1]} : vector<8x128xf32> to vector<1x128xf32>
    %713 = vector.broadcast %712 : vector<1x128xf32> to vector<16x128xf32>
    %714 = arith.mulf %711, %713 : vector<16x128xf32>
    %715 = arith.addf %708, %714 : vector<16x128xf32>
    %c0_405 = arith.constant 0 : index
    %c13 = arith.constant 13 : index
    %c0_406 = arith.constant 0 : index
    %c0_407 = arith.constant 0 : index
    %716 = vector.load %arg1[%c0_405, %c13, %c0_406, %c0_407] : memref<8x16x16x128xbf16, #tpu.memory_space<vmem>>, vector<1x1x16x128xbf16>
    %717 = vector.shape_cast %716 : vector<1x1x16x128xbf16> to vector<16x128xbf16>
    %718 = arith.extf %717 : vector<16x128xbf16> to vector<16x128xf32>
    %719 = vector.extract_strided_slice %0 {offsets = [0, 0], sizes = [1, 128], strides = [1, 1]} : vector<8x128xf32> to vector<1x128xf32>
    %720 = vector.broadcast %719 : vector<1x128xf32> to vector<16x128xf32>
    %721 = arith.mulf %718, %720 : vector<16x128xf32>
    %c1_408 = arith.constant 1 : index
    %c13_409 = arith.constant 13 : index
    %c0_410 = arith.constant 0 : index
    %c0_411 = arith.constant 0 : index
    %722 = vector.load %arg1[%c1_408, %c13_409, %c0_410, %c0_411] : memref<8x16x16x128xbf16, #tpu.memory_space<vmem>>, vector<1x1x16x128xbf16>
    %723 = vector.shape_cast %722 : vector<1x1x16x128xbf16> to vector<16x128xbf16>
    %724 = arith.extf %723 : vector<16x128xbf16> to vector<16x128xf32>
    %725 = vector.extract_strided_slice %0 {offsets = [1, 0], sizes = [1, 128], strides = [1, 1]} : vector<8x128xf32> to vector<1x128xf32>
    %726 = vector.broadcast %725 : vector<1x128xf32> to vector<16x128xf32>
    %727 = arith.mulf %724, %726 : vector<16x128xf32>
    %728 = arith.addf %721, %727 : vector<16x128xf32>
    %c2_412 = arith.constant 2 : index
    %c13_413 = arith.constant 13 : index
    %c0_414 = arith.constant 0 : index
    %c0_415 = arith.constant 0 : index
    %729 = vector.load %arg1[%c2_412, %c13_413, %c0_414, %c0_415] : memref<8x16x16x128xbf16, #tpu.memory_space<vmem>>, vector<1x1x16x128xbf16>
    %730 = vector.shape_cast %729 : vector<1x1x16x128xbf16> to vector<16x128xbf16>
    %731 = arith.extf %730 : vector<16x128xbf16> to vector<16x128xf32>
    %732 = vector.extract_strided_slice %0 {offsets = [2, 0], sizes = [1, 128], strides = [1, 1]} : vector<8x128xf32> to vector<1x128xf32>
    %733 = vector.broadcast %732 : vector<1x128xf32> to vector<16x128xf32>
    %734 = arith.mulf %731, %733 : vector<16x128xf32>
    %735 = arith.addf %728, %734 : vector<16x128xf32>
    %c3_416 = arith.constant 3 : index
    %c13_417 = arith.constant 13 : index
    %c0_418 = arith.constant 0 : index
    %c0_419 = arith.constant 0 : index
    %736 = vector.load %arg1[%c3_416, %c13_417, %c0_418, %c0_419] : memref<8x16x16x128xbf16, #tpu.memory_space<vmem>>, vector<1x1x16x128xbf16>
    %737 = vector.shape_cast %736 : vector<1x1x16x128xbf16> to vector<16x128xbf16>
    %738 = arith.extf %737 : vector<16x128xbf16> to vector<16x128xf32>
    %739 = vector.extract_strided_slice %0 {offsets = [3, 0], sizes = [1, 128], strides = [1, 1]} : vector<8x128xf32> to vector<1x128xf32>
    %740 = vector.broadcast %739 : vector<1x128xf32> to vector<16x128xf32>
    %741 = arith.mulf %738, %740 : vector<16x128xf32>
    %742 = arith.addf %735, %741 : vector<16x128xf32>
    %c4_420 = arith.constant 4 : index
    %c13_421 = arith.constant 13 : index
    %c0_422 = arith.constant 0 : index
    %c0_423 = arith.constant 0 : index
    %743 = vector.load %arg1[%c4_420, %c13_421, %c0_422, %c0_423] : memref<8x16x16x128xbf16, #tpu.memory_space<vmem>>, vector<1x1x16x128xbf16>
    %744 = vector.shape_cast %743 : vector<1x1x16x128xbf16> to vector<16x128xbf16>
    %745 = arith.extf %744 : vector<16x128xbf16> to vector<16x128xf32>
    %746 = vector.extract_strided_slice %0 {offsets = [4, 0], sizes = [1, 128], strides = [1, 1]} : vector<8x128xf32> to vector<1x128xf32>
    %747 = vector.broadcast %746 : vector<1x128xf32> to vector<16x128xf32>
    %748 = arith.mulf %745, %747 : vector<16x128xf32>
    %749 = arith.addf %742, %748 : vector<16x128xf32>
    %c5_424 = arith.constant 5 : index
    %c13_425 = arith.constant 13 : index
    %c0_426 = arith.constant 0 : index
    %c0_427 = arith.constant 0 : index
    %750 = vector.load %arg1[%c5_424, %c13_425, %c0_426, %c0_427] : memref<8x16x16x128xbf16, #tpu.memory_space<vmem>>, vector<1x1x16x128xbf16>
    %751 = vector.shape_cast %750 : vector<1x1x16x128xbf16> to vector<16x128xbf16>
    %752 = arith.extf %751 : vector<16x128xbf16> to vector<16x128xf32>
    %753 = vector.extract_strided_slice %0 {offsets = [5, 0], sizes = [1, 128], strides = [1, 1]} : vector<8x128xf32> to vector<1x128xf32>
    %754 = vector.broadcast %753 : vector<1x128xf32> to vector<16x128xf32>
    %755 = arith.mulf %752, %754 : vector<16x128xf32>
    %756 = arith.addf %749, %755 : vector<16x128xf32>
    %c6_428 = arith.constant 6 : index
    %c13_429 = arith.constant 13 : index
    %c0_430 = arith.constant 0 : index
    %c0_431 = arith.constant 0 : index
    %757 = vector.load %arg1[%c6_428, %c13_429, %c0_430, %c0_431] : memref<8x16x16x128xbf16, #tpu.memory_space<vmem>>, vector<1x1x16x128xbf16>
    %758 = vector.shape_cast %757 : vector<1x1x16x128xbf16> to vector<16x128xbf16>
    %759 = arith.extf %758 : vector<16x128xbf16> to vector<16x128xf32>
    %760 = vector.extract_strided_slice %0 {offsets = [6, 0], sizes = [1, 128], strides = [1, 1]} : vector<8x128xf32> to vector<1x128xf32>
    %761 = vector.broadcast %760 : vector<1x128xf32> to vector<16x128xf32>
    %762 = arith.mulf %759, %761 : vector<16x128xf32>
    %763 = arith.addf %756, %762 : vector<16x128xf32>
    %c7_432 = arith.constant 7 : index
    %c13_433 = arith.constant 13 : index
    %c0_434 = arith.constant 0 : index
    %c0_435 = arith.constant 0 : index
    %764 = vector.load %arg1[%c7_432, %c13_433, %c0_434, %c0_435] : memref<8x16x16x128xbf16, #tpu.memory_space<vmem>>, vector<1x1x16x128xbf16>
    %765 = vector.shape_cast %764 : vector<1x1x16x128xbf16> to vector<16x128xbf16>
    %766 = arith.extf %765 : vector<16x128xbf16> to vector<16x128xf32>
    %767 = vector.extract_strided_slice %0 {offsets = [7, 0], sizes = [1, 128], strides = [1, 1]} : vector<8x128xf32> to vector<1x128xf32>
    %768 = vector.broadcast %767 : vector<1x128xf32> to vector<16x128xf32>
    %769 = arith.mulf %766, %768 : vector<16x128xf32>
    %770 = arith.addf %763, %769 : vector<16x128xf32>
    %c0_436 = arith.constant 0 : index
    %c14 = arith.constant 14 : index
    %c0_437 = arith.constant 0 : index
    %c0_438 = arith.constant 0 : index
    %771 = vector.load %arg1[%c0_436, %c14, %c0_437, %c0_438] : memref<8x16x16x128xbf16, #tpu.memory_space<vmem>>, vector<1x1x16x128xbf16>
    %772 = vector.shape_cast %771 : vector<1x1x16x128xbf16> to vector<16x128xbf16>
    %773 = arith.extf %772 : vector<16x128xbf16> to vector<16x128xf32>
    %774 = vector.extract_strided_slice %0 {offsets = [0, 0], sizes = [1, 128], strides = [1, 1]} : vector<8x128xf32> to vector<1x128xf32>
    %775 = vector.broadcast %774 : vector<1x128xf32> to vector<16x128xf32>
    %776 = arith.mulf %773, %775 : vector<16x128xf32>
    %c1_439 = arith.constant 1 : index
    %c14_440 = arith.constant 14 : index
    %c0_441 = arith.constant 0 : index
    %c0_442 = arith.constant 0 : index
    %777 = vector.load %arg1[%c1_439, %c14_440, %c0_441, %c0_442] : memref<8x16x16x128xbf16, #tpu.memory_space<vmem>>, vector<1x1x16x128xbf16>
    %778 = vector.shape_cast %777 : vector<1x1x16x128xbf16> to vector<16x128xbf16>
    %779 = arith.extf %778 : vector<16x128xbf16> to vector<16x128xf32>
    %780 = vector.extract_strided_slice %0 {offsets = [1, 0], sizes = [1, 128], strides = [1, 1]} : vector<8x128xf32> to vector<1x128xf32>
    %781 = vector.broadcast %780 : vector<1x128xf32> to vector<16x128xf32>
    %782 = arith.mulf %779, %781 : vector<16x128xf32>
    %783 = arith.addf %776, %782 : vector<16x128xf32>
    %c2_443 = arith.constant 2 : index
    %c14_444 = arith.constant 14 : index
    %c0_445 = arith.constant 0 : index
    %c0_446 = arith.constant 0 : index
    %784 = vector.load %arg1[%c2_443, %c14_444, %c0_445, %c0_446] : memref<8x16x16x128xbf16, #tpu.memory_space<vmem>>, vector<1x1x16x128xbf16>
    %785 = vector.shape_cast %784 : vector<1x1x16x128xbf16> to vector<16x128xbf16>
    %786 = arith.extf %785 : vector<16x128xbf16> to vector<16x128xf32>
    %787 = vector.extract_strided_slice %0 {offsets = [2, 0], sizes = [1, 128], strides = [1, 1]} : vector<8x128xf32> to vector<1x128xf32>
    %788 = vector.broadcast %787 : vector<1x128xf32> to vector<16x128xf32>
    %789 = arith.mulf %786, %788 : vector<16x128xf32>
    %790 = arith.addf %783, %789 : vector<16x128xf32>
    %c3_447 = arith.constant 3 : index
    %c14_448 = arith.constant 14 : index
    %c0_449 = arith.constant 0 : index
    %c0_450 = arith.constant 0 : index
    %791 = vector.load %arg1[%c3_447, %c14_448, %c0_449, %c0_450] : memref<8x16x16x128xbf16, #tpu.memory_space<vmem>>, vector<1x1x16x128xbf16>
    %792 = vector.shape_cast %791 : vector<1x1x16x128xbf16> to vector<16x128xbf16>
    %793 = arith.extf %792 : vector<16x128xbf16> to vector<16x128xf32>
    %794 = vector.extract_strided_slice %0 {offsets = [3, 0], sizes = [1, 128], strides = [1, 1]} : vector<8x128xf32> to vector<1x128xf32>
    %795 = vector.broadcast %794 : vector<1x128xf32> to vector<16x128xf32>
    %796 = arith.mulf %793, %795 : vector<16x128xf32>
    %797 = arith.addf %790, %796 : vector<16x128xf32>
    %c4_451 = arith.constant 4 : index
    %c14_452 = arith.constant 14 : index
    %c0_453 = arith.constant 0 : index
    %c0_454 = arith.constant 0 : index
    %798 = vector.load %arg1[%c4_451, %c14_452, %c0_453, %c0_454] : memref<8x16x16x128xbf16, #tpu.memory_space<vmem>>, vector<1x1x16x128xbf16>
    %799 = vector.shape_cast %798 : vector<1x1x16x128xbf16> to vector<16x128xbf16>
    %800 = arith.extf %799 : vector<16x128xbf16> to vector<16x128xf32>
    %801 = vector.extract_strided_slice %0 {offsets = [4, 0], sizes = [1, 128], strides = [1, 1]} : vector<8x128xf32> to vector<1x128xf32>
    %802 = vector.broadcast %801 : vector<1x128xf32> to vector<16x128xf32>
    %803 = arith.mulf %800, %802 : vector<16x128xf32>
    %804 = arith.addf %797, %803 : vector<16x128xf32>
    %c5_455 = arith.constant 5 : index
    %c14_456 = arith.constant 14 : index
    %c0_457 = arith.constant 0 : index
    %c0_458 = arith.constant 0 : index
    %805 = vector.load %arg1[%c5_455, %c14_456, %c0_457, %c0_458] : memref<8x16x16x128xbf16, #tpu.memory_space<vmem>>, vector<1x1x16x128xbf16>
    %806 = vector.shape_cast %805 : vector<1x1x16x128xbf16> to vector<16x128xbf16>
    %807 = arith.extf %806 : vector<16x128xbf16> to vector<16x128xf32>
    %808 = vector.extract_strided_slice %0 {offsets = [5, 0], sizes = [1, 128], strides = [1, 1]} : vector<8x128xf32> to vector<1x128xf32>
    %809 = vector.broadcast %808 : vector<1x128xf32> to vector<16x128xf32>
    %810 = arith.mulf %807, %809 : vector<16x128xf32>
    %811 = arith.addf %804, %810 : vector<16x128xf32>
    %c6_459 = arith.constant 6 : index
    %c14_460 = arith.constant 14 : index
    %c0_461 = arith.constant 0 : index
    %c0_462 = arith.constant 0 : index
    %812 = vector.load %arg1[%c6_459, %c14_460, %c0_461, %c0_462] : memref<8x16x16x128xbf16, #tpu.memory_space<vmem>>, vector<1x1x16x128xbf16>
    %813 = vector.shape_cast %812 : vector<1x1x16x128xbf16> to vector<16x128xbf16>
    %814 = arith.extf %813 : vector<16x128xbf16> to vector<16x128xf32>
    %815 = vector.extract_strided_slice %0 {offsets = [6, 0], sizes = [1, 128], strides = [1, 1]} : vector<8x128xf32> to vector<1x128xf32>
    %816 = vector.broadcast %815 : vector<1x128xf32> to vector<16x128xf32>
    %817 = arith.mulf %814, %816 : vector<16x128xf32>
    %818 = arith.addf %811, %817 : vector<16x128xf32>
    %c7_463 = arith.constant 7 : index
    %c14_464 = arith.constant 14 : index
    %c0_465 = arith.constant 0 : index
    %c0_466 = arith.constant 0 : index
    %819 = vector.load %arg1[%c7_463, %c14_464, %c0_465, %c0_466] : memref<8x16x16x128xbf16, #tpu.memory_space<vmem>>, vector<1x1x16x128xbf16>
    %820 = vector.shape_cast %819 : vector<1x1x16x128xbf16> to vector<16x128xbf16>
    %821 = arith.extf %820 : vector<16x128xbf16> to vector<16x128xf32>
    %822 = vector.extract_strided_slice %0 {offsets = [7, 0], sizes = [1, 128], strides = [1, 1]} : vector<8x128xf32> to vector<1x128xf32>
    %823 = vector.broadcast %822 : vector<1x128xf32> to vector<16x128xf32>
    %824 = arith.mulf %821, %823 : vector<16x128xf32>
    %825 = arith.addf %818, %824 : vector<16x128xf32>
    %c0_467 = arith.constant 0 : index
    %c15 = arith.constant 15 : index
    %c0_468 = arith.constant 0 : index
    %c0_469 = arith.constant 0 : index
    %826 = vector.load %arg1[%c0_467, %c15, %c0_468, %c0_469] : memref<8x16x16x128xbf16, #tpu.memory_space<vmem>>, vector<1x1x16x128xbf16>
    %827 = vector.shape_cast %826 : vector<1x1x16x128xbf16> to vector<16x128xbf16>
    %828 = arith.extf %827 : vector<16x128xbf16> to vector<16x128xf32>
    %829 = vector.extract_strided_slice %0 {offsets = [0, 0], sizes = [1, 128], strides = [1, 1]} : vector<8x128xf32> to vector<1x128xf32>
    %830 = vector.broadcast %829 : vector<1x128xf32> to vector<16x128xf32>
    %831 = arith.mulf %828, %830 : vector<16x128xf32>
    %c1_470 = arith.constant 1 : index
    %c15_471 = arith.constant 15 : index
    %c0_472 = arith.constant 0 : index
    %c0_473 = arith.constant 0 : index
    %832 = vector.load %arg1[%c1_470, %c15_471, %c0_472, %c0_473] : memref<8x16x16x128xbf16, #tpu.memory_space<vmem>>, vector<1x1x16x128xbf16>
    %833 = vector.shape_cast %832 : vector<1x1x16x128xbf16> to vector<16x128xbf16>
    %834 = arith.extf %833 : vector<16x128xbf16> to vector<16x128xf32>
    %835 = vector.extract_strided_slice %0 {offsets = [1, 0], sizes = [1, 128], strides = [1, 1]} : vector<8x128xf32> to vector<1x128xf32>
    %836 = vector.broadcast %835 : vector<1x128xf32> to vector<16x128xf32>
    %837 = arith.mulf %834, %836 : vector<16x128xf32>
    %838 = arith.addf %831, %837 : vector<16x128xf32>
    %c2_474 = arith.constant 2 : index
    %c15_475 = arith.constant 15 : index
    %c0_476 = arith.constant 0 : index
    %c0_477 = arith.constant 0 : index
    %839 = vector.load %arg1[%c2_474, %c15_475, %c0_476, %c0_477] : memref<8x16x16x128xbf16, #tpu.memory_space<vmem>>, vector<1x1x16x128xbf16>
    %840 = vector.shape_cast %839 : vector<1x1x16x128xbf16> to vector<16x128xbf16>
    %841 = arith.extf %840 : vector<16x128xbf16> to vector<16x128xf32>
    %842 = vector.extract_strided_slice %0 {offsets = [2, 0], sizes = [1, 128], strides = [1, 1]} : vector<8x128xf32> to vector<1x128xf32>
    %843 = vector.broadcast %842 : vector<1x128xf32> to vector<16x128xf32>
    %844 = arith.mulf %841, %843 : vector<16x128xf32>
    %845 = arith.addf %838, %844 : vector<16x128xf32>
    %c3_478 = arith.constant 3 : index
    %c15_479 = arith.constant 15 : index
    %c0_480 = arith.constant 0 : index
    %c0_481 = arith.constant 0 : index
    %846 = vector.load %arg1[%c3_478, %c15_479, %c0_480, %c0_481] : memref<8x16x16x128xbf16, #tpu.memory_space<vmem>>, vector<1x1x16x128xbf16>
    %847 = vector.shape_cast %846 : vector<1x1x16x128xbf16> to vector<16x128xbf16>
    %848 = arith.extf %847 : vector<16x128xbf16> to vector<16x128xf32>
    %849 = vector.extract_strided_slice %0 {offsets = [3, 0], sizes = [1, 128], strides = [1, 1]} : vector<8x128xf32> to vector<1x128xf32>
    %850 = vector.broadcast %849 : vector<1x128xf32> to vector<16x128xf32>
    %851 = arith.mulf %848, %850 : vector<16x128xf32>
    %852 = arith.addf %845, %851 : vector<16x128xf32>
    %c4_482 = arith.constant 4 : index
    %c15_483 = arith.constant 15 : index
    %c0_484 = arith.constant 0 : index
    %c0_485 = arith.constant 0 : index
    %853 = vector.load %arg1[%c4_482, %c15_483, %c0_484, %c0_485] : memref<8x16x16x128xbf16, #tpu.memory_space<vmem>>, vector<1x1x16x128xbf16>
    %854 = vector.shape_cast %853 : vector<1x1x16x128xbf16> to vector<16x128xbf16>
    %855 = arith.extf %854 : vector<16x128xbf16> to vector<16x128xf32>
    %856 = vector.extract_strided_slice %0 {offsets = [4, 0], sizes = [1, 128], strides = [1, 1]} : vector<8x128xf32> to vector<1x128xf32>
    %857 = vector.broadcast %856 : vector<1x128xf32> to vector<16x128xf32>
    %858 = arith.mulf %855, %857 : vector<16x128xf32>
    %859 = arith.addf %852, %858 : vector<16x128xf32>
    %c5_486 = arith.constant 5 : index
    %c15_487 = arith.constant 15 : index
    %c0_488 = arith.constant 0 : index
    %c0_489 = arith.constant 0 : index
    %860 = vector.load %arg1[%c5_486, %c15_487, %c0_488, %c0_489] : memref<8x16x16x128xbf16, #tpu.memory_space<vmem>>, vector<1x1x16x128xbf16>
    %861 = vector.shape_cast %860 : vector<1x1x16x128xbf16> to vector<16x128xbf16>
    %862 = arith.extf %861 : vector<16x128xbf16> to vector<16x128xf32>
    %863 = vector.extract_strided_slice %0 {offsets = [5, 0], sizes = [1, 128], strides = [1, 1]} : vector<8x128xf32> to vector<1x128xf32>
    %864 = vector.broadcast %863 : vector<1x128xf32> to vector<16x128xf32>
    %865 = arith.mulf %862, %864 : vector<16x128xf32>
    %866 = arith.addf %859, %865 : vector<16x128xf32>
    %c6_490 = arith.constant 6 : index
    %c15_491 = arith.constant 15 : index
    %c0_492 = arith.constant 0 : index
    %c0_493 = arith.constant 0 : index
    %867 = vector.load %arg1[%c6_490, %c15_491, %c0_492, %c0_493] : memref<8x16x16x128xbf16, #tpu.memory_space<vmem>>, vector<1x1x16x128xbf16>
    %868 = vector.shape_cast %867 : vector<1x1x16x128xbf16> to vector<16x128xbf16>
    %869 = arith.extf %868 : vector<16x128xbf16> to vector<16x128xf32>
    %870 = vector.extract_strided_slice %0 {offsets = [6, 0], sizes = [1, 128], strides = [1, 1]} : vector<8x128xf32> to vector<1x128xf32>
    %871 = vector.broadcast %870 : vector<1x128xf32> to vector<16x128xf32>
    %872 = arith.mulf %869, %871 : vector<16x128xf32>
    %873 = arith.addf %866, %872 : vector<16x128xf32>
    %c7_494 = arith.constant 7 : index
    %c15_495 = arith.constant 15 : index
    %c0_496 = arith.constant 0 : index
    %c0_497 = arith.constant 0 : index
    %874 = vector.load %arg1[%c7_494, %c15_495, %c0_496, %c0_497] : memref<8x16x16x128xbf16, #tpu.memory_space<vmem>>, vector<1x1x16x128xbf16>
    %875 = vector.shape_cast %874 : vector<1x1x16x128xbf16> to vector<16x128xbf16>
    %876 = arith.extf %875 : vector<16x128xbf16> to vector<16x128xf32>
    %877 = vector.extract_strided_slice %0 {offsets = [7, 0], sizes = [1, 128], strides = [1, 1]} : vector<8x128xf32> to vector<1x128xf32>
    %878 = vector.broadcast %877 : vector<1x128xf32> to vector<16x128xf32>
    %879 = arith.mulf %876, %878 : vector<16x128xf32>
    %880 = arith.addf %873, %879 : vector<16x128xf32>
    %881 = arith.addf %55, %110 : vector<16x128xf32>
    %882 = arith.addf %881, %165 : vector<16x128xf32>
    %883 = arith.addf %882, %220 : vector<16x128xf32>
    %884 = arith.addf %883, %275 : vector<16x128xf32>
    %885 = arith.addf %884, %330 : vector<16x128xf32>
    %886 = arith.addf %885, %385 : vector<16x128xf32>
    %887 = arith.addf %886, %440 : vector<16x128xf32>
    %888 = arith.addf %887, %495 : vector<16x128xf32>
    %889 = arith.addf %888, %550 : vector<16x128xf32>
    %890 = arith.addf %889, %605 : vector<16x128xf32>
    %891 = arith.addf %890, %660 : vector<16x128xf32>
    %892 = arith.addf %891, %715 : vector<16x128xf32>
    %893 = arith.addf %892, %770 : vector<16x128xf32>
    %894 = arith.addf %893, %825 : vector<16x128xf32>
    %895 = arith.addf %894, %880 : vector<16x128xf32>
    %cst = arith.constant 6.250000e-02 : f32
    %896 = vector.broadcast %cst : f32 to vector<16x128xf32>
    %897 = arith.mulf %895, %896 : vector<16x128xf32>
    %898 = arith.mulf %897, %897 : vector<16x128xf32>
    %cst_498 = arith.constant dense<0.000000e+00> : vector<128xf32>
    %899 = vector.multi_reduction <add>, %898, %cst_498 [0] : vector<16x128xf32> to vector<128xf32>
    %900 = vector.shape_cast %899 : vector<128xf32> to vector<1x128xf32>
    %901 = math.sqrt %900 : vector<1x128xf32>
    %902 = vector.broadcast %901 : vector<1x128xf32> to vector<16x128xf32>
    %903 = arith.mulf %897, %902 : vector<16x128xf32>
    %cst_499 = arith.constant 1.000000e+00 : f32
    %904 = vector.broadcast %cst_499 : f32 to vector<1x128xf32>
    %905 = arith.addf %904, %900 : vector<1x128xf32>
    %906 = tpu.reciprocal %905 {approx = true} : vector<1x128xf32> -> vector<1x128xf32>
    %907 = vector.broadcast %906 : vector<1x128xf32> to vector<16x128xf32>
    %908 = arith.mulf %903, %907 : vector<16x128xf32>
    %909 = arith.mulf %908, %55 : vector<16x128xf32>
    %cst_500 = arith.constant dense<0.000000e+00> : vector<128xf32>
    %910 = vector.multi_reduction <add>, %909, %cst_500 [0] : vector<16x128xf32> to vector<128xf32>
    %911 = vector.shape_cast %910 : vector<128xf32> to vector<1x128xf32>
    %912 = arith.mulf %908, %110 : vector<16x128xf32>
    %cst_501 = arith.constant dense<0.000000e+00> : vector<128xf32>
    %913 = vector.multi_reduction <add>, %912, %cst_501 [0] : vector<16x128xf32> to vector<128xf32>
    %914 = vector.shape_cast %913 : vector<128xf32> to vector<1x128xf32>
    %915 = arith.mulf %908, %165 : vector<16x128xf32>
    %cst_502 = arith.constant dense<0.000000e+00> : vector<128xf32>
    %916 = vector.multi_reduction <add>, %915, %cst_502 [0] : vector<16x128xf32> to vector<128xf32>
    %917 = vector.shape_cast %916 : vector<128xf32> to vector<1x128xf32>
    %918 = arith.mulf %908, %220 : vector<16x128xf32>
    %cst_503 = arith.constant dense<0.000000e+00> : vector<128xf32>
    %919 = vector.multi_reduction <add>, %918, %cst_503 [0] : vector<16x128xf32> to vector<128xf32>
    %920 = vector.shape_cast %919 : vector<128xf32> to vector<1x128xf32>
    %921 = arith.mulf %908, %275 : vector<16x128xf32>
    %cst_504 = arith.constant dense<0.000000e+00> : vector<128xf32>
    %922 = vector.multi_reduction <add>, %921, %cst_504 [0] : vector<16x128xf32> to vector<128xf32>
    %923 = vector.shape_cast %922 : vector<128xf32> to vector<1x128xf32>
    %924 = arith.mulf %908, %330 : vector<16x128xf32>
    %cst_505 = arith.constant dense<0.000000e+00> : vector<128xf32>
    %925 = vector.multi_reduction <add>, %924, %cst_505 [0] : vector<16x128xf32> to vector<128xf32>
    %926 = vector.shape_cast %925 : vector<128xf32> to vector<1x128xf32>
    %927 = arith.mulf %908, %385 : vector<16x128xf32>
    %cst_506 = arith.constant dense<0.000000e+00> : vector<128xf32>
    %928 = vector.multi_reduction <add>, %927, %cst_506 [0] : vector<16x128xf32> to vector<128xf32>
    %929 = vector.shape_cast %928 : vector<128xf32> to vector<1x128xf32>
    %930 = arith.mulf %908, %440 : vector<16x128xf32>
    %cst_507 = arith.constant dense<0.000000e+00> : vector<128xf32>
    %931 = vector.multi_reduction <add>, %930, %cst_507 [0] : vector<16x128xf32> to vector<128xf32>
    %932 = vector.shape_cast %931 : vector<128xf32> to vector<1x128xf32>
    %933 = arith.mulf %908, %495 : vector<16x128xf32>
    %cst_508 = arith.constant dense<0.000000e+00> : vector<128xf32>
    %934 = vector.multi_reduction <add>, %933, %cst_508 [0] : vector<16x128xf32> to vector<128xf32>
    %935 = vector.shape_cast %934 : vector<128xf32> to vector<1x128xf32>
    %936 = arith.mulf %908, %550 : vector<16x128xf32>
    %cst_509 = arith.constant dense<0.000000e+00> : vector<128xf32>
    %937 = vector.multi_reduction <add>, %936, %cst_509 [0] : vector<16x128xf32> to vector<128xf32>
    %938 = vector.shape_cast %937 : vector<128xf32> to vector<1x128xf32>
    %939 = arith.mulf %908, %605 : vector<16x128xf32>
    %cst_510 = arith.constant dense<0.000000e+00> : vector<128xf32>
    %940 = vector.multi_reduction <add>, %939, %cst_510 [0] : vector<16x128xf32> to vector<128xf32>
    %941 = vector.shape_cast %940 : vector<128xf32> to vector<1x128xf32>
    %942 = arith.mulf %908, %660 : vector<16x128xf32>
    %cst_511 = arith.constant dense<0.000000e+00> : vector<128xf32>
    %943 = vector.multi_reduction <add>, %942, %cst_511 [0] : vector<16x128xf32> to vector<128xf32>
    %944 = vector.shape_cast %943 : vector<128xf32> to vector<1x128xf32>
    %945 = arith.mulf %908, %715 : vector<16x128xf32>
    %cst_512 = arith.constant dense<0.000000e+00> : vector<128xf32>
    %946 = vector.multi_reduction <add>, %945, %cst_512 [0] : vector<16x128xf32> to vector<128xf32>
    %947 = vector.shape_cast %946 : vector<128xf32> to vector<1x128xf32>
    %948 = arith.mulf %908, %770 : vector<16x128xf32>
    %cst_513 = arith.constant dense<0.000000e+00> : vector<128xf32>
    %949 = vector.multi_reduction <add>, %948, %cst_513 [0] : vector<16x128xf32> to vector<128xf32>
    %950 = vector.shape_cast %949 : vector<128xf32> to vector<1x128xf32>
    %951 = arith.mulf %908, %825 : vector<16x128xf32>
    %cst_514 = arith.constant dense<0.000000e+00> : vector<128xf32>
    %952 = vector.multi_reduction <add>, %951, %cst_514 [0] : vector<16x128xf32> to vector<128xf32>
    %953 = vector.shape_cast %952 : vector<128xf32> to vector<1x128xf32>
    %954 = arith.mulf %908, %880 : vector<16x128xf32>
    %cst_515 = arith.constant dense<0.000000e+00> : vector<128xf32>
    %955 = vector.multi_reduction <add>, %954, %cst_515 [0] : vector<16x128xf32> to vector<128xf32>
    %956 = vector.shape_cast %955 : vector<128xf32> to vector<1x128xf32>
    %957 = arith.maximumf %911, %914 : vector<1x128xf32>
    %958 = arith.maximumf %957, %917 : vector<1x128xf32>
    %959 = arith.maximumf %958, %920 : vector<1x128xf32>
    %960 = arith.maximumf %959, %923 : vector<1x128xf32>
    %961 = arith.maximumf %960, %926 : vector<1x128xf32>
    %962 = arith.maximumf %961, %929 : vector<1x128xf32>
    %963 = arith.maximumf %962, %932 : vector<1x128xf32>
    %964 = arith.maximumf %963, %935 : vector<1x128xf32>
    %965 = arith.maximumf %964, %938 : vector<1x128xf32>
    %966 = arith.maximumf %965, %941 : vector<1x128xf32>
    %967 = arith.maximumf %966, %944 : vector<1x128xf32>
    %968 = arith.maximumf %967, %947 : vector<1x128xf32>
    %969 = arith.maximumf %968, %950 : vector<1x128xf32>
    %970 = arith.maximumf %969, %953 : vector<1x128xf32>
    %971 = arith.maximumf %970, %956 : vector<1x128xf32>
    %972 = arith.subf %911, %971 : vector<1x128xf32>
    %973 = math.exp %972 : vector<1x128xf32>
    %974 = arith.subf %914, %971 : vector<1x128xf32>
    %975 = math.exp %974 : vector<1x128xf32>
    %976 = arith.subf %917, %971 : vector<1x128xf32>
    %977 = math.exp %976 : vector<1x128xf32>
    %978 = arith.subf %920, %971 : vector<1x128xf32>
    %979 = math.exp %978 : vector<1x128xf32>
    %980 = arith.subf %923, %971 : vector<1x128xf32>
    %981 = math.exp %980 : vector<1x128xf32>
    %982 = arith.subf %926, %971 : vector<1x128xf32>
    %983 = math.exp %982 : vector<1x128xf32>
    %984 = arith.subf %929, %971 : vector<1x128xf32>
    %985 = math.exp %984 : vector<1x128xf32>
    %986 = arith.subf %932, %971 : vector<1x128xf32>
    %987 = math.exp %986 : vector<1x128xf32>
    %988 = arith.subf %935, %971 : vector<1x128xf32>
    %989 = math.exp %988 : vector<1x128xf32>
    %990 = arith.subf %938, %971 : vector<1x128xf32>
    %991 = math.exp %990 : vector<1x128xf32>
    %992 = arith.subf %941, %971 : vector<1x128xf32>
    %993 = math.exp %992 : vector<1x128xf32>
    %994 = arith.subf %944, %971 : vector<1x128xf32>
    %995 = math.exp %994 : vector<1x128xf32>
    %996 = arith.subf %947, %971 : vector<1x128xf32>
    %997 = math.exp %996 : vector<1x128xf32>
    %998 = arith.subf %950, %971 : vector<1x128xf32>
    %999 = math.exp %998 : vector<1x128xf32>
    %1000 = arith.subf %953, %971 : vector<1x128xf32>
    %1001 = math.exp %1000 : vector<1x128xf32>
    %1002 = arith.subf %956, %971 : vector<1x128xf32>
    %1003 = math.exp %1002 : vector<1x128xf32>
    %1004 = arith.addf %973, %975 : vector<1x128xf32>
    %1005 = arith.addf %1004, %977 : vector<1x128xf32>
    %1006 = arith.addf %1005, %979 : vector<1x128xf32>
    %1007 = arith.addf %1006, %981 : vector<1x128xf32>
    %1008 = arith.addf %1007, %983 : vector<1x128xf32>
    %1009 = arith.addf %1008, %985 : vector<1x128xf32>
    %1010 = arith.addf %1009, %987 : vector<1x128xf32>
    %1011 = arith.addf %1010, %989 : vector<1x128xf32>
    %1012 = arith.addf %1011, %991 : vector<1x128xf32>
    %1013 = arith.addf %1012, %993 : vector<1x128xf32>
    %1014 = arith.addf %1013, %995 : vector<1x128xf32>
    %1015 = arith.addf %1014, %997 : vector<1x128xf32>
    %1016 = arith.addf %1015, %999 : vector<1x128xf32>
    %1017 = arith.addf %1016, %1001 : vector<1x128xf32>
    %1018 = arith.addf %1017, %1003 : vector<1x128xf32>
    %1019 = tpu.reciprocal %1018 {approx = true} : vector<1x128xf32> -> vector<1x128xf32>
    %1020 = arith.mulf %973, %1019 : vector<1x128xf32>
    %1021 = vector.broadcast %1020 : vector<1x128xf32> to vector<16x128xf32>
    %1022 = arith.mulf %1021, %55 : vector<16x128xf32>
    %1023 = arith.mulf %975, %1019 : vector<1x128xf32>
    %1024 = vector.broadcast %1023 : vector<1x128xf32> to vector<16x128xf32>
    %1025 = arith.mulf %1024, %110 : vector<16x128xf32>
    %1026 = arith.addf %1022, %1025 : vector<16x128xf32>
    %1027 = arith.mulf %977, %1019 : vector<1x128xf32>
    %1028 = vector.broadcast %1027 : vector<1x128xf32> to vector<16x128xf32>
    %1029 = arith.mulf %1028, %165 : vector<16x128xf32>
    %1030 = arith.addf %1026, %1029 : vector<16x128xf32>
    %1031 = arith.mulf %979, %1019 : vector<1x128xf32>
    %1032 = vector.broadcast %1031 : vector<1x128xf32> to vector<16x128xf32>
    %1033 = arith.mulf %1032, %220 : vector<16x128xf32>
    %1034 = arith.addf %1030, %1033 : vector<16x128xf32>
    %1035 = arith.mulf %981, %1019 : vector<1x128xf32>
    %1036 = vector.broadcast %1035 : vector<1x128xf32> to vector<16x128xf32>
    %1037 = arith.mulf %1036, %275 : vector<16x128xf32>
    %1038 = arith.addf %1034, %1037 : vector<16x128xf32>
    %1039 = arith.mulf %983, %1019 : vector<1x128xf32>
    %1040 = vector.broadcast %1039 : vector<1x128xf32> to vector<16x128xf32>
    %1041 = arith.mulf %1040, %330 : vector<16x128xf32>
    %1042 = arith.addf %1038, %1041 : vector<16x128xf32>
    %1043 = arith.mulf %985, %1019 : vector<1x128xf32>
    %1044 = vector.broadcast %1043 : vector<1x128xf32> to vector<16x128xf32>
    %1045 = arith.mulf %1044, %385 : vector<16x128xf32>
    %1046 = arith.addf %1042, %1045 : vector<16x128xf32>
    %1047 = arith.mulf %987, %1019 : vector<1x128xf32>
    %1048 = vector.broadcast %1047 : vector<1x128xf32> to vector<16x128xf32>
    %1049 = arith.mulf %1048, %440 : vector<16x128xf32>
    %1050 = arith.addf %1046, %1049 : vector<16x128xf32>
    %1051 = arith.mulf %989, %1019 : vector<1x128xf32>
    %1052 = vector.broadcast %1051 : vector<1x128xf32> to vector<16x128xf32>
    %1053 = arith.mulf %1052, %495 : vector<16x128xf32>
    %1054 = arith.addf %1050, %1053 : vector<16x128xf32>
    %1055 = arith.mulf %991, %1019 : vector<1x128xf32>
    %1056 = vector.broadcast %1055 : vector<1x128xf32> to vector<16x128xf32>
    %1057 = arith.mulf %1056, %550 : vector<16x128xf32>
    %1058 = arith.addf %1054, %1057 : vector<16x128xf32>
    %1059 = arith.mulf %993, %1019 : vector<1x128xf32>
    %1060 = vector.broadcast %1059 : vector<1x128xf32> to vector<16x128xf32>
    %1061 = arith.mulf %1060, %605 : vector<16x128xf32>
    %1062 = arith.addf %1058, %1061 : vector<16x128xf32>
    %1063 = arith.mulf %995, %1019 : vector<1x128xf32>
    %1064 = vector.broadcast %1063 : vector<1x128xf32> to vector<16x128xf32>
    %1065 = arith.mulf %1064, %660 : vector<16x128xf32>
    %1066 = arith.addf %1062, %1065 : vector<16x128xf32>
    %1067 = arith.mulf %997, %1019 : vector<1x128xf32>
    %1068 = vector.broadcast %1067 : vector<1x128xf32> to vector<16x128xf32>
    %1069 = arith.mulf %1068, %715 : vector<16x128xf32>
    %1070 = arith.addf %1066, %1069 : vector<16x128xf32>
    %1071 = arith.mulf %999, %1019 : vector<1x128xf32>
    %1072 = vector.broadcast %1071 : vector<1x128xf32> to vector<16x128xf32>
    %1073 = arith.mulf %1072, %770 : vector<16x128xf32>
    %1074 = arith.addf %1070, %1073 : vector<16x128xf32>
    %1075 = arith.mulf %1001, %1019 : vector<1x128xf32>
    %1076 = vector.broadcast %1075 : vector<1x128xf32> to vector<16x128xf32>
    %1077 = arith.mulf %1076, %825 : vector<16x128xf32>
    %1078 = arith.addf %1074, %1077 : vector<16x128xf32>
    %1079 = arith.mulf %1003, %1019 : vector<1x128xf32>
    %1080 = vector.broadcast %1079 : vector<1x128xf32> to vector<16x128xf32>
    %1081 = arith.mulf %1080, %880 : vector<16x128xf32>
    %1082 = arith.addf %1078, %1081 : vector<16x128xf32>
    %1083 = arith.mulf %1082, %1082 : vector<16x128xf32>
    %cst_516 = arith.constant dense<0.000000e+00> : vector<128xf32>
    %1084 = vector.multi_reduction <add>, %1083, %cst_516 [0] : vector<16x128xf32> to vector<128xf32>
    %1085 = vector.shape_cast %1084 : vector<128xf32> to vector<1x128xf32>
    %1086 = math.sqrt %1085 : vector<1x128xf32>
    %1087 = vector.broadcast %1086 : vector<1x128xf32> to vector<16x128xf32>
    %1088 = arith.mulf %1082, %1087 : vector<16x128xf32>
    %cst_517 = arith.constant 1.000000e+00 : f32
    %1089 = vector.broadcast %cst_517 : f32 to vector<1x128xf32>
    %1090 = arith.addf %1089, %1085 : vector<1x128xf32>
    %1091 = tpu.reciprocal %1090 {approx = true} : vector<1x128xf32> -> vector<1x128xf32>
    %1092 = vector.broadcast %1091 : vector<1x128xf32> to vector<16x128xf32>
    %1093 = arith.mulf %1088, %1092 : vector<16x128xf32>
    %1094 = arith.mulf %1093, %55 : vector<16x128xf32>
    %cst_518 = arith.constant dense<0.000000e+00> : vector<128xf32>
    %1095 = vector.multi_reduction <add>, %1094, %cst_518 [0] : vector<16x128xf32> to vector<128xf32>
    %1096 = vector.shape_cast %1095 : vector<128xf32> to vector<1x128xf32>
    %1097 = arith.addf %911, %1096 : vector<1x128xf32>
    %1098 = arith.mulf %1093, %110 : vector<16x128xf32>
    %cst_519 = arith.constant dense<0.000000e+00> : vector<128xf32>
    %1099 = vector.multi_reduction <add>, %1098, %cst_519 [0] : vector<16x128xf32> to vector<128xf32>
    %1100 = vector.shape_cast %1099 : vector<128xf32> to vector<1x128xf32>
    %1101 = arith.addf %914, %1100 : vector<1x128xf32>
    %1102 = arith.mulf %1093, %165 : vector<16x128xf32>
    %cst_520 = arith.constant dense<0.000000e+00> : vector<128xf32>
    %1103 = vector.multi_reduction <add>, %1102, %cst_520 [0] : vector<16x128xf32> to vector<128xf32>
    %1104 = vector.shape_cast %1103 : vector<128xf32> to vector<1x128xf32>
    %1105 = arith.addf %917, %1104 : vector<1x128xf32>
    %1106 = arith.mulf %1093, %220 : vector<16x128xf32>
    %cst_521 = arith.constant dense<0.000000e+00> : vector<128xf32>
    %1107 = vector.multi_reduction <add>, %1106, %cst_521 [0] : vector<16x128xf32> to vector<128xf32>
    %1108 = vector.shape_cast %1107 : vector<128xf32> to vector<1x128xf32>
    %1109 = arith.addf %920, %1108 : vector<1x128xf32>
    %1110 = arith.mulf %1093, %275 : vector<16x128xf32>
    %cst_522 = arith.constant dense<0.000000e+00> : vector<128xf32>
    %1111 = vector.multi_reduction <add>, %1110, %cst_522 [0] : vector<16x128xf32> to vector<128xf32>
    %1112 = vector.shape_cast %1111 : vector<128xf32> to vector<1x128xf32>
    %1113 = arith.addf %923, %1112 : vector<1x128xf32>
    %1114 = arith.mulf %1093, %330 : vector<16x128xf32>
    %cst_523 = arith.constant dense<0.000000e+00> : vector<128xf32>
    %1115 = vector.multi_reduction <add>, %1114, %cst_523 [0] : vector<16x128xf32> to vector<128xf32>
    %1116 = vector.shape_cast %1115 : vector<128xf32> to vector<1x128xf32>
    %1117 = arith.addf %926, %1116 : vector<1x128xf32>
    %1118 = arith.mulf %1093, %385 : vector<16x128xf32>
    %cst_524 = arith.constant dense<0.000000e+00> : vector<128xf32>
    %1119 = vector.multi_reduction <add>, %1118, %cst_524 [0] : vector<16x128xf32> to vector<128xf32>
    %1120 = vector.shape_cast %1119 : vector<128xf32> to vector<1x128xf32>
    %1121 = arith.addf %929, %1120 : vector<1x128xf32>
    %1122 = arith.mulf %1093, %440 : vector<16x128xf32>
    %cst_525 = arith.constant dense<0.000000e+00> : vector<128xf32>
    %1123 = vector.multi_reduction <add>, %1122, %cst_525 [0] : vector<16x128xf32> to vector<128xf32>
    %1124 = vector.shape_cast %1123 : vector<128xf32> to vector<1x128xf32>
    %1125 = arith.addf %932, %1124 : vector<1x128xf32>
    %1126 = arith.mulf %1093, %495 : vector<16x128xf32>
    %cst_526 = arith.constant dense<0.000000e+00> : vector<128xf32>
    %1127 = vector.multi_reduction <add>, %1126, %cst_526 [0] : vector<16x128xf32> to vector<128xf32>
    %1128 = vector.shape_cast %1127 : vector<128xf32> to vector<1x128xf32>
    %1129 = arith.addf %935, %1128 : vector<1x128xf32>
    %1130 = arith.mulf %1093, %550 : vector<16x128xf32>
    %cst_527 = arith.constant dense<0.000000e+00> : vector<128xf32>
    %1131 = vector.multi_reduction <add>, %1130, %cst_527 [0] : vector<16x128xf32> to vector<128xf32>
    %1132 = vector.shape_cast %1131 : vector<128xf32> to vector<1x128xf32>
    %1133 = arith.addf %938, %1132 : vector<1x128xf32>
    %1134 = arith.mulf %1093, %605 : vector<16x128xf32>
    %cst_528 = arith.constant dense<0.000000e+00> : vector<128xf32>
    %1135 = vector.multi_reduction <add>, %1134, %cst_528 [0] : vector<16x128xf32> to vector<128xf32>
    %1136 = vector.shape_cast %1135 : vector<128xf32> to vector<1x128xf32>
    %1137 = arith.addf %941, %1136 : vector<1x128xf32>
    %1138 = arith.mulf %1093, %660 : vector<16x128xf32>
    %cst_529 = arith.constant dense<0.000000e+00> : vector<128xf32>
    %1139 = vector.multi_reduction <add>, %1138, %cst_529 [0] : vector<16x128xf32> to vector<128xf32>
    %1140 = vector.shape_cast %1139 : vector<128xf32> to vector<1x128xf32>
    %1141 = arith.addf %944, %1140 : vector<1x128xf32>
    %1142 = arith.mulf %1093, %715 : vector<16x128xf32>
    %cst_530 = arith.constant dense<0.000000e+00> : vector<128xf32>
    %1143 = vector.multi_reduction <add>, %1142, %cst_530 [0] : vector<16x128xf32> to vector<128xf32>
    %1144 = vector.shape_cast %1143 : vector<128xf32> to vector<1x128xf32>
    %1145 = arith.addf %947, %1144 : vector<1x128xf32>
    %1146 = arith.mulf %1093, %770 : vector<16x128xf32>
    %cst_531 = arith.constant dense<0.000000e+00> : vector<128xf32>
    %1147 = vector.multi_reduction <add>, %1146, %cst_531 [0] : vector<16x128xf32> to vector<128xf32>
    %1148 = vector.shape_cast %1147 : vector<128xf32> to vector<1x128xf32>
    %1149 = arith.addf %950, %1148 : vector<1x128xf32>
    %1150 = arith.mulf %1093, %825 : vector<16x128xf32>
    %cst_532 = arith.constant dense<0.000000e+00> : vector<128xf32>
    %1151 = vector.multi_reduction <add>, %1150, %cst_532 [0] : vector<16x128xf32> to vector<128xf32>
    %1152 = vector.shape_cast %1151 : vector<128xf32> to vector<1x128xf32>
    %1153 = arith.addf %953, %1152 : vector<1x128xf32>
    %1154 = arith.mulf %1093, %880 : vector<16x128xf32>
    %cst_533 = arith.constant dense<0.000000e+00> : vector<128xf32>
    %1155 = vector.multi_reduction <add>, %1154, %cst_533 [0] : vector<16x128xf32> to vector<128xf32>
    %1156 = vector.shape_cast %1155 : vector<128xf32> to vector<1x128xf32>
    %1157 = arith.addf %956, %1156 : vector<1x128xf32>
    %1158 = arith.maximumf %1097, %1101 : vector<1x128xf32>
    %1159 = arith.maximumf %1158, %1105 : vector<1x128xf32>
    %1160 = arith.maximumf %1159, %1109 : vector<1x128xf32>
    %1161 = arith.maximumf %1160, %1113 : vector<1x128xf32>
    %1162 = arith.maximumf %1161, %1117 : vector<1x128xf32>
    %1163 = arith.maximumf %1162, %1121 : vector<1x128xf32>
    %1164 = arith.maximumf %1163, %1125 : vector<1x128xf32>
    %1165 = arith.maximumf %1164, %1129 : vector<1x128xf32>
    %1166 = arith.maximumf %1165, %1133 : vector<1x128xf32>
    %1167 = arith.maximumf %1166, %1137 : vector<1x128xf32>
    %1168 = arith.maximumf %1167, %1141 : vector<1x128xf32>
    %1169 = arith.maximumf %1168, %1145 : vector<1x128xf32>
    %1170 = arith.maximumf %1169, %1149 : vector<1x128xf32>
    %1171 = arith.maximumf %1170, %1153 : vector<1x128xf32>
    %1172 = arith.maximumf %1171, %1157 : vector<1x128xf32>
    %1173 = arith.subf %1097, %1172 : vector<1x128xf32>
    %1174 = math.exp %1173 : vector<1x128xf32>
    %1175 = arith.subf %1101, %1172 : vector<1x128xf32>
    %1176 = math.exp %1175 : vector<1x128xf32>
    %1177 = arith.subf %1105, %1172 : vector<1x128xf32>
    %1178 = math.exp %1177 : vector<1x128xf32>
    %1179 = arith.subf %1109, %1172 : vector<1x128xf32>
    %1180 = math.exp %1179 : vector<1x128xf32>
    %1181 = arith.subf %1113, %1172 : vector<1x128xf32>
    %1182 = math.exp %1181 : vector<1x128xf32>
    %1183 = arith.subf %1117, %1172 : vector<1x128xf32>
    %1184 = math.exp %1183 : vector<1x128xf32>
    %1185 = arith.subf %1121, %1172 : vector<1x128xf32>
    %1186 = math.exp %1185 : vector<1x128xf32>
    %1187 = arith.subf %1125, %1172 : vector<1x128xf32>
    %1188 = math.exp %1187 : vector<1x128xf32>
    %1189 = arith.subf %1129, %1172 : vector<1x128xf32>
    %1190 = math.exp %1189 : vector<1x128xf32>
    %1191 = arith.subf %1133, %1172 : vector<1x128xf32>
    %1192 = math.exp %1191 : vector<1x128xf32>
    %1193 = arith.subf %1137, %1172 : vector<1x128xf32>
    %1194 = math.exp %1193 : vector<1x128xf32>
    %1195 = arith.subf %1141, %1172 : vector<1x128xf32>
    %1196 = math.exp %1195 : vector<1x128xf32>
    %1197 = arith.subf %1145, %1172 : vector<1x128xf32>
    %1198 = math.exp %1197 : vector<1x128xf32>
    %1199 = arith.subf %1149, %1172 : vector<1x128xf32>
    %1200 = math.exp %1199 : vector<1x128xf32>
    %1201 = arith.subf %1153, %1172 : vector<1x128xf32>
    %1202 = math.exp %1201 : vector<1x128xf32>
    %1203 = arith.subf %1157, %1172 : vector<1x128xf32>
    %1204 = math.exp %1203 : vector<1x128xf32>
    %1205 = arith.addf %1174, %1176 : vector<1x128xf32>
    %1206 = arith.addf %1205, %1178 : vector<1x128xf32>
    %1207 = arith.addf %1206, %1180 : vector<1x128xf32>
    %1208 = arith.addf %1207, %1182 : vector<1x128xf32>
    %1209 = arith.addf %1208, %1184 : vector<1x128xf32>
    %1210 = arith.addf %1209, %1186 : vector<1x128xf32>
    %1211 = arith.addf %1210, %1188 : vector<1x128xf32>
    %1212 = arith.addf %1211, %1190 : vector<1x128xf32>
    %1213 = arith.addf %1212, %1192 : vector<1x128xf32>
    %1214 = arith.addf %1213, %1194 : vector<1x128xf32>
    %1215 = arith.addf %1214, %1196 : vector<1x128xf32>
    %1216 = arith.addf %1215, %1198 : vector<1x128xf32>
    %1217 = arith.addf %1216, %1200 : vector<1x128xf32>
    %1218 = arith.addf %1217, %1202 : vector<1x128xf32>
    %1219 = arith.addf %1218, %1204 : vector<1x128xf32>
    %1220 = tpu.reciprocal %1219 {approx = true} : vector<1x128xf32> -> vector<1x128xf32>
    %1221 = arith.mulf %1174, %1220 : vector<1x128xf32>
    %1222 = vector.broadcast %1221 : vector<1x128xf32> to vector<16x128xf32>
    %1223 = arith.mulf %1222, %55 : vector<16x128xf32>
    %1224 = arith.mulf %1176, %1220 : vector<1x128xf32>
    %1225 = vector.broadcast %1224 : vector<1x128xf32> to vector<16x128xf32>
    %1226 = arith.mulf %1225, %110 : vector<16x128xf32>
    %1227 = arith.addf %1223, %1226 : vector<16x128xf32>
    %1228 = arith.mulf %1178, %1220 : vector<1x128xf32>
    %1229 = vector.broadcast %1228 : vector<1x128xf32> to vector<16x128xf32>
    %1230 = arith.mulf %1229, %165 : vector<16x128xf32>
    %1231 = arith.addf %1227, %1230 : vector<16x128xf32>
    %1232 = arith.mulf %1180, %1220 : vector<1x128xf32>
    %1233 = vector.broadcast %1232 : vector<1x128xf32> to vector<16x128xf32>
    %1234 = arith.mulf %1233, %220 : vector<16x128xf32>
    %1235 = arith.addf %1231, %1234 : vector<16x128xf32>
    %1236 = arith.mulf %1182, %1220 : vector<1x128xf32>
    %1237 = vector.broadcast %1236 : vector<1x128xf32> to vector<16x128xf32>
    %1238 = arith.mulf %1237, %275 : vector<16x128xf32>
    %1239 = arith.addf %1235, %1238 : vector<16x128xf32>
    %1240 = arith.mulf %1184, %1220 : vector<1x128xf32>
    %1241 = vector.broadcast %1240 : vector<1x128xf32> to vector<16x128xf32>
    %1242 = arith.mulf %1241, %330 : vector<16x128xf32>
    %1243 = arith.addf %1239, %1242 : vector<16x128xf32>
    %1244 = arith.mulf %1186, %1220 : vector<1x128xf32>
    %1245 = vector.broadcast %1244 : vector<1x128xf32> to vector<16x128xf32>
    %1246 = arith.mulf %1245, %385 : vector<16x128xf32>
    %1247 = arith.addf %1243, %1246 : vector<16x128xf32>
    %1248 = arith.mulf %1188, %1220 : vector<1x128xf32>
    %1249 = vector.broadcast %1248 : vector<1x128xf32> to vector<16x128xf32>
    %1250 = arith.mulf %1249, %440 : vector<16x128xf32>
    %1251 = arith.addf %1247, %1250 : vector<16x128xf32>
    %1252 = arith.mulf %1190, %1220 : vector<1x128xf32>
    %1253 = vector.broadcast %1252 : vector<1x128xf32> to vector<16x128xf32>
    %1254 = arith.mulf %1253, %495 : vector<16x128xf32>
    %1255 = arith.addf %1251, %1254 : vector<16x128xf32>
    %1256 = arith.mulf %1192, %1220 : vector<1x128xf32>
    %1257 = vector.broadcast %1256 : vector<1x128xf32> to vector<16x128xf32>
    %1258 = arith.mulf %1257, %550 : vector<16x128xf32>
    %1259 = arith.addf %1255, %1258 : vector<16x128xf32>
    %1260 = arith.mulf %1194, %1220 : vector<1x128xf32>
    %1261 = vector.broadcast %1260 : vector<1x128xf32> to vector<16x128xf32>
    %1262 = arith.mulf %1261, %605 : vector<16x128xf32>
    %1263 = arith.addf %1259, %1262 : vector<16x128xf32>
    %1264 = arith.mulf %1196, %1220 : vector<1x128xf32>
    %1265 = vector.broadcast %1264 : vector<1x128xf32> to vector<16x128xf32>
    %1266 = arith.mulf %1265, %660 : vector<16x128xf32>
    %1267 = arith.addf %1263, %1266 : vector<16x128xf32>
    %1268 = arith.mulf %1198, %1220 : vector<1x128xf32>
    %1269 = vector.broadcast %1268 : vector<1x128xf32> to vector<16x128xf32>
    %1270 = arith.mulf %1269, %715 : vector<16x128xf32>
    %1271 = arith.addf %1267, %1270 : vector<16x128xf32>
    %1272 = arith.mulf %1200, %1220 : vector<1x128xf32>
    %1273 = vector.broadcast %1272 : vector<1x128xf32> to vector<16x128xf32>
    %1274 = arith.mulf %1273, %770 : vector<16x128xf32>
    %1275 = arith.addf %1271, %1274 : vector<16x128xf32>
    %1276 = arith.mulf %1202, %1220 : vector<1x128xf32>
    %1277 = vector.broadcast %1276 : vector<1x128xf32> to vector<16x128xf32>
    %1278 = arith.mulf %1277, %825 : vector<16x128xf32>
    %1279 = arith.addf %1275, %1278 : vector<16x128xf32>
    %1280 = arith.mulf %1204, %1220 : vector<1x128xf32>
    %1281 = vector.broadcast %1280 : vector<1x128xf32> to vector<16x128xf32>
    %1282 = arith.mulf %1281, %880 : vector<16x128xf32>
    %1283 = arith.addf %1279, %1282 : vector<16x128xf32>
    %1284 = arith.mulf %1283, %1283 : vector<16x128xf32>
    %cst_534 = arith.constant dense<0.000000e+00> : vector<128xf32>
    %1285 = vector.multi_reduction <add>, %1284, %cst_534 [0] : vector<16x128xf32> to vector<128xf32>
    %1286 = vector.shape_cast %1285 : vector<128xf32> to vector<1x128xf32>
    %1287 = math.sqrt %1286 : vector<1x128xf32>
    %1288 = vector.broadcast %1287 : vector<1x128xf32> to vector<16x128xf32>
    %1289 = arith.mulf %1283, %1288 : vector<16x128xf32>
    %cst_535 = arith.constant 1.000000e+00 : f32
    %1290 = vector.broadcast %cst_535 : f32 to vector<1x128xf32>
    %1291 = arith.addf %1290, %1286 : vector<1x128xf32>
    %1292 = tpu.reciprocal %1291 {approx = true} : vector<1x128xf32> -> vector<1x128xf32>
    %1293 = vector.broadcast %1292 : vector<1x128xf32> to vector<16x128xf32>
    %1294 = arith.mulf %1289, %1293 : vector<16x128xf32>
    %c0_536 = arith.constant 0 : index
    %c0_537 = arith.constant 0 : index
    %1295 = vector.load %arg3[%c0_536, %c0_537] : memref<16x128xf32, #tpu.memory_space<vmem>>, vector<16x128xf32>
    tpu.vector_store %arg3[%c0_536, %c0_537], %1294 {strides = array<i32>} : memref<16x128xf32, #tpu.memory_space<vmem>>, vector<16x128xf32>,
    return
  }
  func.func @transform_0(%arg0: i32) -> (i32, i32, i32, i32) {
    %c0_i32 = arith.constant 0 : i32
    %c0_i32_0 = arith.constant 0 : i32
    %c0_i32_1 = arith.constant 0 : i32
    %c0_i32_2 = arith.constant 0 : i32
    return %c0_i32, %c0_i32_0, %c0_i32_1, %arg0 : i32, i32, i32, i32
  }
  func.func @transform_1(%arg0: i32) -> (i32, i32) {
    %c0_i32 = arith.constant 0 : i32
    %c0_i32_0 = arith.constant 0 : i32
    return %c0_i32, %arg0 : i32, i32
  }
  func.func @transform_2(%arg0: i32) -> (i32, i32) {
    %c0_i32 = arith.constant 0 : i32
    %c0_i32_0 = arith.constant 0 : i32
    return %c0_i32, %arg0 : i32, i32
  }
}

</mosaic_0001>

<llo_original>
// kernel: tpu_custom_call.1
$region0: #{tpu_custom_call.1}
  #allocation0 [shape = 'u32[]', space=smem, size = 0x4, offset = 0x4, fixed_abs, tag = 'smem constant byte address 0x4 - core index']
  #allocation1 [shape = 'u32[144,128]{1,0:T(1,128)}', space=vmem, size = 0x12000, scoped, tag = 'internal scratch']
  %s0 = inlined_call_operand.hbm [shape: bf16[8,16,16,256], index: 0, kind: input, shape index: {}]
  %s1 = inlined_call_operand.hbm [shape: f32[8,256], index: 1, kind: input, shape index: {}]
  %s2 = inlined_call_operand.hbm [shape: f32[16,256], index: 2, kind: output, shape index: {}]
  %s3 = sld [smem:[#allocation0]]
  $region49: #{tpu_custom_call.1} parent=0
    _
  %s5 = ssub.s32 1, %s3
  %s6 = scalar_select 0, %s5, %s3
  $region1: #{tpu_custom_call.1} parent=0
    #allocation2 [shape = 'u8[1048576]{0}', space=vmem, size = 0x100000, scoped, tag = 'input window, operand 0']
    #allocation3 [shape = 's32[2]{0}', space=sflag, size = 0x8, scoped, tag = 'scoped memory for tpu_custom_call.1']
    #allocation4 [shape = 's32[2]{0}', space=sflag, size = 0x8, scoped, tag = 'scoped memory for tpu_custom_call.1']
    #allocation5 [shape = 'u8[8192]{0}', space=vmem, size = 0x2000, scoped, tag = 'input window, operand 1']
    #allocation6 [shape = 's32[2]{0}', space=sflag, size = 0x8, scoped, tag = 'scoped memory for tpu_custom_call.1']
    #allocation7 [shape = 'u8[16384]{0}', space=vmem, size = 0x4000, scoped, tag = 'output window, operand 0']
    %7 = vsyncpa [#allocation3], 0
    %s8 = scalar_lea.sflag [#allocation3], 1
    %9 = vsyncpa %s8, 0
    %10 = vsyncpa [#allocation6], 0
    %s11 = scalar_lea.sflag [#allocation6], 1
    %12 = vsyncpa %s11, 0
    %13 = vsyncpa [#allocation4], 0
    %s14 = scalar_lea.sflag [#allocation4], 1
    %15 = vsyncpa %s14, 0
    loop: start=0, step=1, limit=4
    $region2: #{tpu_custom_call.1} parent=1 // loop_pre_header
      _
    $region3: #{tpu_custom_call.1} parent=1 // loop_header
      %s17 = sphi 0, %s21
      %p18 = scmp.ge.s32.totalorder %s17, 4
      %s27 = sphi 0, %s29
      %s30 = sphi 0, %s27
      %s31 = sphi 0, %s30
      %s47 = sphi 0, %s31
      %s53 = sphi 0, %s55
      %s56 = sphi 0, %s53
      %s57 = sphi 0, %s56
      %s73 = sphi 0, %s57
      %s79 = sphi 0, %s81
      %s82 = sphi 0, %s79
      %s83 = sphi 0, %s82
      %s99 = sphi 0, %s83
    $region4: #{tpu_custom_call.1} parent=1 // loop_header_branch
      %20 = sbr.rel (%p18) target = $region8
    $region5: #{tpu_custom_call.1} parent=1 // loop_body
      %s22 = ssub.s32 %s17, 1
      %s23 = ssub.s32 %s17, 2
      %s24 = sadd.s32 %s17, 1
      %s25 = ssub.s32 %s17, %s24
      %p26 = scmp.eq.s32.totalorder %s25, 0
      %s28 = sadd.s32 %s27, 1
      %s29 = scalar_select %p26, %s27, %s28
      %p32 = pneg %p26
      %p33 = scmp.eq.s32.totalorder %s17, 1
      %p34 = por %p32, %p33
      %p35 = scmp.ne.s32.totalorder %s27, %s30
      %p36 = scmp.eq.s32.totalorder %s17, 0
      %p37 = por %p35, %p36
      %p38 = scmp.ne.s32.totalorder %s27, %s30
      %p39 = scmp.eq.s32.totalorder %s22, 1
      %p40 = por %p38, %p39
      %p41 = scmp.ne.s32.totalorder %s30, %s31
      %p42 = scmp.eq.s32.totalorder %s22, 0
      %p43 = por %p41, %p42
      %p44 = scmp.ne.s32.totalorder %s30, %s31
      %p45 = scmp.eq.s32.totalorder %s23, 1
      %p46 = por %p44, %p45
      %p48 = scmp.ne.s32.totalorder %s31, %s47
      %p49 = scmp.eq.s32.totalorder %s23, 0
      %p50 = por %p48, %p49
      %s51 = ssub.s32 %s17, %s24
      %p52 = scmp.eq.s32.totalorder %s51, 0
      %s54 = sadd.s32 %s53, 1
      %s55 = scalar_select %p52, %s53, %s54
      %p58 = pneg %p52
      %p59 = scmp.eq.s32.totalorder %s17, 1
      %p60 = por %p58, %p59
      %p61 = scmp.ne.s32.totalorder %s53, %s56
      %p62 = scmp.eq.s32.totalorder %s17, 0
      %p63 = por %p61, %p62
      %p64 = scmp.ne.s32.totalorder %s53, %s56
      %p65 = scmp.eq.s32.totalorder %s22, 1
      %p66 = por %p64, %p65
      %p67 = scmp.ne.s32.totalorder %s56, %s57
      %p68 = scmp.eq.s32.totalorder %s22, 0
      %p69 = por %p67, %p68
      %p70 = scmp.ne.s32.totalorder %s56, %s57
      %p71 = scmp.eq.s32.totalorder %s23, 1
      %p72 = por %p70, %p71
      %p74 = scmp.ne.s32.totalorder %s57, %s73
      %p75 = scmp.eq.s32.totalorder %s23, 0
      %p76 = por %p74, %p75
      %s77 = ssub.s32 %s17, %s24
      %p78 = scmp.eq.s32.totalorder %s77, 0
      %s80 = sadd.s32 %s79, 1
      %s81 = scalar_select %p78, %s79, %s80
      %p84 = pneg %p78
      %p85 = scmp.eq.s32.totalorder %s17, 1
      %p86 = por %p84, %p85
      %p87 = scmp.ne.s32.totalorder %s79, %s82
      %p88 = scmp.eq.s32.totalorder %s17, 0
      %p89 = por %p87, %p88
      %p90 = scmp.ne.s32.totalorder %s79, %s82
      %p91 = scmp.eq.s32.totalorder %s22, 1
      %p92 = por %p90, %p91
      %p93 = scmp.ne.s32.totalorder %s82, %s83
      %p94 = scmp.eq.s32.totalorder %s22, 0
      %p95 = por %p93, %p94
      %p96 = scmp.ne.s32.totalorder %s82, %s83
      %p97 = scmp.eq.s32.totalorder %s23, 1
      %p98 = por %p96, %p97
      %p100 = scmp.ne.s32.totalorder %s83, %s99
      %p101 = scmp.eq.s32.totalorder %s23, 0
      %p102 = por %p100, %p101
      %p103 = scmp.le.s32.totalorder 1, %s17
      %p104 = scmp.lt.s32.totalorder %s17, 3
      %p105 = pnand %p103, %p104
      %p106 = pneg %p105
      // Predicated region
      $region9: #{tpu_custom_call.1} parent=5 // pred_check
        _
      $region10: #{tpu_custom_call.1} parent=5 // pred_check_branch
        %108 = sbr.rel (%p105) target = $region12
      $region11: #{tpu_custom_call.1} parent=5 // pred_region
        %s109 = ssub.s32 %s17, 1
      $region12: #{tpu_custom_call.1} parent=5 // pred_fallthru
        _
      %p110 = scmp.lt.s32.totalorder %s17, 2
      // Predicated region
      $region13: #{tpu_custom_call.1} parent=5 // pred_check
        %p111 = pneg %p110
      $region14: #{tpu_custom_call.1} parent=5 // pred_check_branch
        %113 = sbr.rel (%p111) target = $region16
      $region15: #{tpu_custom_call.1} parent=5 // pred_region
        // Predicated region
        $region17: #{tpu_custom_call.1} parent=15 // pred_check
          %p114 = pneg %p37
        $region18: #{tpu_custom_call.1} parent=15 // pred_check_branch
          %116 = sbr.rel (%p114) target = $region20
        $region19: #{tpu_custom_call.1} parent=15 // pred_region
          %s117 = sand.u32 %s27, 1
          %s118 = scalar_lea.sflag [#allocation3], %s117
          %s119 = sand.u32 %s27, 1
          %s120 = smul.addr %s119, 1024
          %s121 = scalar_lea.vmem [#allocation2], %s120
          %s123 = ssub.s32 16384, 16384
          %124 = vsyncadd %s118, %s123
          %s125 = smul.addr %s17, 64
          %s126 = scalar_lea.hbm %s0, %s125
          %s127 = sshll.u32 %s121, 4
          %s128 = int_to_ptr.vmem [resolvable:$true] %s127
          %133 = dma.hbm_to_vmem [thread:$0]  %s126, 16384, %s128, %s118, 128, 64, 4
        $region20: #{tpu_custom_call.1} parent=15 // pred_fallthru
          _
        // Predicated region
        $region21: #{tpu_custom_call.1} parent=15 // pred_check
          %p134 = pneg %p63
        $region22: #{tpu_custom_call.1} parent=15 // pred_check_branch
          %136 = sbr.rel (%p134) target = $region24
        $region23: #{tpu_custom_call.1} parent=15 // pred_region
          %s137 = sand.u32 %s53, 1
          %s138 = scalar_lea.sflag [#allocation6], %s137
          %s139 = sand.u32 %s53, 1
          %s140 = smul.addr %s139, 8
          %s141 = scalar_lea.vmem [#allocation5], %s140
          %s143 = ssub.s32 128, 128
          %144 = vsyncadd %s138, %s143
          %s145 = smul.addr %s17, 128
          %s146 = scalar_lea.hbm %s1, %s145
          %s148 = sshll.u32 %s141, 4
          %s149 = int_to_ptr.vmem [resolvable:$true] %s148
          %151 = dma.hbm_to_vmem [thread:$0]  %s146, 128, %s149, %s138
        $region24: #{tpu_custom_call.1} parent=15 // pred_fallthru
          _
      $region16: #{tpu_custom_call.1} parent=5 // pred_fallthru
        _
      %p152 = scmp.le.s32.totalorder 1, %s17
      %p153 = scmp.lt.s32.totalorder %s17, 3
      %p154 = pnand %p152, %p153
      %p155 = pneg %p154
      // Predicated region
      $region25: #{tpu_custom_call.1} parent=5 // pred_check
        _
      $region26: #{tpu_custom_call.1} parent=5 // pred_check_branch
        %157 = sbr.rel (%p154) target = $region28
      $region27: #{tpu_custom_call.1} parent=5 // pred_region
        %s158 = ssub.s32 %s17, 1
        %s159 = sand.u32 %s30, 1
        %s160 = scalar_lea.sflag [#allocation3], %s159
        %s161 = sand.u32 %s30, 1
        %s162 = smul.addr %s161, 1024
        %s163 = scalar_lea.vmem [#allocation2], %s162
        // Predicated region
        $region29: #{tpu_custom_call.1} parent=27 // pred_check
          %p164 = pneg %p43
        $region30: #{tpu_custom_call.1} parent=27 // pred_check_branch
          %166 = sbr.rel (%p164) target = $region32
        $region31: #{tpu_custom_call.1} parent=27 // pred_region
          %167 = dma.done %s160, 16384
        $region32: #{tpu_custom_call.1} parent=27 // pred_fallthru
          _
        %s168 = sand.u32 %s56, 1
        %s169 = scalar_lea.sflag [#allocation6], %s168
        %s170 = sand.u32 %s56, 1
        %s171 = smul.addr %s170, 8
        %s172 = scalar_lea.vmem [#allocation5], %s171
        // Predicated region
        $region33: #{tpu_custom_call.1} parent=27 // pred_check
          %p173 = pneg %p69
        $region34: #{tpu_custom_call.1} parent=27 // pred_check_branch
          %175 = sbr.rel (%p173) target = $region36
        $region35: #{tpu_custom_call.1} parent=27 // pred_region
          %176 = dma.done %s169, 128
        $region36: #{tpu_custom_call.1} parent=27 // pred_fallthru
          _
        %s177 = sand.u32 %s30, 1
        %s178 = scalar_lea.sflag [#allocation3], %s177
        %s179 = sand.u32 %s30, 1
        %s180 = smul.addr %s179, 1024
        %s181 = scalar_lea.vmem [#allocation2], %s180
        %p182 = pneg %p43
        %p183 = pneg %p40
        %s184 = sand.u32 %s56, 1
        %s185 = scalar_lea.sflag [#allocation6], %s184
        %s186 = sand.u32 %s56, 1
        %s187 = smul.addr %s186, 8
        %s188 = scalar_lea.vmem [#allocation5], %s187
        %p189 = pneg %p69
        %p190 = pneg %p66
        %p191 = pneg %p95
        %p192 = pneg %p92
        %s193 = sand.u32 %s82, 1
        %s194 = scalar_lea.sflag [#allocation4], %s193
        %s195 = sand.u32 %s82, 1
        %s196 = smul.addr %s195, 16
        %s197 = scalar_lea.vmem [#allocation7], %s196
        %v198 = vld [vmem:[%s172] sm:$0xff]
        %v199 = vld [vmem:[%s163] sm:$0xf]
        %v200 = vld [vmem:[%s163 + $0x4] sm:$0xf]
        %v201 = vunpack.c.l.bf16 %v199
        %v202 = vunpack.c.l.bf16 %v200
        %v203 = vlaneseq
        %v204 = vshrl.u32 %v203, 7
        %v205 = vsub.s32 0, %v204
        %v206 = vrot.slane %v198, %v205
        %v207 = vmul.f32 %v201, %v206
        %v208 = vmul.f32 %v202, %v206
        %s209 = scalar_lea.vmem %s163, 128 [#allocation2]
        %v210 = vld [vmem:[%s209] sm:$0xf]
        %v211 = vld [vmem:[%s209 + $0x4] sm:$0xf]
        %v212 = vunpack.c.l.bf16 %v210
        %v213 = vunpack.c.l.bf16 %v211
        %v214 = vlaneseq
        %v215 = vshrl.u32 %v214, 7
        %v216 = vsub.s32 1, %v215
        %v217 = vrot.slane %v198, %v216
        %v218 = vmul.f32 %v212, %v217
        %v219 = vmul.f32 %v213, %v217
        %v220 = vadd.f32 %v207, %v218
        %v221 = vadd.f32 %v208, %v219
        %s222 = scalar_lea.vmem %s163, 256 [#allocation2]
        %v223 = vld [vmem:[%s222] sm:$0xf]
        %v224 = vld [vmem:[%s222 + $0x4] sm:$0xf]
        %v225 = vunpack.c.l.bf16 %v223
        %v226 = vunpack.c.l.bf16 %v224
        %v227 = vlaneseq
        %v228 = vshrl.u32 %v227, 7
        %v229 = vsub.s32 2, %v228
        %v230 = vrot.slane %v198, %v229
        %v231 = vmul.f32 %v225, %v230
        %v232 = vmul.f32 %v226, %v230
        %v233 = vadd.f32 %v220, %v231
        %v234 = vadd.f32 %v221, %v232
        %s235 = scalar_lea.vmem %s163, 384 [#allocation2]
        %v236 = vld [vmem:[%s235] sm:$0xf]
        %v237 = vld [vmem:[%s235 + $0x4] sm:$0xf]
        %v238 = vunpack.c.l.bf16 %v236
        %v239 = vunpack.c.l.bf16 %v237
        %v240 = vlaneseq
        %v241 = vshrl.u32 %v240, 7
        %v242 = vsub.s32 3, %v241
        %v243 = vrot.slane %v198, %v242
        %v244 = vmul.f32 %v238, %v243
        %v245 = vmul.f32 %v239, %v243
        %v246 = vadd.f32 %v233, %v244
        %v247 = vadd.f32 %v234, %v245
        %s248 = scalar_lea.vmem %s163, 512 [#allocation2]
        %v249 = vld [vmem:[%s248] sm:$0xf]
        %v250 = vld [vmem:[%s248 + $0x4] sm:$0xf]
        %v251 = vunpack.c.l.bf16 %v249
        %v252 = vunpack.c.l.bf16 %v250
        %v253 = vlaneseq
        %v254 = vshrl.u32 %v253, 7
        %v255 = vsub.s32 4, %v254
        %v256 = vrot.slane %v198, %v255
        %v257 = vmul.f32 %v251, %v256
        %v258 = vmul.f32 %v252, %v256
        %v259 = vadd.f32 %v246, %v257
        %v260 = vadd.f32 %v247, %v258
        %s261 = scalar_lea.vmem %s163, 640 [#allocation2]
        %v262 = vld [vmem:[%s261] sm:$0xf]
        %v263 = vld [vmem:[%s261 + $0x4] sm:$0xf]
        %v264 = vunpack.c.l.bf16 %v262
        %v265 = vunpack.c.l.bf16 %v263
        %v266 = vlaneseq
        %v267 = vshrl.u32 %v266, 7
        %v268 = vsub.s32 5, %v267
        %v269 = vrot.slane %v198, %v268
        %v270 = vmul.f32 %v264, %v269
        %v271 = vmul.f32 %v265, %v269
        %v272 = vadd.f32 %v259, %v270
        %v273 = vadd.f32 %v260, %v271
        %s274 = scalar_lea.vmem %s163, 768 [#allocation2]
        %v275 = vld [vmem:[%s274] sm:$0xf]
        %v276 = vld [vmem:[%s274 + $0x4] sm:$0xf]
        %v277 = vunpack.c.l.bf16 %v275
        %v278 = vunpack.c.l.bf16 %v276
        %v279 = vlaneseq
        %v280 = vshrl.u32 %v279, 7
        %v281 = vsub.s32 6, %v280
        %v282 = vrot.slane %v198, %v281
        %v283 = vmul.f32 %v277, %v282
        %v284 = vmul.f32 %v278, %v282
        %v285 = vadd.f32 %v272, %v283
        %v286 = vadd.f32 %v273, %v284
        %s287 = scalar_lea.vmem %s163, 896 [#allocation2]
        %v288 = vld [vmem:[%s287] sm:$0xf]
        %v289 = vld [vmem:[%s287 + $0x4] sm:$0xf]
        %v290 = vunpack.c.l.bf16 %v288
        %v291 = vunpack.c.l.bf16 %v289
        %v292 = vlaneseq
        %v293 = vshrl.u32 %v292, 7
        %v294 = vsub.s32 7, %v293
        %v295 = vrot.slane %v198, %v294
        %v296 = vmul.f32 %v290, %v295
        %v297 = vmul.f32 %v291, %v295
        %v298 = vadd.f32 %v285, %v296
        %v299 = vadd.f32 %v286, %v297
        %s300 = scalar_lea.vmem %s163, 8 [#allocation2]
        %v301 = vld [vmem:[%s300] sm:$0xf]
        %v302 = vld [vmem:[%s300 + $0x4] sm:$0xf]
        %v303 = vunpack.c.l.bf16 %v301
        %v304 = vunpack.c.l.bf16 %v302
        %v305 = vmul.f32 %v303, %v206
        %v306 = vmul.f32 %v304, %v206
        %s307 = scalar_lea.vmem %s163, 136 [#allocation2]
        %v308 = vld [vmem:[%s307] sm:$0xf]
        %v309 = vld [vmem:[%s307 + $0x4] sm:$0xf]
        %v310 = vunpack.c.l.bf16 %v308
        %v311 = vunpack.c.l.bf16 %v309
        %v312 = vmul.f32 %v310, %v217
        %v313 = vmul.f32 %v311, %v217
        %v314 = vadd.f32 %v305, %v312
        %v315 = vadd.f32 %v306, %v313
        %s316 = scalar_lea.vmem %s163, 264 [#allocation2]
        %v317 = vld [vmem:[%s316] sm:$0xf]
        %v318 = vld [vmem:[%s316 + $0x4] sm:$0xf]
        %v319 = vunpack.c.l.bf16 %v317
        %v320 = vunpack.c.l.bf16 %v318
        %v321 = vmul.f32 %v319, %v230
        %v322 = vmul.f32 %v320, %v230
        %v323 = vadd.f32 %v314, %v321
        %v324 = vadd.f32 %v315, %v322
        %s325 = scalar_lea.vmem %s163, 392 [#allocation2]
        %v326 = vld [vmem:[%s325] sm:$0xf]
        %v327 = vld [vmem:[%s325 + $0x4] sm:$0xf]
        %v328 = vunpack.c.l.bf16 %v326
        %v329 = vunpack.c.l.bf16 %v327
        %v330 = vmul.f32 %v328, %v243
        %v331 = vmul.f32 %v329, %v243
        %v332 = vadd.f32 %v323, %v330
        %v333 = vadd.f32 %v324, %v331
        %s334 = scalar_lea.vmem %s163, 520 [#allocation2]
        %v335 = vld [vmem:[%s334] sm:$0xf]
        %v336 = vld [vmem:[%s334 + $0x4] sm:$0xf]
        %v337 = vunpack.c.l.bf16 %v335
        %v338 = vunpack.c.l.bf16 %v336
        %v339 = vmul.f32 %v337, %v256
        %v340 = vmul.f32 %v338, %v256
        %v341 = vadd.f32 %v332, %v339
        %v342 = vadd.f32 %v333, %v340
        %s343 = scalar_lea.vmem %s163, 648 [#allocation2]
        %v344 = vld [vmem:[%s343] sm:$0xf]
        %v345 = vld [vmem:[%s343 + $0x4] sm:$0xf]
        %v346 = vunpack.c.l.bf16 %v344
        %v347 = vunpack.c.l.bf16 %v345
        %v348 = vmul.f32 %v346, %v269
        %v349 = vmul.f32 %v347, %v269
        %v350 = vadd.f32 %v341, %v348
        %v351 = vadd.f32 %v342, %v349
        %s352 = scalar_lea.vmem %s163, 776 [#allocation2]
        %v353 = vld [vmem:[%s352] sm:$0xf]
        %v354 = vld [vmem:[%s352 + $0x4] sm:$0xf]
        %v355 = vunpack.c.l.bf16 %v353
        %v356 = vunpack.c.l.bf16 %v354
        %v357 = vmul.f32 %v355, %v282
        %v358 = vmul.f32 %v356, %v282
        %v359 = vadd.f32 %v350, %v357
        %v360 = vadd.f32 %v351, %v358
        %s361 = scalar_lea.vmem %s163, 904 [#allocation2]
        %v362 = vld [vmem:[%s361] sm:$0xf]
        %v363 = vld [vmem:[%s361 + $0x4] sm:$0xf]
        %v364 = vunpack.c.l.bf16 %v362
        %v365 = vunpack.c.l.bf16 %v363
        %v366 = vmul.f32 %v364, %v295
        %v367 = vmul.f32 %v365, %v295
        %v368 = vadd.f32 %v359, %v366
        %v369 = vadd.f32 %v360, %v367
        %s370 = scalar_lea.vmem %s163, 16 [#allocation2]
        %v371 = vld [vmem:[%s370] sm:$0xf]
        %v372 = vld [vmem:[%s370 + $0x4] sm:$0xf]
        %v373 = vunpack.c.l.bf16 %v371
        %v374 = vunpack.c.l.bf16 %v372
        %v375 = vmul.f32 %v373, %v206
        %v376 = vmul.f32 %v374, %v206
        %s377 = scalar_lea.vmem %s163, 144 [#allocation2]
        %v378 = vld [vmem:[%s377] sm:$0xf]
        %v379 = vld [vmem:[%s377 + $0x4] sm:$0xf]
        %v380 = vunpack.c.l.bf16 %v378
        %v381 = vunpack.c.l.bf16 %v379
        %v382 = vmul.f32 %v380, %v217
        %v383 = vmul.f32 %v381, %v217
        %v384 = vadd.f32 %v375, %v382
        %v385 = vadd.f32 %v376, %v383
        %s386 = scalar_lea.vmem %s163, 272 [#allocation2]
        %v387 = vld [vmem:[%s386] sm:$0xf]
        %v388 = vld [vmem:[%s386 + $0x4] sm:$0xf]
        %v389 = vunpack.c.l.bf16 %v387
        %v390 = vunpack.c.l.bf16 %v388
        %v391 = vmul.f32 %v389, %v230
        %v392 = vmul.f32 %v390, %v230
        %v393 = vadd.f32 %v384, %v391
        %v394 = vadd.f32 %v385, %v392
        %s395 = scalar_lea.vmem %s163, 400 [#allocation2]
        %v396 = vld [vmem:[%s395] sm:$0xf]
        %v397 = vld [vmem:[%s395 + $0x4] sm:$0xf]
        %v398 = vunpack.c.l.bf16 %v396
        %v399 = vunpack.c.l.bf16 %v397
        %v400 = vmul.f32 %v398, %v243
        %v401 = vmul.f32 %v399, %v243
        %v402 = vadd.f32 %v393, %v400
        %v403 = vadd.f32 %v394, %v401
        %s404 = scalar_lea.vmem %s163, 528 [#allocation2]
        %v405 = vld [vmem:[%s404] sm:$0xf]
        %v406 = vld [vmem:[%s404 + $0x4] sm:$0xf]
        %v407 = vunpack.c.l.bf16 %v405
        %v408 = vunpack.c.l.bf16 %v406
        %v409 = vmul.f32 %v407, %v256
        %v410 = vmul.f32 %v408, %v256
        %v411 = vadd.f32 %v402, %v409
        %v412 = vadd.f32 %v403, %v410
        %s413 = scalar_lea.vmem %s163, 656 [#allocation2]
        %v414 = vld [vmem:[%s413] sm:$0xf]
        %v415 = vld [vmem:[%s413 + $0x4] sm:$0xf]
        %v416 = vunpack.c.l.bf16 %v414
        %v417 = vunpack.c.l.bf16 %v415
        %v418 = vmul.f32 %v416, %v269
        %v419 = vmul.f32 %v417, %v269
        %v420 = vadd.f32 %v411, %v418
        %v421 = vadd.f32 %v412, %v419
        %s422 = scalar_lea.vmem %s163, 784 [#allocation2]
        %v423 = vld [vmem:[%s422] sm:$0xf]
        %v424 = vld [vmem:[%s422 + $0x4] sm:$0xf]
        %v425 = vunpack.c.l.bf16 %v423
        %v426 = vunpack.c.l.bf16 %v424
        %v427 = vmul.f32 %v425, %v282
        %v428 = vmul.f32 %v426, %v282
        %v429 = vadd.f32 %v420, %v427
        %v430 = vadd.f32 %v421, %v428
        %s431 = scalar_lea.vmem %s163, 912 [#allocation2]
        %v432 = vld [vmem:[%s431] sm:$0xf]
        %v433 = vld [vmem:[%s431 + $0x4] sm:$0xf]
        %v434 = vunpack.c.l.bf16 %v432
        %v435 = vunpack.c.l.bf16 %v433
        %v436 = vmul.f32 %v434, %v295
        %v437 = vmul.f32 %v435, %v295
        %v438 = vadd.f32 %v429, %v436
        %v439 = vadd.f32 %v430, %v437
        %s440 = scalar_lea.vmem %s163, 24 [#allocation2]
        %v441 = vld [vmem:[%s440] sm:$0xf]
        %v442 = vld [vmem:[%s440 + $0x4] sm:$0xf]
        %v443 = vunpack.c.l.bf16 %v441
        %v444 = vunpack.c.l.bf16 %v442
        %v445 = vmul.f32 %v443, %v206
        %v446 = vmul.f32 %v444, %v206
        %s447 = scalar_lea.vmem %s163, 152 [#allocation2]
        %v448 = vld [vmem:[%s447] sm:$0xf]
        %v449 = vld [vmem:[%s447 + $0x4] sm:$0xf]
        %v450 = vunpack.c.l.bf16 %v448
        %v451 = vunpack.c.l.bf16 %v449
        %v452 = vmul.f32 %v450, %v217
        %v453 = vmul.f32 %v451, %v217
        %v454 = vadd.f32 %v445, %v452
        %v455 = vadd.f32 %v446, %v453
        %s456 = scalar_lea.vmem %s163, 280 [#allocation2]
        %v457 = vld [vmem:[%s456] sm:$0xf]
        %v458 = vld [vmem:[%s456 + $0x4] sm:$0xf]
        %v459 = vunpack.c.l.bf16 %v457
        %v460 = vunpack.c.l.bf16 %v458
        %v461 = vmul.f32 %v459, %v230
        %v462 = vmul.f32 %v460, %v230
        %v463 = vadd.f32 %v454, %v461
        %v464 = vadd.f32 %v455, %v462
        %s465 = scalar_lea.vmem %s163, 408 [#allocation2]
        %v466 = vld [vmem:[%s465] sm:$0xf]
        %v467 = vld [vmem:[%s465 + $0x4] sm:$0xf]
        %v468 = vunpack.c.l.bf16 %v466
        %v469 = vunpack.c.l.bf16 %v467
        %v470 = vmul.f32 %v468, %v243
        %v471 = vmul.f32 %v469, %v243
        %v472 = vadd.f32 %v463, %v470
        %v473 = vadd.f32 %v464, %v471
        %s474 = scalar_lea.vmem %s163, 536 [#allocation2]
        %v475 = vld [vmem:[%s474] sm:$0xf]
        %v476 = vld [vmem:[%s474 + $0x4] sm:$0xf]
        %v477 = vunpack.c.l.bf16 %v475
        %v478 = vunpack.c.l.bf16 %v476
        %v479 = vmul.f32 %v477, %v256
        %v480 = vmul.f32 %v478, %v256
        %v481 = vadd.f32 %v472, %v479
        %v482 = vadd.f32 %v473, %v480
        %s483 = scalar_lea.vmem %s163, 664 [#allocation2]
        %v484 = vld [vmem:[%s483] sm:$0xf]
        %v485 = vld [vmem:[%s483 + $0x4] sm:$0xf]
        %v486 = vunpack.c.l.bf16 %v484
        %v487 = vunpack.c.l.bf16 %v485
        %v488 = vmul.f32 %v486, %v269
        %v489 = vmul.f32 %v487, %v269
        %v490 = vadd.f32 %v481, %v488
        %v491 = vadd.f32 %v482, %v489
        %s492 = scalar_lea.vmem %s163, 792 [#allocation2]
        %v493 = vld [vmem:[%s492] sm:$0xf]
        %v494 = vld [vmem:[%s492 + $0x4] sm:$0xf]
        %v495 = vunpack.c.l.bf16 %v493
        %v496 = vunpack.c.l.bf16 %v494
        %v497 = vmul.f32 %v495, %v282
        %v498 = vmul.f32 %v496, %v282
        %v499 = vadd.f32 %v490, %v497
        %v500 = vadd.f32 %v491, %v498
        %s501 = scalar_lea.vmem %s163, 920 [#allocation2]
        %v502 = vld [vmem:[%s501] sm:$0xf]
        %v503 = vld [vmem:[%s501 + $0x4] sm:$0xf]
        %v504 = vunpack.c.l.bf16 %v502
        %v505 = vunpack.c.l.bf16 %v503
        %v506 = vmul.f32 %v504, %v295
        %v507 = vmul.f32 %v505, %v295
        %v508 = vadd.f32 %v499, %v506
        %v509 = vadd.f32 %v500, %v507
        %s510 = scalar_lea.vmem %s163, 32 [#allocation2]
        %v511 = vld [vmem:[%s510] sm:$0xf]
        %v512 = vld [vmem:[%s510 + $0x4] sm:$0xf]
        %v513 = vunpack.c.l.bf16 %v511
        %v514 = vunpack.c.l.bf16 %v512
        %v515 = vmul.f32 %v513, %v206
        %v516 = vmul.f32 %v514, %v206
        %s517 = scalar_lea.vmem %s163, 160 [#allocation2]
        %v518 = vld [vmem:[%s517] sm:$0xf]
        %v519 = vld [vmem:[%s517 + $0x4] sm:$0xf]
        %v520 = vunpack.c.l.bf16 %v518
        %v521 = vunpack.c.l.bf16 %v519
        %v522 = vmul.f32 %v520, %v217
        %v523 = vmul.f32 %v521, %v217
        %v524 = vadd.f32 %v515, %v522
        %v525 = vadd.f32 %v516, %v523
        %s526 = scalar_lea.vmem %s163, 288 [#allocation2]
        %v527 = vld [vmem:[%s526] sm:$0xf]
        %v528 = vld [vmem:[%s526 + $0x4] sm:$0xf]
        %v529 = vunpack.c.l.bf16 %v527
        %v530 = vunpack.c.l.bf16 %v528
        %v531 = vmul.f32 %v529, %v230
        %v532 = vmul.f32 %v530, %v230
        %v533 = vadd.f32 %v524, %v531
        %v534 = vadd.f32 %v525, %v532
        %s535 = scalar_lea.vmem %s163, 416 [#allocation2]
        %v536 = vld [vmem:[%s535] sm:$0xf]
        %v537 = vld [vmem:[%s535 + $0x4] sm:$0xf]
        %v538 = vunpack.c.l.bf16 %v536
        %v539 = vunpack.c.l.bf16 %v537
        %v540 = vmul.f32 %v538, %v243
        %v541 = vmul.f32 %v539, %v243
        %v542 = vadd.f32 %v533, %v540
        %v543 = vadd.f32 %v534, %v541
        %s544 = scalar_lea.vmem %s163, 544 [#allocation2]
        %v545 = vld [vmem:[%s544] sm:$0xf]
        %v546 = vld [vmem:[%s544 + $0x4] sm:$0xf]
        %v547 = vunpack.c.l.bf16 %v545
        %v548 = vunpack.c.l.bf16 %v546
        %v549 = vmul.f32 %v547, %v256
        %v550 = vmul.f32 %v548, %v256
        %v551 = vadd.f32 %v542, %v549
        %v552 = vadd.f32 %v543, %v550
        %s553 = scalar_lea.vmem %s163, 672 [#allocation2]
        %v554 = vld [vmem:[%s553] sm:$0xf]
        %v555 = vld [vmem:[%s553 + $0x4] sm:$0xf]
        %v556 = vunpack.c.l.bf16 %v554
        %v557 = vunpack.c.l.bf16 %v555
        %v558 = vmul.f32 %v556, %v269
        %v559 = vmul.f32 %v557, %v269
        %v560 = vadd.f32 %v551, %v558
        %v561 = vadd.f32 %v552, %v559
        %s562 = scalar_lea.vmem %s163, 800 [#allocation2]
        %v563 = vld [vmem:[%s562] sm:$0xf]
        %v564 = vld [vmem:[%s562 + $0x4] sm:$0xf]
        %v565 = vunpack.c.l.bf16 %v563
        %v566 = vunpack.c.l.bf16 %v564
        %v567 = vmul.f32 %v565, %v282
        %v568 = vmul.f32 %v566, %v282
        %v569 = vadd.f32 %v560, %v567
        %v570 = vadd.f32 %v561, %v568
        %s571 = scalar_lea.vmem %s163, 928 [#allocation2]
        %v572 = vld [vmem:[%s571] sm:$0xf]
        %v573 = vld [vmem:[%s571 + $0x4] sm:$0xf]
        %v574 = vunpack.c.l.bf16 %v572
        %v575 = vunpack.c.l.bf16 %v573
        %v576 = vmul.f32 %v574, %v295
        %v577 = vmul.f32 %v575, %v295
        %v578 = vadd.f32 %v569, %v576
        %v579 = vadd.f32 %v570, %v577
        %s580 = scalar_lea.vmem %s163, 40 [#allocation2]
        %v581 = vld [vmem:[%s580] sm:$0xf]
        %v582 = vld [vmem:[%s580 + $0x4] sm:$0xf]
        %v583 = vunpack.c.l.bf16 %v581
        %v584 = vunpack.c.l.bf16 %v582
        %v585 = vmul.f32 %v583, %v206
        %v586 = vmul.f32 %v584, %v206
        %s587 = scalar_lea.vmem %s163, 168 [#allocation2]
        %v588 = vld [vmem:[%s587] sm:$0xf]
        %v589 = vld [vmem:[%s587 + $0x4] sm:$0xf]
        %v590 = vunpack.c.l.bf16 %v588
        %v591 = vunpack.c.l.bf16 %v589
        %v592 = vmul.f32 %v590, %v217
        %v593 = vmul.f32 %v591, %v217
        %v594 = vadd.f32 %v585, %v592
        %v595 = vadd.f32 %v586, %v593
        %s596 = scalar_lea.vmem %s163, 296 [#allocation2]
        %v597 = vld [vmem:[%s596] sm:$0xf]
        %v598 = vld [vmem:[%s596 + $0x4] sm:$0xf]
        %v599 = vunpack.c.l.bf16 %v597
        %v600 = vunpack.c.l.bf16 %v598
        %v601 = vmul.f32 %v599, %v230
        %v602 = vmul.f32 %v600, %v230
        %v603 = vadd.f32 %v594, %v601
        %v604 = vadd.f32 %v595, %v602
        %s605 = scalar_lea.vmem %s163, 424 [#allocation2]
        %v606 = vld [vmem:[%s605] sm:$0xf]
        %v607 = vld [vmem:[%s605 + $0x4] sm:$0xf]
        %v608 = vunpack.c.l.bf16 %v606
        %v609 = vunpack.c.l.bf16 %v607
        %v610 = vmul.f32 %v608, %v243
        %v611 = vmul.f32 %v609, %v243
        %v612 = vadd.f32 %v603, %v610
        %v613 = vadd.f32 %v604, %v611
        %s614 = scalar_lea.vmem %s163, 552 [#allocation2]
        %v615 = vld [vmem:[%s614] sm:$0xf]
        %v616 = vld [vmem:[%s614 + $0x4] sm:$0xf]
        %v617 = vunpack.c.l.bf16 %v615
        %v618 = vunpack.c.l.bf16 %v616
        %v619 = vmul.f32 %v617, %v256
        %v620 = vmul.f32 %v618, %v256
        %v621 = vadd.f32 %v612, %v619
        %v622 = vadd.f32 %v613, %v620
        %s623 = scalar_lea.vmem %s163, 680 [#allocation2]
        %v624 = vld [vmem:[%s623] sm:$0xf]
        %v625 = vld [vmem:[%s623 + $0x4] sm:$0xf]
        %v626 = vunpack.c.l.bf16 %v624
        %v627 = vunpack.c.l.bf16 %v625
        %v628 = vmul.f32 %v626, %v269
        %v629 = vmul.f32 %v627, %v269
        %v630 = vadd.f32 %v621, %v628
        %v631 = vadd.f32 %v622, %v629
        %s632 = scalar_lea.vmem %s163, 808 [#allocation2]
        %v633 = vld [vmem:[%s632] sm:$0xf]
        %v634 = vld [vmem:[%s632 + $0x4] sm:$0xf]
        %v635 = vunpack.c.l.bf16 %v633
        %v636 = vunpack.c.l.bf16 %v634
        %v637 = vmul.f32 %v635, %v282
        %v638 = vmul.f32 %v636, %v282
        %v639 = vadd.f32 %v630, %v637
        %v640 = vadd.f32 %v631, %v638
        %s641 = scalar_lea.vmem %s163, 936 [#allocation2]
        %v642 = vld [vmem:[%s641] sm:$0xf]
        %v643 = vld [vmem:[%s641 + $0x4] sm:$0xf]
        %v644 = vunpack.c.l.bf16 %v642
        %v645 = vunpack.c.l.bf16 %v643
        %v646 = vmul.f32 %v644, %v295
        %v647 = vmul.f32 %v645, %v295
        %v648 = vadd.f32 %v639, %v646
        %v649 = vadd.f32 %v640, %v647
        %s650 = scalar_lea.vmem %s163, 48 [#allocation2]
        %v651 = vld [vmem:[%s650] sm:$0xf]
        %v652 = vld [vmem:[%s650 + $0x4] sm:$0xf]
        %v653 = vunpack.c.l.bf16 %v651
        %v654 = vunpack.c.l.bf16 %v652
        %v655 = vmul.f32 %v653, %v206
        %v656 = vmul.f32 %v654, %v206
        %s657 = scalar_lea.vmem %s163, 176 [#allocation2]
        %v658 = vld [vmem:[%s657] sm:$0xf]
        %v659 = vld [vmem:[%s657 + $0x4] sm:$0xf]
        %v660 = vunpack.c.l.bf16 %v658
        %v661 = vunpack.c.l.bf16 %v659
        %v662 = vmul.f32 %v660, %v217
        %v663 = vmul.f32 %v661, %v217
        %v664 = vadd.f32 %v655, %v662
        %v665 = vadd.f32 %v656, %v663
        %s666 = scalar_lea.vmem %s163, 304 [#allocation2]
        %v667 = vld [vmem:[%s666] sm:$0xf]
        %v668 = vld [vmem:[%s666 + $0x4] sm:$0xf]
        %v669 = vunpack.c.l.bf16 %v667
        %v670 = vunpack.c.l.bf16 %v668
        %v671 = vmul.f32 %v669, %v230
        %v672 = vmul.f32 %v670, %v230
        %v673 = vadd.f32 %v664, %v671
        %v674 = vadd.f32 %v665, %v672
        %s675 = scalar_lea.vmem %s163, 432 [#allocation2]
        %v676 = vld [vmem:[%s675] sm:$0xf]
        %v677 = vld [vmem:[%s675 + $0x4] sm:$0xf]
        %v678 = vunpack.c.l.bf16 %v676
        %v679 = vunpack.c.l.bf16 %v677
        %v680 = vmul.f32 %v678, %v243
        %v681 = vmul.f32 %v679, %v243
        %v682 = vadd.f32 %v673, %v680
        %v683 = vadd.f32 %v674, %v681
        %s684 = scalar_lea.vmem %s163, 560 [#allocation2]
        %v685 = vld [vmem:[%s684] sm:$0xf]
        %v686 = vld [vmem:[%s684 + $0x4] sm:$0xf]
        %v687 = vunpack.c.l.bf16 %v685
        %v688 = vunpack.c.l.bf16 %v686
        %v689 = vmul.f32 %v687, %v256
        %v690 = vmul.f32 %v688, %v256
        %v691 = vadd.f32 %v682, %v689
        %v692 = vadd.f32 %v683, %v690
        %s693 = scalar_lea.vmem %s163, 688 [#allocation2]
        %v694 = vld [vmem:[%s693] sm:$0xf]
        %v695 = vld [vmem:[%s693 + $0x4] sm:$0xf]
        %v696 = vunpack.c.l.bf16 %v694
        %v697 = vunpack.c.l.bf16 %v695
        %v698 = vmul.f32 %v696, %v269
        %v699 = vmul.f32 %v697, %v269
        %v700 = vadd.f32 %v691, %v698
        %v701 = vadd.f32 %v692, %v699
        %s702 = scalar_lea.vmem %s163, 816 [#allocation2]
        %v703 = vld [vmem:[%s702] sm:$0xf]
        %v704 = vld [vmem:[%s702 + $0x4] sm:$0xf]
        %v705 = vunpack.c.l.bf16 %v703
        %v706 = vunpack.c.l.bf16 %v704
        %v707 = vmul.f32 %v705, %v282
        %v708 = vmul.f32 %v706, %v282
        %v709 = vadd.f32 %v700, %v707
        %v710 = vadd.f32 %v701, %v708
        %s711 = scalar_lea.vmem %s163, 944 [#allocation2]
        %v712 = vld [vmem:[%s711] sm:$0xf]
        %v713 = vld [vmem:[%s711 + $0x4] sm:$0xf]
        %v714 = vunpack.c.l.bf16 %v712
        %v715 = vunpack.c.l.bf16 %v713
        %v716 = vmul.f32 %v714, %v295
        %v717 = vmul.f32 %v715, %v295
        %v718 = vadd.f32 %v709, %v716
        %v719 = vadd.f32 %v710, %v717
        %s720 = scalar_lea.vmem %s163, 56 [#allocation2]
        %v721 = vld [vmem:[%s720] sm:$0xf]
        %v722 = vld [vmem:[%s720 + $0x4] sm:$0xf]
        %v723 = vunpack.c.l.bf16 %v721
        %v724 = vunpack.c.l.bf16 %v722
        %v725 = vmul.f32 %v723, %v206
        %v726 = vmul.f32 %v724, %v206
        %s727 = scalar_lea.vmem %s163, 184 [#allocation2]
        %v728 = vld [vmem:[%s727] sm:$0xf]
        %v729 = vld [vmem:[%s727 + $0x4] sm:$0xf]
        %v730 = vunpack.c.l.bf16 %v728
        %v731 = vunpack.c.l.bf16 %v729
        %v732 = vmul.f32 %v730, %v217
        %v733 = vmul.f32 %v731, %v217
        %v734 = vadd.f32 %v725, %v732
        %v735 = vadd.f32 %v726, %v733
        %s736 = scalar_lea.vmem %s163, 312 [#allocation2]
        %v737 = vld [vmem:[%s736] sm:$0xf]
        %v738 = vld [vmem:[%s736 + $0x4] sm:$0xf]
        %v739 = vunpack.c.l.bf16 %v737
        %v740 = vunpack.c.l.bf16 %v738
        %v741 = vmul.f32 %v739, %v230
        %v742 = vmul.f32 %v740, %v230
        %v743 = vadd.f32 %v734, %v741
        %v744 = vadd.f32 %v735, %v742
        %s745 = scalar_lea.vmem %s163, 440 [#allocation2]
        %v746 = vld [vmem:[%s745] sm:$0xf]
        %v747 = vld [vmem:[%s745 + $0x4] sm:$0xf]
        %v748 = vunpack.c.l.bf16 %v746
        %v749 = vunpack.c.l.bf16 %v747
        %v750 = vmul.f32 %v748, %v243
        %v751 = vmul.f32 %v749, %v243
        %v752 = vadd.f32 %v743, %v750
        %v753 = vadd.f32 %v744, %v751
        %s754 = scalar_lea.vmem %s163, 568 [#allocation2]
        %v755 = vld [vmem:[%s754] sm:$0xf]
        %v756 = vld [vmem:[%s754 + $0x4] sm:$0xf]
        %v757 = vunpack.c.l.bf16 %v755
        %v758 = vunpack.c.l.bf16 %v756
        %v759 = vmul.f32 %v757, %v256
        %v760 = vmul.f32 %v758, %v256
        %v761 = vadd.f32 %v752, %v759
        %v762 = vadd.f32 %v753, %v760
        %s763 = scalar_lea.vmem %s163, 696 [#allocation2]
        %v764 = vld [vmem:[%s763] sm:$0xf]
        %v765 = vld [vmem:[%s763 + $0x4] sm:$0xf]
        %v766 = vunpack.c.l.bf16 %v764
        %v767 = vunpack.c.l.bf16 %v765
        %v768 = vmul.f32 %v766, %v269
        %v769 = vmul.f32 %v767, %v269
        %v770 = vadd.f32 %v761, %v768
        %v771 = vadd.f32 %v762, %v769
        %s772 = scalar_lea.vmem %s163, 824 [#allocation2]
        %v773 = vld [vmem:[%s772] sm:$0xf]
        %v774 = vld [vmem:[%s772 + $0x4] sm:$0xf]
        %v775 = vunpack.c.l.bf16 %v773
        %v776 = vunpack.c.l.bf16 %v774
        %v777 = vmul.f32 %v775, %v282
        %v778 = vmul.f32 %v776, %v282
        %v779 = vadd.f32 %v770, %v777
        %v780 = vadd.f32 %v771, %v778
        %s781 = scalar_lea.vmem %s163, 952 [#allocation2]
        %v782 = vld [vmem:[%s781] sm:$0xf]
        %v783 = vld [vmem:[%s781 + $0x4] sm:$0xf]
        %v784 = vunpack.c.l.bf16 %v782
        %v785 = vunpack.c.l.bf16 %v783
        %v786 = vmul.f32 %v784, %v295
        %v787 = vmul.f32 %v785, %v295
        %v788 = vadd.f32 %v779, %v786
        %v789 = vadd.f32 %v780, %v787
        %s790 = scalar_lea.vmem %s163, 64 [#allocation2]
        %v791 = vld [vmem:[%s790] sm:$0xf]
        %v792 = vld [vmem:[%s790 + $0x4] sm:$0xf]
        %v793 = vunpack.c.l.bf16 %v791
        %v794 = vunpack.c.l.bf16 %v792
        %v795 = vmul.f32 %v793, %v206
        %v796 = vmul.f32 %v794, %v206
        %s797 = scalar_lea.vmem %s163, 192 [#allocation2]
        %v798 = vld [vmem:[%s797] sm:$0xf]
        %v799 = vld [vmem:[%s797 + $0x4] sm:$0xf]
        %v800 = vunpack.c.l.bf16 %v798
        %v801 = vunpack.c.l.bf16 %v799
        %v802 = vmul.f32 %v800, %v217
        %v803 = vmul.f32 %v801, %v217
        %v804 = vadd.f32 %v795, %v802
        %v805 = vadd.f32 %v796, %v803
        %s806 = scalar_lea.vmem %s163, 320 [#allocation2]
        %v807 = vld [vmem:[%s806] sm:$0xf]
        %v808 = vld [vmem:[%s806 + $0x4] sm:$0xf]
        %v809 = vunpack.c.l.bf16 %v807
        %v810 = vunpack.c.l.bf16 %v808
        %v811 = vmul.f32 %v809, %v230
        %v812 = vmul.f32 %v810, %v230
        %v813 = vadd.f32 %v804, %v811
        %v814 = vadd.f32 %v805, %v812
        %s815 = scalar_lea.vmem %s163, 448 [#allocation2]
        %v816 = vld [vmem:[%s815] sm:$0xf]
        %v817 = vld [vmem:[%s815 + $0x4] sm:$0xf]
        %v818 = vunpack.c.l.bf16 %v816
        %v819 = vunpack.c.l.bf16 %v817
        %v820 = vmul.f32 %v818, %v243
        %v821 = vmul.f32 %v819, %v243
        %v822 = vadd.f32 %v813, %v820
        %v823 = vadd.f32 %v814, %v821
        %s824 = scalar_lea.vmem %s163, 576 [#allocation2]
        %v825 = vld [vmem:[%s824] sm:$0xf]
        %v826 = vld [vmem:[%s824 + $0x4] sm:$0xf]
        %v827 = vunpack.c.l.bf16 %v825
        %v828 = vunpack.c.l.bf16 %v826
        %v829 = vmul.f32 %v827, %v256
        %v830 = vmul.f32 %v828, %v256
        %v831 = vadd.f32 %v822, %v829
        %v832 = vadd.f32 %v823, %v830
        %s833 = scalar_lea.vmem %s163, 704 [#allocation2]
        %v834 = vld [vmem:[%s833] sm:$0xf]
        %v835 = vld [vmem:[%s833 + $0x4] sm:$0xf]
        %v836 = vunpack.c.l.bf16 %v834
        %v837 = vunpack.c.l.bf16 %v835
        %v838 = vmul.f32 %v836, %v269
        %v839 = vmul.f32 %v837, %v269
        %v840 = vadd.f32 %v831, %v838
        %v841 = vadd.f32 %v832, %v839
        %s842 = scalar_lea.vmem %s163, 832 [#allocation2]
        %v843 = vld [vmem:[%s842] sm:$0xf]
        %v844 = vld [vmem:[%s842 + $0x4] sm:$0xf]
        %v845 = vunpack.c.l.bf16 %v843
        %v846 = vunpack.c.l.bf16 %v844
        %v847 = vmul.f32 %v845, %v282
        %v848 = vmul.f32 %v846, %v282
        %v849 = vadd.f32 %v840, %v847
        %v850 = vadd.f32 %v841, %v848
        %s851 = scalar_lea.vmem %s163, 960 [#allocation2]
        %v852 = vld [vmem:[%s851] sm:$0xf]
        %v853 = vld [vmem:[%s851 + $0x4] sm:$0xf]
        %v854 = vunpack.c.l.bf16 %v852
        %v855 = vunpack.c.l.bf16 %v853
        %v856 = vmul.f32 %v854, %v295
        %v857 = vmul.f32 %v855, %v295
        %v858 = vadd.f32 %v849, %v856
        %v859 = vadd.f32 %v850, %v857
        %s860 = scalar_lea.vmem %s163, 72 [#allocation2]
        %v861 = vld [vmem:[%s860] sm:$0xf]
        %v862 = vld [vmem:[%s860 + $0x4] sm:$0xf]
        %v863 = vunpack.c.l.bf16 %v861
        %v864 = vunpack.c.l.bf16 %v862
        %v865 = vmul.f32 %v863, %v206
        %v866 = vmul.f32 %v864, %v206
        %s867 = scalar_lea.vmem %s163, 200 [#allocation2]
        %v868 = vld [vmem:[%s867] sm:$0xf]
        %v869 = vld [vmem:[%s867 + $0x4] sm:$0xf]
        %v870 = vunpack.c.l.bf16 %v868
        %v871 = vunpack.c.l.bf16 %v869
        %v872 = vmul.f32 %v870, %v217
        %v873 = vmul.f32 %v871, %v217
        %v874 = vadd.f32 %v865, %v872
        %v875 = vadd.f32 %v866, %v873
        %s876 = scalar_lea.vmem %s163, 328 [#allocation2]
        %v877 = vld [vmem:[%s876] sm:$0xf]
        %v878 = vld [vmem:[%s876 + $0x4] sm:$0xf]
        %v879 = vunpack.c.l.bf16 %v877
        %v880 = vunpack.c.l.bf16 %v878
        %v881 = vmul.f32 %v879, %v230
        %v882 = vmul.f32 %v880, %v230
        %v883 = vadd.f32 %v874, %v881
        %v884 = vadd.f32 %v875, %v882
        %s885 = scalar_lea.vmem %s163, 456 [#allocation2]
        %v886 = vld [vmem:[%s885] sm:$0xf]
        %v887 = vld [vmem:[%s885 + $0x4] sm:$0xf]
        %v888 = vunpack.c.l.bf16 %v886
        %v889 = vunpack.c.l.bf16 %v887
        %v890 = vmul.f32 %v888, %v243
        %v891 = vmul.f32 %v889, %v243
        %v892 = vadd.f32 %v883, %v890
        %v893 = vadd.f32 %v884, %v891
        %s894 = scalar_lea.vmem %s163, 584 [#allocation2]
        %v895 = vld [vmem:[%s894] sm:$0xf]
        %v896 = vld [vmem:[%s894 + $0x4] sm:$0xf]
        %v897 = vunpack.c.l.bf16 %v895
        %v898 = vunpack.c.l.bf16 %v896
        %v899 = vmul.f32 %v897, %v256
        %v900 = vmul.f32 %v898, %v256
        %v901 = vadd.f32 %v892, %v899
        %v902 = vadd.f32 %v893, %v900
        %s903 = scalar_lea.vmem %s163, 712 [#allocation2]
        %v904 = vld [vmem:[%s903] sm:$0xf]
        %v905 = vld [vmem:[%s903 + $0x4] sm:$0xf]
        %v906 = vunpack.c.l.bf16 %v904
        %v907 = vunpack.c.l.bf16 %v905
        %v908 = vmul.f32 %v906, %v269
        %v909 = vmul.f32 %v907, %v269
        %v910 = vadd.f32 %v901, %v908
        %v911 = vadd.f32 %v902, %v909
        %s912 = scalar_lea.vmem %s163, 840 [#allocation2]
        %v913 = vld [vmem:[%s912] sm:$0xf]
        %v914 = vld [vmem:[%s912 + $0x4] sm:$0xf]
        %v915 = vunpack.c.l.bf16 %v913
        %v916 = vunpack.c.l.bf16 %v914
        %v917 = vmul.f32 %v915, %v282
        %v918 = vmul.f32 %v916, %v282
        %v919 = vadd.f32 %v910, %v917
        %v920 = vadd.f32 %v911, %v918
        %s921 = scalar_lea.vmem %s163, 968 [#allocation2]
        %v922 = vld [vmem:[%s921] sm:$0xf]
        %v923 = vld [vmem:[%s921 + $0x4] sm:$0xf]
        %v924 = vunpack.c.l.bf16 %v922
        %v925 = vunpack.c.l.bf16 %v923
        %v926 = vmul.f32 %v924, %v295
        %v927 = vmul.f32 %v925, %v295
        %v928 = vadd.f32 %v919, %v926
        %v929 = vadd.f32 %v920, %v927
        %s930 = scalar_lea.vmem %s163, 80 [#allocation2]
        %v931 = vld [vmem:[%s930] sm:$0xf]
        %v932 = vld [vmem:[%s930 + $0x4] sm:$0xf]
        %v933 = vunpack.c.l.bf16 %v931
        %v934 = vunpack.c.l.bf16 %v932
        %v935 = vmul.f32 %v933, %v206
        %v936 = vmul.f32 %v934, %v206
        %s937 = scalar_lea.vmem %s163, 208 [#allocation2]
        %v938 = vld [vmem:[%s937] sm:$0xf]
        %v939 = vld [vmem:[%s937 + $0x4] sm:$0xf]
        %v940 = vunpack.c.l.bf16 %v938
        %v941 = vunpack.c.l.bf16 %v939
        %v942 = vmul.f32 %v940, %v217
        %v943 = vmul.f32 %v941, %v217
        %v944 = vadd.f32 %v935, %v942
        %v945 = vadd.f32 %v936, %v943
        %s946 = scalar_lea.vmem %s163, 336 [#allocation2]
        %v947 = vld [vmem:[%s946] sm:$0xf]
        %v948 = vld [vmem:[%s946 + $0x4] sm:$0xf]
        %v949 = vunpack.c.l.bf16 %v947
        %v950 = vunpack.c.l.bf16 %v948
        %v951 = vmul.f32 %v949, %v230
        %v952 = vmul.f32 %v950, %v230
        %v953 = vadd.f32 %v944, %v951
        %v954 = vadd.f32 %v945, %v952
        %s955 = scalar_lea.vmem %s163, 464 [#allocation2]
        %v956 = vld [vmem:[%s955] sm:$0xf]
        %v957 = vld [vmem:[%s955 + $0x4] sm:$0xf]
        %v958 = vunpack.c.l.bf16 %v956
        %v959 = vunpack.c.l.bf16 %v957
        %v960 = vmul.f32 %v958, %v243
        %v961 = vmul.f32 %v959, %v243
        %v962 = vadd.f32 %v953, %v960
        %v963 = vadd.f32 %v954, %v961
        %s964 = scalar_lea.vmem %s163, 592 [#allocation2]
        %v965 = vld [vmem:[%s964] sm:$0xf]
        %v966 = vld [vmem:[%s964 + $0x4] sm:$0xf]
        %v967 = vunpack.c.l.bf16 %v965
        %v968 = vunpack.c.l.bf16 %v966
        %v969 = vmul.f32 %v967, %v256
        %v970 = vmul.f32 %v968, %v256
        %v971 = vadd.f32 %v962, %v969
        %v972 = vadd.f32 %v963, %v970
        %s973 = scalar_lea.vmem %s163, 720 [#allocation2]
        %v974 = vld [vmem:[%s973] sm:$0xf]
        %v975 = vld [vmem:[%s973 + $0x4] sm:$0xf]
        %v976 = vunpack.c.l.bf16 %v974
        %v977 = vunpack.c.l.bf16 %v975
        %v978 = vmul.f32 %v976, %v269
        %v979 = vmul.f32 %v977, %v269
        %v980 = vadd.f32 %v971, %v978
        %v981 = vadd.f32 %v972, %v979
        %s982 = scalar_lea.vmem %s163, 848 [#allocation2]
        %v983 = vld [vmem:[%s982] sm:$0xf]
        %v984 = vld [vmem:[%s982 + $0x4] sm:$0xf]
        %v985 = vunpack.c.l.bf16 %v983
        %v986 = vunpack.c.l.bf16 %v984
        %v987 = vmul.f32 %v985, %v282
        %v988 = vmul.f32 %v986, %v282
        %v989 = vadd.f32 %v980, %v987
        %v990 = vadd.f32 %v981, %v988
        %s991 = scalar_lea.vmem %s163, 976 [#allocation2]
        %v992 = vld [vmem:[%s991] sm:$0xf]
        %v993 = vld [vmem:[%s991 + $0x4] sm:$0xf]
        %v994 = vunpack.c.l.bf16 %v992
        %v995 = vunpack.c.l.bf16 %v993
        %v996 = vmul.f32 %v994, %v295
        %v997 = vmul.f32 %v995, %v295
        %v998 = vadd.f32 %v989, %v996
        %v999 = vadd.f32 %v990, %v997
        %s1000 = scalar_lea.vmem %s163, 88 [#allocation2]
        %v1001 = vld [vmem:[%s1000] sm:$0xf]
        %v1002 = vld [vmem:[%s1000 + $0x4] sm:$0xf]
        %v1003 = vunpack.c.l.bf16 %v1001
        %v1004 = vunpack.c.l.bf16 %v1002
        %v1005 = vmul.f32 %v1003, %v206
        %v1006 = vmul.f32 %v1004, %v206
        %s1007 = scalar_lea.vmem %s163, 216 [#allocation2]
        %v1008 = vld [vmem:[%s1007] sm:$0xf]
        %v1009 = vld [vmem:[%s1007 + $0x4] sm:$0xf]
        %v1010 = vunpack.c.l.bf16 %v1008
        %v1011 = vunpack.c.l.bf16 %v1009
        %v1012 = vmul.f32 %v1010, %v217
        %v1013 = vmul.f32 %v1011, %v217
        %v1014 = vadd.f32 %v1005, %v1012
        %v1015 = vadd.f32 %v1006, %v1013
        %s1016 = scalar_lea.vmem %s163, 344 [#allocation2]
        %v1017 = vld [vmem:[%s1016] sm:$0xf]
        %v1018 = vld [vmem:[%s1016 + $0x4] sm:$0xf]
        %v1019 = vunpack.c.l.bf16 %v1017
        %v1020 = vunpack.c.l.bf16 %v1018
        %v1021 = vmul.f32 %v1019, %v230
        %v1022 = vmul.f32 %v1020, %v230
        %v1023 = vadd.f32 %v1014, %v1021
        %v1024 = vadd.f32 %v1015, %v1022
        %s1025 = scalar_lea.vmem %s163, 472 [#allocation2]
        %v1026 = vld [vmem:[%s1025] sm:$0xf]
        %v1027 = vld [vmem:[%s1025 + $0x4] sm:$0xf]
        %v1028 = vunpack.c.l.bf16 %v1026
        %v1029 = vunpack.c.l.bf16 %v1027
        %v1030 = vmul.f32 %v1028, %v243
        %v1031 = vmul.f32 %v1029, %v243
        %v1032 = vadd.f32 %v1023, %v1030
        %v1033 = vadd.f32 %v1024, %v1031
        %s1034 = scalar_lea.vmem %s163, 600 [#allocation2]
        %v1035 = vld [vmem:[%s1034] sm:$0xf]
        %v1036 = vld [vmem:[%s1034 + $0x4] sm:$0xf]
        %v1037 = vunpack.c.l.bf16 %v1035
        %v1038 = vunpack.c.l.bf16 %v1036
        %v1039 = vmul.f32 %v1037, %v256
        %v1040 = vmul.f32 %v1038, %v256
        %v1041 = vadd.f32 %v1032, %v1039
        %v1042 = vadd.f32 %v1033, %v1040
        %s1043 = scalar_lea.vmem %s163, 728 [#allocation2]
        %v1044 = vld [vmem:[%s1043] sm:$0xf]
        %v1045 = vld [vmem:[%s1043 + $0x4] sm:$0xf]
        %v1046 = vunpack.c.l.bf16 %v1044
        %v1047 = vunpack.c.l.bf16 %v1045
        %v1048 = vmul.f32 %v1046, %v269
        %v1049 = vmul.f32 %v1047, %v269
        %v1050 = vadd.f32 %v1041, %v1048
        %v1051 = vadd.f32 %v1042, %v1049
        %s1052 = scalar_lea.vmem %s163, 856 [#allocation2]
        %v1053 = vld [vmem:[%s1052] sm:$0xf]
        %v1054 = vld [vmem:[%s1052 + $0x4] sm:$0xf]
        %v1055 = vunpack.c.l.bf16 %v1053
        %v1056 = vunpack.c.l.bf16 %v1054
        %v1057 = vmul.f32 %v1055, %v282
        %v1058 = vmul.f32 %v1056, %v282
        %v1059 = vadd.f32 %v1050, %v1057
        %v1060 = vadd.f32 %v1051, %v1058
        %s1061 = scalar_lea.vmem %s163, 984 [#allocation2]
        %v1062 = vld [vmem:[%s1061] sm:$0xf]
        %v1063 = vld [vmem:[%s1061 + $0x4] sm:$0xf]
        %v1064 = vunpack.c.l.bf16 %v1062
        %v1065 = vunpack.c.l.bf16 %v1063
        %v1066 = vmul.f32 %v1064, %v295
        %v1067 = vmul.f32 %v1065, %v295
        %v1068 = vadd.f32 %v1059, %v1066
        %v1069 = vadd.f32 %v1060, %v1067
        %s1070 = scalar_lea.vmem %s163, 96 [#allocation2]
        %v1071 = vld [vmem:[%s1070] sm:$0xf]
        %v1072 = vld [vmem:[%s1070 + $0x4] sm:$0xf]
        %v1073 = vunpack.c.l.bf16 %v1071
        %v1074 = vunpack.c.l.bf16 %v1072
        %v1075 = vmul.f32 %v1073, %v206
        %v1076 = vmul.f32 %v1074, %v206
        %s1077 = scalar_lea.vmem %s163, 224 [#allocation2]
        %v1078 = vld [vmem:[%s1077] sm:$0xf]
        %v1079 = vld [vmem:[%s1077 + $0x4] sm:$0xf]
        %v1080 = vunpack.c.l.bf16 %v1078
        %v1081 = vunpack.c.l.bf16 %v1079
        %v1082 = vmul.f32 %v1080, %v217
        %v1083 = vmul.f32 %v1081, %v217
        %v1084 = vadd.f32 %v1075, %v1082
        %v1085 = vadd.f32 %v1076, %v1083
        %s1086 = scalar_lea.vmem %s163, 352 [#allocation2]
        %v1087 = vld [vmem:[%s1086] sm:$0xf]
        %v1088 = vld [vmem:[%s1086 + $0x4] sm:$0xf]
        %v1089 = vunpack.c.l.bf16 %v1087
        %v1090 = vunpack.c.l.bf16 %v1088
        %v1091 = vmul.f32 %v1089, %v230
        %v1092 = vmul.f32 %v1090, %v230
        %v1093 = vadd.f32 %v1084, %v1091
        %v1094 = vadd.f32 %v1085, %v1092
        %s1095 = scalar_lea.vmem %s163, 480 [#allocation2]
        %v1096 = vld [vmem:[%s1095] sm:$0xf]
        %v1097 = vld [vmem:[%s1095 + $0x4] sm:$0xf]
        %v1098 = vunpack.c.l.bf16 %v1096
        %v1099 = vunpack.c.l.bf16 %v1097
        %v1100 = vmul.f32 %v1098, %v243
        %v1101 = vmul.f32 %v1099, %v243
        %v1102 = vadd.f32 %v1093, %v1100
        %v1103 = vadd.f32 %v1094, %v1101
        %s1104 = scalar_lea.vmem %s163, 608 [#allocation2]
        %v1105 = vld [vmem:[%s1104] sm:$0xf]
        %v1106 = vld [vmem:[%s1104 + $0x4] sm:$0xf]
        %v1107 = vunpack.c.l.bf16 %v1105
        %v1108 = vunpack.c.l.bf16 %v1106
        %v1109 = vmul.f32 %v1107, %v256
        %v1110 = vmul.f32 %v1108, %v256
        %v1111 = vadd.f32 %v1102, %v1109
        %v1112 = vadd.f32 %v1103, %v1110
        %s1113 = scalar_lea.vmem %s163, 736 [#allocation2]
        %v1114 = vld [vmem:[%s1113] sm:$0xf]
        %v1115 = vld [vmem:[%s1113 + $0x4] sm:$0xf]
        %v1116 = vunpack.c.l.bf16 %v1114
        %v1117 = vunpack.c.l.bf16 %v1115
        %v1118 = vmul.f32 %v1116, %v269
        %v1119 = vmul.f32 %v1117, %v269
        %v1120 = vadd.f32 %v1111, %v1118
        %v1121 = vadd.f32 %v1112, %v1119
        %s1122 = scalar_lea.vmem %s163, 864 [#allocation2]
        %v1123 = vld [vmem:[%s1122] sm:$0xf]
        %v1124 = vld [vmem:[%s1122 + $0x4] sm:$0xf]
        %v1125 = vunpack.c.l.bf16 %v1123
        %v1126 = vunpack.c.l.bf16 %v1124
        %v1127 = vmul.f32 %v1125, %v282
        %v1128 = vmul.f32 %v1126, %v282
        %v1129 = vadd.f32 %v1120, %v1127
        %v1130 = vadd.f32 %v1121, %v1128
        %s1131 = scalar_lea.vmem %s163, 992 [#allocation2]
        %v1132 = vld [vmem:[%s1131] sm:$0xf]
        %v1133 = vld [vmem:[%s1131 + $0x4] sm:$0xf]
        %v1134 = vunpack.c.l.bf16 %v1132
        %v1135 = vunpack.c.l.bf16 %v1133
        %v1136 = vmul.f32 %v1134, %v295
        %v1137 = vmul.f32 %v1135, %v295
        %v1138 = vadd.f32 %v1129, %v1136
        %v1139 = vadd.f32 %v1130, %v1137
        %s1140 = scalar_lea.vmem %s163, 104 [#allocation2]
        %v1141 = vld [vmem:[%s1140] sm:$0xf]
        %v1142 = vld [vmem:[%s1140 + $0x4] sm:$0xf]
        %v1143 = vunpack.c.l.bf16 %v1141
        %v1144 = vunpack.c.l.bf16 %v1142
        %v1145 = vmul.f32 %v1143, %v206
        %v1146 = vmul.f32 %v1144, %v206
        %s1147 = scalar_lea.vmem %s163, 232 [#allocation2]
        %v1148 = vld [vmem:[%s1147] sm:$0xf]
        %v1149 = vld [vmem:[%s1147 + $0x4] sm:$0xf]
        %v1150 = vunpack.c.l.bf16 %v1148
        %v1151 = vunpack.c.l.bf16 %v1149
        %v1152 = vmul.f32 %v1150, %v217
        %v1153 = vmul.f32 %v1151, %v217
        %v1154 = vadd.f32 %v1145, %v1152
        %v1155 = vadd.f32 %v1146, %v1153
        %s1156 = scalar_lea.vmem %s163, 360 [#allocation2]
        %v1157 = vld [vmem:[%s1156] sm:$0xf]
        %v1158 = vld [vmem:[%s1156 + $0x4] sm:$0xf]
        %v1159 = vunpack.c.l.bf16 %v1157
        %v1160 = vunpack.c.l.bf16 %v1158
        %v1161 = vmul.f32 %v1159, %v230
        %v1162 = vmul.f32 %v1160, %v230
        %v1163 = vadd.f32 %v1154, %v1161
        %v1164 = vadd.f32 %v1155, %v1162
        %s1165 = scalar_lea.vmem %s163, 488 [#allocation2]
        %v1166 = vld [vmem:[%s1165] sm:$0xf]
        %v1167 = vld [vmem:[%s1165 + $0x4] sm:$0xf]
        %v1168 = vunpack.c.l.bf16 %v1166
        %v1169 = vunpack.c.l.bf16 %v1167
        %v1170 = vmul.f32 %v1168, %v243
        %v1171 = vmul.f32 %v1169, %v243
        %v1172 = vadd.f32 %v1163, %v1170
        %v1173 = vadd.f32 %v1164, %v1171
        %s1174 = scalar_lea.vmem %s163, 616 [#allocation2]
        %v1175 = vld [vmem:[%s1174] sm:$0xf]
        %v1176 = vld [vmem:[%s1174 + $0x4] sm:$0xf]
        %v1177 = vunpack.c.l.bf16 %v1175
        %v1178 = vunpack.c.l.bf16 %v1176
        %v1179 = vmul.f32 %v1177, %v256
        %v1180 = vmul.f32 %v1178, %v256
        %v1181 = vadd.f32 %v1172, %v1179
        %v1182 = vadd.f32 %v1173, %v1180
        %s1183 = scalar_lea.vmem %s163, 744 [#allocation2]
        %v1184 = vld [vmem:[%s1183] sm:$0xf]
        %v1185 = vld [vmem:[%s1183 + $0x4] sm:$0xf]
        %v1186 = vunpack.c.l.bf16 %v1184
        %v1187 = vunpack.c.l.bf16 %v1185
        %v1188 = vmul.f32 %v1186, %v269
        %v1189 = vmul.f32 %v1187, %v269
        %v1190 = vadd.f32 %v1181, %v1188
        %v1191 = vadd.f32 %v1182, %v1189
        %s1192 = scalar_lea.vmem %s163, 872 [#allocation2]
        %v1193 = vld [vmem:[%s1192] sm:$0xf]
        %v1194 = vld [vmem:[%s1192 + $0x4] sm:$0xf]
        %v1195 = vunpack.c.l.bf16 %v1193
        %v1196 = vunpack.c.l.bf16 %v1194
        %v1197 = vmul.f32 %v1195, %v282
        %v1198 = vmul.f32 %v1196, %v282
        %v1199 = vadd.f32 %v1190, %v1197
        %v1200 = vadd.f32 %v1191, %v1198
        %s1201 = scalar_lea.vmem %s163, 1000 [#allocation2]
        %v1202 = vld [vmem:[%s1201] sm:$0xf]
        %v1203 = vld [vmem:[%s1201 + $0x4] sm:$0xf]
        %v1204 = vunpack.c.l.bf16 %v1202
        %v1205 = vunpack.c.l.bf16 %v1203
        %v1206 = vmul.f32 %v1204, %v295
        %v1207 = vmul.f32 %v1205, %v295
        %v1208 = vadd.f32 %v1199, %v1206
        %v1209 = vadd.f32 %v1200, %v1207
        %s1210 = scalar_lea.vmem %s163, 112 [#allocation2]
        %v1211 = vld [vmem:[%s1210] sm:$0xf]
        %v1212 = vld [vmem:[%s1210 + $0x4] sm:$0xf]
        %v1213 = vunpack.c.l.bf16 %v1211
        %v1214 = vunpack.c.l.bf16 %v1212
        %v1215 = vmul.f32 %v1213, %v206
        %v1216 = vmul.f32 %v1214, %v206
        %s1217 = scalar_lea.vmem %s163, 240 [#allocation2]
        %v1218 = vld [vmem:[%s1217] sm:$0xf]
        %v1219 = vld [vmem:[%s1217 + $0x4] sm:$0xf]
        %v1220 = vunpack.c.l.bf16 %v1218
        %v1221 = vunpack.c.l.bf16 %v1219
        %v1222 = vmul.f32 %v1220, %v217
        %v1223 = vmul.f32 %v1221, %v217
        %v1224 = vadd.f32 %v1215, %v1222
        %v1225 = vadd.f32 %v1216, %v1223
        %s1226 = scalar_lea.vmem %s163, 368 [#allocation2]
        %v1227 = vld [vmem:[%s1226] sm:$0xf]
        %v1228 = vld [vmem:[%s1226 + $0x4] sm:$0xf]
        %v1229 = vunpack.c.l.bf16 %v1227
        %v1230 = vunpack.c.l.bf16 %v1228
        %v1231 = vmul.f32 %v1229, %v230
        %v1232 = vmul.f32 %v1230, %v230
        %v1233 = vadd.f32 %v1224, %v1231
        %v1234 = vadd.f32 %v1225, %v1232
        %s1235 = scalar_lea.vmem %s163, 496 [#allocation2]
        %v1236 = vld [vmem:[%s1235] sm:$0xf]
        %v1237 = vld [vmem:[%s1235 + $0x4] sm:$0xf]
        %v1238 = vunpack.c.l.bf16 %v1236
        %v1239 = vunpack.c.l.bf16 %v1237
        %v1240 = vmul.f32 %v1238, %v243
        %v1241 = vmul.f32 %v1239, %v243
        %v1242 = vadd.f32 %v1233, %v1240
        %v1243 = vadd.f32 %v1234, %v1241
        %s1244 = scalar_lea.vmem %s163, 624 [#allocation2]
        %v1245 = vld [vmem:[%s1244] sm:$0xf]
        %v1246 = vld [vmem:[%s1244 + $0x4] sm:$0xf]
        %v1247 = vunpack.c.l.bf16 %v1245
        %v1248 = vunpack.c.l.bf16 %v1246
        %v1249 = vmul.f32 %v1247, %v256
        %v1250 = vmul.f32 %v1248, %v256
        %v1251 = vadd.f32 %v1242, %v1249
        %v1252 = vadd.f32 %v1243, %v1250
        %s1253 = scalar_lea.vmem %s163, 752 [#allocation2]
        %v1254 = vld [vmem:[%s1253] sm:$0xf]
        %v1255 = vld [vmem:[%s1253 + $0x4] sm:$0xf]
        %v1256 = vunpack.c.l.bf16 %v1254
        %v1257 = vunpack.c.l.bf16 %v1255
        %v1258 = vmul.f32 %v1256, %v269
        %v1259 = vmul.f32 %v1257, %v269
        %v1260 = vadd.f32 %v1251, %v1258
        %v1261 = vadd.f32 %v1252, %v1259
        %s1262 = scalar_lea.vmem %s163, 880 [#allocation2]
        %v1263 = vld [vmem:[%s1262] sm:$0xf]
        %v1264 = vld [vmem:[%s1262 + $0x4] sm:$0xf]
        %v1265 = vunpack.c.l.bf16 %v1263
        %v1266 = vunpack.c.l.bf16 %v1264
        %v1267 = vmul.f32 %v1265, %v282
        %v1268 = vmul.f32 %v1266, %v282
        %v1269 = vadd.f32 %v1260, %v1267
        %v1270 = vadd.f32 %v1261, %v1268
        %s1271 = scalar_lea.vmem %s163, 1008 [#allocation2]
        %v1272 = vld [vmem:[%s1271] sm:$0xf]
        %v1273 = vld [vmem:[%s1271 + $0x4] sm:$0xf]
        %v1274 = vunpack.c.l.bf16 %v1272
        %v1275 = vunpack.c.l.bf16 %v1273
        %v1276 = vmul.f32 %v1274, %v295
        %v1277 = vmul.f32 %v1275, %v295
        %v1278 = vadd.f32 %v1269, %v1276
        %v1279 = vadd.f32 %v1270, %v1277
        %s1280 = scalar_lea.vmem %s163, 120 [#allocation2]
        %v1281 = vld [vmem:[%s1280] sm:$0xf]
        %v1282 = vld [vmem:[%s1280 + $0x4] sm:$0xf]
        %v1283 = vunpack.c.l.bf16 %v1281
        %v1284 = vunpack.c.l.bf16 %v1282
        %v1285 = vmul.f32 %v1283, %v206
        %v1286 = vmul.f32 %v1284, %v206
        %s1287 = scalar_lea.vmem %s163, 248 [#allocation2]
        %v1288 = vld [vmem:[%s1287] sm:$0xf]
        %v1289 = vld [vmem:[%s1287 + $0x4] sm:$0xf]
        %v1290 = vunpack.c.l.bf16 %v1288
        %v1291 = vunpack.c.l.bf16 %v1289
        %v1292 = vmul.f32 %v1290, %v217
        %v1293 = vmul.f32 %v1291, %v217
        %v1294 = vadd.f32 %v1285, %v1292
        %v1295 = vadd.f32 %v1286, %v1293
        %s1296 = scalar_lea.vmem %s163, 376 [#allocation2]
        %v1297 = vld [vmem:[%s1296] sm:$0xf]
        %v1298 = vld [vmem:[%s1296 + $0x4] sm:$0xf]
        %v1299 = vunpack.c.l.bf16 %v1297
        %v1300 = vunpack.c.l.bf16 %v1298
        %v1301 = vmul.f32 %v1299, %v230
        %v1302 = vmul.f32 %v1300, %v230
        %v1303 = vadd.f32 %v1294, %v1301
        %v1304 = vadd.f32 %v1295, %v1302
        %s1305 = scalar_lea.vmem %s163, 504 [#allocation2]
        %v1306 = vld [vmem:[%s1305] sm:$0xf]
        %v1307 = vld [vmem:[%s1305 + $0x4] sm:$0xf]
        %v1308 = vunpack.c.l.bf16 %v1306
        %v1309 = vunpack.c.l.bf16 %v1307
        %v1310 = vmul.f32 %v1308, %v243
        %v1311 = vmul.f32 %v1309, %v243
        %v1312 = vadd.f32 %v1303, %v1310
        %v1313 = vadd.f32 %v1304, %v1311
        %s1314 = scalar_lea.vmem %s163, 632 [#allocation2]
        %v1315 = vld [vmem:[%s1314] sm:$0xf]
        %v1316 = vld [vmem:[%s1314 + $0x4] sm:$0xf]
        %v1317 = vunpack.c.l.bf16 %v1315
        %v1318 = vunpack.c.l.bf16 %v1316
        %v1319 = vmul.f32 %v1317, %v256
        %v1320 = vmul.f32 %v1318, %v256
        %v1321 = vadd.f32 %v1312, %v1319
        %v1322 = vadd.f32 %v1313, %v1320
        %s1323 = scalar_lea.vmem %s163, 760 [#allocation2]
        %v1324 = vld [vmem:[%s1323] sm:$0xf]
        %v1325 = vld [vmem:[%s1323 + $0x4] sm:$0xf]
        %v1326 = vunpack.c.l.bf16 %v1324
        %v1327 = vunpack.c.l.bf16 %v1325
        %v1328 = vmul.f32 %v1326, %v269
        %v1329 = vmul.f32 %v1327, %v269
        %v1330 = vadd.f32 %v1321, %v1328
        %v1331 = vadd.f32 %v1322, %v1329
        %s1332 = scalar_lea.vmem %s163, 888 [#allocation2]
        %v1333 = vld [vmem:[%s1332] sm:$0xf]
        %v1334 = vld [vmem:[%s1332 + $0x4] sm:$0xf]
        %v1335 = vunpack.c.l.bf16 %v1333
        %v1336 = vunpack.c.l.bf16 %v1334
        %v1337 = vmul.f32 %v1335, %v282
        %v1338 = vmul.f32 %v1336, %v282
        %v1339 = vadd.f32 %v1330, %v1337
        %v1340 = vadd.f32 %v1331, %v1338
        %s1341 = scalar_lea.vmem %s163, 1016 [#allocation2]
        %v1342 = vld [vmem:[%s1341] sm:$0xf]
        %v1343 = vld [vmem:[%s1341 + $0x4] sm:$0xf]
        %v1344 = vunpack.c.l.bf16 %v1342
        %v1345 = vunpack.c.l.bf16 %v1343
        %v1346 = vmul.f32 %v1344, %v295
        %v1347 = vmul.f32 %v1345, %v295
        %v1348 = vadd.f32 %v1339, %v1346
        %v1349 = vadd.f32 %v1340, %v1347
        %v1350 = vadd.f32 %v298, %v368
        %v1351 = vadd.f32 %v299, %v369
        %v1352 = vadd.f32 %v1350, %v438
        %v1353 = vadd.f32 %v1351, %v439
        %v1354 = vadd.f32 %v1352, %v508
        %v1355 = vadd.f32 %v1353, %v509
        %v1356 = vadd.f32 %v1354, %v578
        %v1357 = vadd.f32 %v1355, %v579
        %v1358 = vadd.f32 %v1356, %v648
        %v1359 = vadd.f32 %v1357, %v649
        %v1360 = vadd.f32 %v1358, %v718
        %v1361 = vadd.f32 %v1359, %v719
        %v1362 = vadd.f32 %v1360, %v788
        %v1363 = vadd.f32 %v1361, %v789
        %v1364 = vadd.f32 %v1362, %v858
        %v1365 = vadd.f32 %v1363, %v859
        %v1366 = vadd.f32 %v1364, %v928
        %v1367 = vadd.f32 %v1365, %v929
        %v1368 = vadd.f32 %v1366, %v998
        %v1369 = vadd.f32 %v1367, %v999
        %v1370 = vadd.f32 %v1368, %v1068
        %v1371 = vadd.f32 %v1369, %v1069
        %v1372 = vadd.f32 %v1370, %v1138
        %v1373 = vadd.f32 %v1371, %v1139
        %v1374 = vadd.f32 %v1372, %v1208
        %v1375 = vadd.f32 %v1373, %v1209
        %v1376 = vadd.f32 %v1374, %v1278
        %v1377 = vadd.f32 %v1375, %v1279
        %v1378 = vadd.f32 %v1376, %v1348
        %v1379 = vadd.f32 %v1377, %v1349
        %v1380 = vmul.f32 %v1378, 0.0625
        %v1381 = vmul.f32 %v1379, 0.0625
        %v1382 = vmul.f32 %v1380, %v1380
        %v1383 = vmul.f32 %v1381, %v1381
        %v1384 = vadd.f32 %v1382, %v1383
        %v1385 = vrot.slane %v1384, 4
        %v1386 = vadd.f32 %v1384, %v1385
        %v1387 = vrot.slane %v1386, 2
        %v1388 = vadd.f32 %v1386, %v1387
        %v1389 = vrot.slane %v1388, 1
        %v1390 = vadd.f32 %v1388, %v1389
        %v1391 = vrsqrt.pop %v1390
        %v1392 = vmul.f32 %v1390, %v1391
        %vm1393 = vcmp.eq.f32.partialorder %v1390, inf
        %v1394 = vsel %vm1393, %v1390, %v1392
        %vm1395 = vcmp.eq.f32.partialorder %v1390, 0.0
        %v1396 = vand.u32 %v1390, 2147483648
        %v1397 = vsel %vm1395, %v1396, %v1394
        %v1398 = vmul.f32 %v1380, %v1397
        %v1399 = vmul.f32 %v1381, %v1397
        %v1400 = vadd.f32 %v1390, 1.0
        %v1401 = vrcp.pop %v1400
        %v1402 = vmul.f32 %v1398, %v1401
        %v1403 = vmul.f32 %v1399, %v1401
        %v1404 = vmul.f32 %v1402, %v298
        %v1405 = vmul.f32 %v1403, %v299
        %v1406 = vadd.f32 %v1404, %v1405
        %v1407 = vrot.slane %v1406, 4
        %v1408 = vadd.f32 %v1406, %v1407
        %v1409 = vrot.slane %v1408, 2
        %v1410 = vadd.f32 %v1408, %v1409
        %v1411 = vrot.slane %v1410, 1
        %v1412 = vadd.f32 %v1410, %v1411
        %v1413 = vmul.f32 %v1402, %v368
        %v1414 = vmul.f32 %v1403, %v369
        %v1415 = vadd.f32 %v1413, %v1414
        %v1416 = vrot.slane %v1415, 4
        %v1417 = vadd.f32 %v1415, %v1416
        %v1418 = vrot.slane %v1417, 2
        %v1419 = vadd.f32 %v1417, %v1418
        %v1420 = vrot.slane %v1419, 1
        %v1421 = vadd.f32 %v1419, %v1420
        %v1422 = vmul.f32 %v1402, %v438
        %v1423 = vmul.f32 %v1403, %v439
        %v1424 = vadd.f32 %v1422, %v1423
        %v1425 = vrot.slane %v1424, 4
        %v1426 = vadd.f32 %v1424, %v1425
        %v1427 = vrot.slane %v1426, 2
        %v1428 = vadd.f32 %v1426, %v1427
        %v1429 = vrot.slane %v1428, 1
        %v1430 = vadd.f32 %v1428, %v1429
        %v1431 = vmul.f32 %v1402, %v508
        %v1432 = vmul.f32 %v1403, %v509
        %v1433 = vadd.f32 %v1431, %v1432
        %v1434 = vrot.slane %v1433, 4
        %v1435 = vadd.f32 %v1433, %v1434
        %v1436 = vrot.slane %v1435, 2
        %v1437 = vadd.f32 %v1435, %v1436
        %v1438 = vrot.slane %v1437, 1
        %v1439 = vadd.f32 %v1437, %v1438
        %v1440 = vmul.f32 %v1402, %v578
        %v1441 = vmul.f32 %v1403, %v579
        %v1442 = vadd.f32 %v1440, %v1441
        %v1443 = vrot.slane %v1442, 4
        %v1444 = vadd.f32 %v1442, %v1443
        %v1445 = vrot.slane %v1444, 2
        %v1446 = vadd.f32 %v1444, %v1445
        %v1447 = vrot.slane %v1446, 1
        %v1448 = vadd.f32 %v1446, %v1447
        %v1449 = vmul.f32 %v1402, %v648
        %v1450 = vmul.f32 %v1403, %v649
        %v1451 = vadd.f32 %v1449, %v1450
        %v1452 = vrot.slane %v1451, 4
        %v1453 = vadd.f32 %v1451, %v1452
        %v1454 = vrot.slane %v1453, 2
        %v1455 = vadd.f32 %v1453, %v1454
        %v1456 = vrot.slane %v1455, 1
        %v1457 = vadd.f32 %v1455, %v1456
        %v1458 = vmul.f32 %v1402, %v718
        %v1459 = vmul.f32 %v1403, %v719
        %v1460 = vadd.f32 %v1458, %v1459
        %v1461 = vrot.slane %v1460, 4
        %v1462 = vadd.f32 %v1460, %v1461
        %v1463 = vrot.slane %v1462, 2
        %v1464 = vadd.f32 %v1462, %v1463
        %v1465 = vrot.slane %v1464, 1
        %v1466 = vadd.f32 %v1464, %v1465
        %v1467 = vmul.f32 %v1402, %v788
        %v1468 = vmul.f32 %v1403, %v789
        %v1469 = vadd.f32 %v1467, %v1468
        %v1470 = vrot.slane %v1469, 4
        %v1471 = vadd.f32 %v1469, %v1470
        %v1472 = vrot.slane %v1471, 2
        %v1473 = vadd.f32 %v1471, %v1472
        %v1474 = vrot.slane %v1473, 1
        %v1475 = vadd.f32 %v1473, %v1474
        %v1476 = vmul.f32 %v1402, %v858
        %v1477 = vmul.f32 %v1403, %v859
        %v1478 = vadd.f32 %v1476, %v1477
        %v1479 = vrot.slane %v1478, 4
        %v1480 = vadd.f32 %v1478, %v1479
        %v1481 = vrot.slane %v1480, 2
        %v1482 = vadd.f32 %v1480, %v1481
        %v1483 = vrot.slane %v1482, 1
        %v1484 = vadd.f32 %v1482, %v1483
        %v1485 = vmul.f32 %v1402, %v928
        %v1486 = vmul.f32 %v1403, %v929
        %v1487 = vadd.f32 %v1485, %v1486
        %v1488 = vrot.slane %v1487, 4
        %v1489 = vadd.f32 %v1487, %v1488
        %v1490 = vrot.slane %v1489, 2
        %v1491 = vadd.f32 %v1489, %v1490
        %v1492 = vrot.slane %v1491, 1
        %v1493 = vadd.f32 %v1491, %v1492
        %v1494 = vmul.f32 %v1402, %v998
        %v1495 = vmul.f32 %v1403, %v999
        %v1496 = vadd.f32 %v1494, %v1495
        %v1497 = vrot.slane %v1496, 4
        %v1498 = vadd.f32 %v1496, %v1497
        %v1499 = vrot.slane %v1498, 2
        %v1500 = vadd.f32 %v1498, %v1499
        %v1501 = vrot.slane %v1500, 1
        %v1502 = vadd.f32 %v1500, %v1501
        %v1503 = vmul.f32 %v1402, %v1068
        %v1504 = vmul.f32 %v1403, %v1069
        %v1505 = vadd.f32 %v1503, %v1504
        %v1506 = vrot.slane %v1505, 4
        %v1507 = vadd.f32 %v1505, %v1506
        %v1508 = vrot.slane %v1507, 2
        %v1509 = vadd.f32 %v1507, %v1508
        %v1510 = vrot.slane %v1509, 1
        %v1511 = vadd.f32 %v1509, %v1510
        %v1512 = vmul.f32 %v1402, %v1138
        %v1513 = vmul.f32 %v1403, %v1139
        %v1514 = vadd.f32 %v1512, %v1513
        %v1515 = vrot.slane %v1514, 4
        %v1516 = vadd.f32 %v1514, %v1515
        %v1517 = vrot.slane %v1516, 2
        %v1518 = vadd.f32 %v1516, %v1517
        %v1519 = vrot.slane %v1518, 1
        %v1520 = vadd.f32 %v1518, %v1519
        %v1521 = vmul.f32 %v1402, %v1208
        %v1522 = vmul.f32 %v1403, %v1209
        %v1523 = vadd.f32 %v1521, %v1522
        %v1524 = vrot.slane %v1523, 4
        %v1525 = vadd.f32 %v1523, %v1524
        %v1526 = vrot.slane %v1525, 2
        %v1527 = vadd.f32 %v1525, %v1526
        %v1528 = vrot.slane %v1527, 1
        %v1529 = vadd.f32 %v1527, %v1528
        %v1530 = vmul.f32 %v1402, %v1278
        %v1531 = vmul.f32 %v1403, %v1279
        %v1532 = vadd.f32 %v1530, %v1531
        %v1533 = vrot.slane %v1532, 4
        %v1534 = vadd.f32 %v1532, %v1533
        %v1535 = vrot.slane %v1534, 2
        %v1536 = vadd.f32 %v1534, %v1535
        %v1537 = vrot.slane %v1536, 1
        %v1538 = vadd.f32 %v1536, %v1537
        %v1539 = vmul.f32 %v1402, %v1348
        %v1540 = vmul.f32 %v1403, %v1349
        %v1541 = vadd.f32 %v1539, %v1540
        %v1542 = vrot.slane %v1541, 4
        %v1543 = vadd.f32 %v1541, %v1542
        %v1544 = vrot.slane %v1543, 2
        %v1545 = vadd.f32 %v1543, %v1544
        %v1546 = vrot.slane %v1545, 1
        %v1547 = vadd.f32 %v1545, %v1546
        %v1548 = vmax.f32 %v1412, %v1421
        %v1549 = vmax.f32 %v1548, %v1430
        %v1550 = vmax.f32 %v1549, %v1439
        %v1551 = vmax.f32 %v1550, %v1448
        %v1552 = vmax.f32 %v1551, %v1457
        %v1553 = vmax.f32 %v1552, %v1466
        %v1554 = vmax.f32 %v1553, %v1475
        %v1555 = vmax.f32 %v1554, %v1484
        %v1556 = vmax.f32 %v1555, %v1493
        %v1557 = vmax.f32 %v1556, %v1502
        %v1558 = vmax.f32 %v1557, %v1511
        %v1559 = vmax.f32 %v1558, %v1520
        %v1560 = vmax.f32 %v1559, %v1529
        %v1561 = vmax.f32 %v1560, %v1538
        %v1562 = vmax.f32 %v1561, %v1547
        %v1563 = vsub.f32 %v1412, %v1562
        %v1564 = vmul.f32 %v1563, 1.442695
        %v1565 = vpow.pop %v1564
        %v1566 = vsub.f32 %v1421, %v1562
        %v1567 = vmul.f32 %v1566, 1.442695
        %v1568 = vpow.pop %v1567
        %v1569 = vsub.f32 %v1430, %v1562
        %v1570 = vmul.f32 %v1569, 1.442695
        %v1571 = vpow.pop %v1570
        %v1572 = vsub.f32 %v1439, %v1562
        %v1573 = vmul.f32 %v1572, 1.442695
        %v1574 = vpow.pop %v1573
        %v1575 = vsub.f32 %v1448, %v1562
        %v1576 = vmul.f32 %v1575, 1.442695
        %v1577 = vpow.pop %v1576
        %v1578 = vsub.f32 %v1457, %v1562
        %v1579 = vmul.f32 %v1578, 1.442695
        %v1580 = vpow.pop %v1579
        %v1581 = vsub.f32 %v1466, %v1562
        %v1582 = vmul.f32 %v1581, 1.442695
        %v1583 = vpow.pop %v1582
        %v1584 = vsub.f32 %v1475, %v1562
        %v1585 = vmul.f32 %v1584, 1.442695
        %v1586 = vpow.pop %v1585
        %v1587 = vsub.f32 %v1484, %v1562
        %v1588 = vmul.f32 %v1587, 1.442695
        %v1589 = vpow.pop %v1588
        %v1590 = vsub.f32 %v1493, %v1562
        %v1591 = vmul.f32 %v1590, 1.442695
        %v1592 = vpow.pop %v1591
        %v1593 = vsub.f32 %v1502, %v1562
        %v1594 = vmul.f32 %v1593, 1.442695
        %v1595 = vpow.pop %v1594
        %v1596 = vsub.f32 %v1511, %v1562
        %v1597 = vmul.f32 %v1596, 1.442695
        %v1598 = vpow.pop %v1597
        %v1599 = vsub.f32 %v1520, %v1562
        %v1600 = vmul.f32 %v1599, 1.442695
        %v1601 = vpow.pop %v1600
        %v1602 = vsub.f32 %v1529, %v1562
        %v1603 = vmul.f32 %v1602, 1.442695
        %v1604 = vpow.pop %v1603
        %v1605 = vsub.f32 %v1538, %v1562
        %v1606 = vmul.f32 %v1605, 1.442695
        %v1607 = vpow.pop %v1606
        %v1608 = vsub.f32 %v1547, %v1562
        %v1609 = vmul.f32 %v1608, 1.442695
        %v1610 = vpow.pop %v1609
        %v1611 = vadd.f32 %v1565, %v1568
        %v1612 = vadd.f32 %v1611, %v1571
        %v1613 = vadd.f32 %v1612, %v1574
        %v1614 = vadd.f32 %v1613, %v1577
        %v1615 = vadd.f32 %v1614, %v1580
        %v1616 = vadd.f32 %v1615, %v1583
        %v1617 = vadd.f32 %v1616, %v1586
        %v1618 = vadd.f32 %v1617, %v1589
        %v1619 = vadd.f32 %v1618, %v1592
        %v1620 = vadd.f32 %v1619, %v1595
        %v1621 = vadd.f32 %v1620, %v1598
        %v1622 = vadd.f32 %v1621, %v1601
        %v1623 = vadd.f32 %v1622, %v1604
        %v1624 = vadd.f32 %v1623, %v1607
        %v1625 = vadd.f32 %v1624, %v1610
        %v1626 = vrcp.pop %v1625
        %v1627 = vmul.f32 %v1565, %v1626
        %v1628 = vmul.f32 %v1627, %v298
        %v1629 = vmul.f32 %v1627, %v299
        %v1630 = vmul.f32 %v1568, %v1626
        %v1631 = vmul.f32 %v1630, %v368
        %v1632 = vmul.f32 %v1630, %v369
        %v1633 = vadd.f32 %v1628, %v1631
        %v1634 = vadd.f32 %v1629, %v1632
        %v1635 = vmul.f32 %v1571, %v1626
        %v1636 = vmul.f32 %v1635, %v438
        %v1637 = vmul.f32 %v1635, %v439
        %v1638 = vadd.f32 %v1633, %v1636
        %v1639 = vadd.f32 %v1634, %v1637
        %v1640 = vmul.f32 %v1574, %v1626
        %v1641 = vmul.f32 %v1640, %v508
        %v1642 = vmul.f32 %v1640, %v509
        %v1643 = vadd.f32 %v1638, %v1641
        %v1644 = vadd.f32 %v1639, %v1642
        %v1645 = vmul.f32 %v1577, %v1626
        %v1646 = vmul.f32 %v1645, %v578
        %v1647 = vmul.f32 %v1645, %v579
        %v1648 = vadd.f32 %v1643, %v1646
        %v1649 = vadd.f32 %v1644, %v1647
        %v1650 = vmul.f32 %v1580, %v1626
        %v1651 = vmul.f32 %v1650, %v648
        %v1652 = vmul.f32 %v1650, %v649
        %v1653 = vadd.f32 %v1648, %v1651
        %v1654 = vadd.f32 %v1649, %v1652
        %v1655 = vmul.f32 %v1583, %v1626
        %v1656 = vmul.f32 %v1655, %v718
        %v1657 = vmul.f32 %v1655, %v719
        %v1658 = vadd.f32 %v1653, %v1656
        %v1659 = vadd.f32 %v1654, %v1657
        %v1660 = vmul.f32 %v1586, %v1626
        %v1661 = vmul.f32 %v1660, %v788
        %v1662 = vmul.f32 %v1660, %v789
        %v1663 = vadd.f32 %v1658, %v1661
        %v1664 = vadd.f32 %v1659, %v1662
        %v1665 = vmul.f32 %v1589, %v1626
        %v1666 = vmul.f32 %v1665, %v858
        %v1667 = vmul.f32 %v1665, %v859
        %v1668 = vadd.f32 %v1663, %v1666
        %v1669 = vadd.f32 %v1664, %v1667
        %v1670 = vmul.f32 %v1592, %v1626
        %v1671 = vmul.f32 %v1670, %v928
        %v1672 = vmul.f32 %v1670, %v929
        %v1673 = vadd.f32 %v1668, %v1671
        %v1674 = vadd.f32 %v1669, %v1672
        %v1675 = vmul.f32 %v1595, %v1626
        %v1676 = vmul.f32 %v1675, %v998
        %v1677 = vmul.f32 %v1675, %v999
        %v1678 = vadd.f32 %v1673, %v1676
        %v1679 = vadd.f32 %v1674, %v1677
        %v1680 = vmul.f32 %v1598, %v1626
        %v1681 = vmul.f32 %v1680, %v1068
        %v1682 = vmul.f32 %v1680, %v1069
        %v1683 = vadd.f32 %v1678, %v1681
        %v1684 = vadd.f32 %v1679, %v1682
        %v1685 = vmul.f32 %v1601, %v1626
        %v1686 = vmul.f32 %v1685, %v1138
        %v1687 = vmul.f32 %v1685, %v1139
        %v1688 = vadd.f32 %v1683, %v1686
        %v1689 = vadd.f32 %v1684, %v1687
        %v1690 = vmul.f32 %v1604, %v1626
        %v1691 = vmul.f32 %v1690, %v1208
        %v1692 = vmul.f32 %v1690, %v1209
        %v1693 = vadd.f32 %v1688, %v1691
        %v1694 = vadd.f32 %v1689, %v1692
        %v1695 = vmul.f32 %v1607, %v1626
        %v1696 = vmul.f32 %v1695, %v1278
        %v1697 = vmul.f32 %v1695, %v1279
        %v1698 = vadd.f32 %v1693, %v1696
        %v1699 = vadd.f32 %v1694, %v1697
        %v1700 = vmul.f32 %v1610, %v1626
        %v1701 = vmul.f32 %v1700, %v1348
        %v1702 = vmul.f32 %v1700, %v1349
        %v1703 = vadd.f32 %v1698, %v1701
        %v1704 = vadd.f32 %v1699, %v1702
        %v1705 = vmul.f32 %v1703, %v1703
        %v1706 = vmul.f32 %v1704, %v1704
        %v1707 = vadd.f32 %v1705, %v1706
        %v1708 = vrot.slane %v1707, 4
        %v1709 = vadd.f32 %v1707, %v1708
        %v1710 = vrot.slane %v1709, 2
        %v1711 = vadd.f32 %v1709, %v1710
        %v1712 = vrot.slane %v1711, 1
        %v1713 = vadd.f32 %v1711, %v1712
        %v1714 = vrsqrt.pop %v1713
        %v1715 = vmul.f32 %v1713, %v1714
        %vm1716 = vcmp.eq.f32.partialorder %v1713, inf
        %v1717 = vsel %vm1716, %v1713, %v1715
        %vm1718 = vcmp.eq.f32.partialorder %v1713, 0.0
        %v1719 = vand.u32 %v1713, 2147483648
        %v1720 = vsel %vm1718, %v1719, %v1717
        %v1721 = vmul.f32 %v1703, %v1720
        %v1722 = vmul.f32 %v1704, %v1720
        %v1723 = vadd.f32 %v1713, 1.0
        %v1724 = vrcp.pop %v1723
        %v1725 = vmul.f32 %v1721, %v1724
        %v1726 = vmul.f32 %v1722, %v1724
        %v1727 = vmul.f32 %v1725, %v298
        %v1728 = vmul.f32 %v1726, %v299
        %v1729 = vadd.f32 %v1727, %v1728
        %v1730 = vrot.slane %v1729, 4
        %v1731 = vadd.f32 %v1729, %v1730
        %v1732 = vrot.slane %v1731, 2
        %v1733 = vadd.f32 %v1731, %v1732
        %v1734 = vrot.slane %v1733, 1
        %v1735 = vadd.f32 %v1733, %v1734
        %v1736 = vadd.f32 %v1412, %v1735
        %v1737 = vmul.f32 %v1725, %v368
        %v1738 = vmul.f32 %v1726, %v369
        %v1739 = vadd.f32 %v1737, %v1738
        %v1740 = vrot.slane %v1739, 4
        %v1741 = vadd.f32 %v1739, %v1740
        %v1742 = vrot.slane %v1741, 2
        %v1743 = vadd.f32 %v1741, %v1742
        %v1744 = vrot.slane %v1743, 1
        %v1745 = vadd.f32 %v1743, %v1744
        %v1746 = vadd.f32 %v1421, %v1745
        %v1747 = vmul.f32 %v1725, %v438
        %v1748 = vmul.f32 %v1726, %v439
        %v1749 = vadd.f32 %v1747, %v1748
        %v1750 = vrot.slane %v1749, 4
        %v1751 = vadd.f32 %v1749, %v1750
        %v1752 = vrot.slane %v1751, 2
        %v1753 = vadd.f32 %v1751, %v1752
        %v1754 = vrot.slane %v1753, 1
        %v1755 = vadd.f32 %v1753, %v1754
        %v1756 = vadd.f32 %v1430, %v1755
        %v1757 = vmul.f32 %v1725, %v508
        %v1758 = vmul.f32 %v1726, %v509
        %v1759 = vadd.f32 %v1757, %v1758
        %v1760 = vrot.slane %v1759, 4
        %v1761 = vadd.f32 %v1759, %v1760
        %v1762 = vrot.slane %v1761, 2
        %v1763 = vadd.f32 %v1761, %v1762
        %v1764 = vrot.slane %v1763, 1
        %v1765 = vadd.f32 %v1763, %v1764
        %v1766 = vadd.f32 %v1439, %v1765
        %v1767 = vmul.f32 %v1725, %v578
        %v1768 = vmul.f32 %v1726, %v579
        %v1769 = vadd.f32 %v1767, %v1768
        %v1770 = vrot.slane %v1769, 4
        %v1771 = vadd.f32 %v1769, %v1770
        %v1772 = vrot.slane %v1771, 2
        %v1773 = vadd.f32 %v1771, %v1772
        %v1774 = vrot.slane %v1773, 1
        %v1775 = vadd.f32 %v1773, %v1774
        %v1776 = vadd.f32 %v1448, %v1775
        %v1777 = vmul.f32 %v1725, %v648
        %v1778 = vmul.f32 %v1726, %v649
        %v1779 = vadd.f32 %v1777, %v1778
        %v1780 = vrot.slane %v1779, 4
        %v1781 = vadd.f32 %v1779, %v1780
        %v1782 = vrot.slane %v1781, 2
        %v1783 = vadd.f32 %v1781, %v1782
        %v1784 = vrot.slane %v1783, 1
        %v1785 = vadd.f32 %v1783, %v1784
        %v1786 = vadd.f32 %v1457, %v1785
        %v1787 = vmul.f32 %v1725, %v718
        %v1788 = vmul.f32 %v1726, %v719
        %v1789 = vadd.f32 %v1787, %v1788
        %v1790 = vrot.slane %v1789, 4
        %v1791 = vadd.f32 %v1789, %v1790
        %v1792 = vrot.slane %v1791, 2
        %v1793 = vadd.f32 %v1791, %v1792
        %v1794 = vrot.slane %v1793, 1
        %v1795 = vadd.f32 %v1793, %v1794
        %v1796 = vadd.f32 %v1466, %v1795
        %v1797 = vmul.f32 %v1725, %v788
        %v1798 = vmul.f32 %v1726, %v789
        %v1799 = vadd.f32 %v1797, %v1798
        %v1800 = vrot.slane %v1799, 4
        %v1801 = vadd.f32 %v1799, %v1800
        %v1802 = vrot.slane %v1801, 2
        %v1803 = vadd.f32 %v1801, %v1802
        %v1804 = vrot.slane %v1803, 1
        %v1805 = vadd.f32 %v1803, %v1804
        %v1806 = vadd.f32 %v1475, %v1805
        %v1807 = vmul.f32 %v1725, %v858
        %v1808 = vmul.f32 %v1726, %v859
        %v1809 = vadd.f32 %v1807, %v1808
        %v1810 = vrot.slane %v1809, 4
        %v1811 = vadd.f32 %v1809, %v1810
        %v1812 = vrot.slane %v1811, 2
        %v1813 = vadd.f32 %v1811, %v1812
        %v1814 = vrot.slane %v1813, 1
        %v1815 = vadd.f32 %v1813, %v1814
        %v1816 = vadd.f32 %v1484, %v1815
        %v1817 = vmul.f32 %v1725, %v928
        %v1818 = vmul.f32 %v1726, %v929
        %v1819 = vadd.f32 %v1817, %v1818
        %v1820 = vrot.slane %v1819, 4
        %v1821 = vadd.f32 %v1819, %v1820
        %v1822 = vrot.slane %v1821, 2
        %v1823 = vadd.f32 %v1821, %v1822
        %v1824 = vrot.slane %v1823, 1
        %v1825 = vadd.f32 %v1823, %v1824
        %v1826 = vadd.f32 %v1493, %v1825
        %v1827 = vmul.f32 %v1725, %v998
        %v1828 = vmul.f32 %v1726, %v999
        %v1829 = vadd.f32 %v1827, %v1828
        %v1830 = vrot.slane %v1829, 4
        %v1831 = vadd.f32 %v1829, %v1830
        %v1832 = vrot.slane %v1831, 2
        %v1833 = vadd.f32 %v1831, %v1832
        %v1834 = vrot.slane %v1833, 1
        %v1835 = vadd.f32 %v1833, %v1834
        %v1836 = vadd.f32 %v1502, %v1835
        %v1837 = vmul.f32 %v1725, %v1068
        %v1838 = vmul.f32 %v1726, %v1069
        %v1839 = vadd.f32 %v1837, %v1838
        %v1840 = vrot.slane %v1839, 4
        %v1841 = vadd.f32 %v1839, %v1840
        %v1842 = vrot.slane %v1841, 2
        %v1843 = vadd.f32 %v1841, %v1842
        %v1844 = vrot.slane %v1843, 1
        %v1845 = vadd.f32 %v1843, %v1844
        %v1846 = vadd.f32 %v1511, %v1845
        %v1847 = vmul.f32 %v1725, %v1138
        %v1848 = vmul.f32 %v1726, %v1139
        %v1849 = vadd.f32 %v1847, %v1848
        %v1850 = vrot.slane %v1849, 4
        %v1851 = vadd.f32 %v1849, %v1850
        %v1852 = vrot.slane %v1851, 2
        %v1853 = vadd.f32 %v1851, %v1852
        %v1854 = vrot.slane %v1853, 1
        %v1855 = vadd.f32 %v1853, %v1854
        %v1856 = vadd.f32 %v1520, %v1855
        %v1857 = vmul.f32 %v1725, %v1208
        %v1858 = vmul.f32 %v1726, %v1209
        %v1859 = vadd.f32 %v1857, %v1858
        %v1860 = vrot.slane %v1859, 4
        %v1861 = vadd.f32 %v1859, %v1860
        %v1862 = vrot.slane %v1861, 2
        %v1863 = vadd.f32 %v1861, %v1862
        %v1864 = vrot.slane %v1863, 1
        %v1865 = vadd.f32 %v1863, %v1864
        %v1866 = vadd.f32 %v1529, %v1865
        %v1867 = vmul.f32 %v1725, %v1278
        %v1868 = vmul.f32 %v1726, %v1279
        %v1869 = vadd.f32 %v1867, %v1868
        %v1870 = vrot.slane %v1869, 4
        %v1871 = vadd.f32 %v1869, %v1870
        %v1872 = vrot.slane %v1871, 2
        %v1873 = vadd.f32 %v1871, %v1872
        %v1874 = vrot.slane %v1873, 1
        %v1875 = vadd.f32 %v1873, %v1874
        %v1876 = vadd.f32 %v1538, %v1875
        %v1877 = vmul.f32 %v1725, %v1348
        %v1878 = vmul.f32 %v1726, %v1349
        %v1879 = vadd.f32 %v1877, %v1878
        %v1880 = vrot.slane %v1879, 4
        %v1881 = vadd.f32 %v1879, %v1880
        %v1882 = vrot.slane %v1881, 2
        %v1883 = vadd.f32 %v1881, %v1882
        %v1884 = vrot.slane %v1883, 1
        %v1885 = vadd.f32 %v1883, %v1884
        %v1886 = vadd.f32 %v1547, %v1885
        %v1887 = vmax.f32 %v1736, %v1746
        %v1888 = vmax.f32 %v1887, %v1756
        %v1889 = vmax.f32 %v1888, %v1766
        %v1890 = vmax.f32 %v1889, %v1776
        %v1891 = vmax.f32 %v1890, %v1786
        %v1892 = vmax.f32 %v1891, %v1796
        %v1893 = vmax.f32 %v1892, %v1806
        %v1894 = vmax.f32 %v1893, %v1816
        %v1895 = vmax.f32 %v1894, %v1826
        %v1896 = vmax.f32 %v1895, %v1836
        %v1897 = vmax.f32 %v1896, %v1846
        %v1898 = vmax.f32 %v1897, %v1856
        %v1899 = vmax.f32 %v1898, %v1866
        %v1900 = vmax.f32 %v1899, %v1876
        %v1901 = vmax.f32 %v1900, %v1886
        %v1902 = vsub.f32 %v1736, %v1901
        %v1903 = vmul.f32 %v1902, 1.442695
        %v1904 = vpow.pop %v1903
        %v1905 = vsub.f32 %v1746, %v1901
        %v1906 = vmul.f32 %v1905, 1.442695
        %v1907 = vpow.pop %v1906
        %v1908 = vsub.f32 %v1756, %v1901
        %v1909 = vmul.f32 %v1908, 1.442695
        %v1910 = vpow.pop %v1909
        %v1911 = vsub.f32 %v1766, %v1901
        %v1912 = vmul.f32 %v1911, 1.442695
        %v1913 = vpow.pop %v1912
        %v1914 = vsub.f32 %v1776, %v1901
        %v1915 = vmul.f32 %v1914, 1.442695
        %v1916 = vpow.pop %v1915
        %v1917 = vsub.f32 %v1786, %v1901
        %v1918 = vmul.f32 %v1917, 1.442695
        %v1919 = vpow.pop %v1918
        %v1920 = vsub.f32 %v1796, %v1901
        %v1921 = vmul.f32 %v1920, 1.442695
        %v1922 = vpow.pop %v1921
        %v1923 = vsub.f32 %v1806, %v1901
        %v1924 = vmul.f32 %v1923, 1.442695
        %v1925 = vpow.pop %v1924
        %v1926 = vsub.f32 %v1816, %v1901
        %v1927 = vmul.f32 %v1926, 1.442695
        %v1928 = vpow.pop %v1927
        %v1929 = vsub.f32 %v1826, %v1901
        %v1930 = vmul.f32 %v1929, 1.442695
        %v1931 = vpow.pop %v1930
        %v1932 = vsub.f32 %v1836, %v1901
        %v1933 = vmul.f32 %v1932, 1.442695
        %v1934 = vpow.pop %v1933
        %v1935 = vsub.f32 %v1846, %v1901
        %v1936 = vmul.f32 %v1935, 1.442695
        %v1937 = vpow.pop %v1936
        %v1938 = vsub.f32 %v1856, %v1901
        %v1939 = vmul.f32 %v1938, 1.442695
        %v1940 = vpow.pop %v1939
        %v1941 = vsub.f32 %v1866, %v1901
        %v1942 = vmul.f32 %v1941, 1.442695
        %v1943 = vpow.pop %v1942
        %v1944 = vsub.f32 %v1876, %v1901
        %v1945 = vmul.f32 %v1944, 1.442695
        %v1946 = vpow.pop %v1945
        %v1947 = vsub.f32 %v1886, %v1901
        %v1948 = vmul.f32 %v1947, 1.442695
        %v1949 = vpow.pop %v1948
        %v1950 = vadd.f32 %v1904, %v1907
        %v1951 = vadd.f32 %v1950, %v1910
        %v1952 = vadd.f32 %v1951, %v1913
        %v1953 = vadd.f32 %v1952, %v1916
        %v1954 = vadd.f32 %v1953, %v1919
        %v1955 = vadd.f32 %v1954, %v1922
        %v1956 = vadd.f32 %v1955, %v1925
        %v1957 = vadd.f32 %v1956, %v1928
        %v1958 = vadd.f32 %v1957, %v1931
        %v1959 = vadd.f32 %v1958, %v1934
        %v1960 = vadd.f32 %v1959, %v1937
        %v1961 = vadd.f32 %v1960, %v1940
        %v1962 = vadd.f32 %v1961, %v1943
        %v1963 = vadd.f32 %v1962, %v1946
        %v1964 = vadd.f32 %v1963, %v1949
        %v1965 = vrcp.pop %v1964
        %v1966 = vmul.f32 %v1904, %v1965
        %v1967 = vmul.f32 %v1966, %v298
        %v1968 = vmul.f32 %v1966, %v299
        %v1969 = vmul.f32 %v1907, %v1965
        %v1970 = vmul.f32 %v1969, %v368
        %v1971 = vmul.f32 %v1969, %v369
        %v1972 = vadd.f32 %v1967, %v1970
        %v1973 = vadd.f32 %v1968, %v1971
        %v1974 = vmul.f32 %v1910, %v1965
        %v1975 = vmul.f32 %v1974, %v438
        %v1976 = vmul.f32 %v1974, %v439
        %v1977 = vadd.f32 %v1972, %v1975
        %v1978 = vadd.f32 %v1973, %v1976
        %v1979 = vmul.f32 %v1913, %v1965
        %v1980 = vmul.f32 %v1979, %v508
        %v1981 = vmul.f32 %v1979, %v509
        %v1982 = vadd.f32 %v1977, %v1980
        %v1983 = vadd.f32 %v1978, %v1981
        %v1984 = vmul.f32 %v1916, %v1965
        %v1985 = vmul.f32 %v1984, %v578
        %v1986 = vmul.f32 %v1984, %v579
        %v1987 = vadd.f32 %v1982, %v1985
        %v1988 = vadd.f32 %v1983, %v1986
        %v1989 = vmul.f32 %v1919, %v1965
        %v1990 = vmul.f32 %v1989, %v648
        %v1991 = vmul.f32 %v1989, %v649
        %v1992 = vadd.f32 %v1987, %v1990
        %v1993 = vadd.f32 %v1988, %v1991
        %v1994 = vmul.f32 %v1922, %v1965
        %v1995 = vmul.f32 %v1994, %v718
        %v1996 = vmul.f32 %v1994, %v719
        %v1997 = vadd.f32 %v1992, %v1995
        %v1998 = vadd.f32 %v1993, %v1996
        %v1999 = vmul.f32 %v1925, %v1965
        %v2000 = vmul.f32 %v1999, %v788
        %v2001 = vmul.f32 %v1999, %v789
        %v2002 = vadd.f32 %v1997, %v2000
        %v2003 = vadd.f32 %v1998, %v2001
        %v2004 = vmul.f32 %v1928, %v1965
        %v2005 = vmul.f32 %v2004, %v858
        %v2006 = vmul.f32 %v2004, %v859
        %v2007 = vadd.f32 %v2002, %v2005
        %v2008 = vadd.f32 %v2003, %v2006
        %v2009 = vmul.f32 %v1931, %v1965
        %v2010 = vmul.f32 %v2009, %v928
        %v2011 = vmul.f32 %v2009, %v929
        %v2012 = vadd.f32 %v2007, %v2010
        %v2013 = vadd.f32 %v2008, %v2011
        %v2014 = vmul.f32 %v1934, %v1965
        %v2015 = vmul.f32 %v2014, %v998
        %v2016 = vmul.f32 %v2014, %v999
        %v2017 = vadd.f32 %v2012, %v2015
        %v2018 = vadd.f32 %v2013, %v2016
        %v2019 = vmul.f32 %v1937, %v1965
        %v2020 = vmul.f32 %v2019, %v1068
        %v2021 = vmul.f32 %v2019, %v1069
        %v2022 = vadd.f32 %v2017, %v2020
        %v2023 = vadd.f32 %v2018, %v2021
        %v2024 = vmul.f32 %v1940, %v1965
        %v2025 = vmul.f32 %v2024, %v1138
        %v2026 = vmul.f32 %v2024, %v1139
        %v2027 = vadd.f32 %v2022, %v2025
        %v2028 = vadd.f32 %v2023, %v2026
        %v2029 = vmul.f32 %v1943, %v1965
        %v2030 = vmul.f32 %v2029, %v1208
        %v2031 = vmul.f32 %v2029, %v1209
        %v2032 = vadd.f32 %v2027, %v2030
        %v2033 = vadd.f32 %v2028, %v2031
        %v2034 = vmul.f32 %v1946, %v1965
        %v2035 = vmul.f32 %v2034, %v1278
        %v2036 = vmul.f32 %v2034, %v1279
        %v2037 = vadd.f32 %v2032, %v2035
        %v2038 = vadd.f32 %v2033, %v2036
        %v2039 = vmul.f32 %v1949, %v1965
        %v2040 = vmul.f32 %v2039, %v1348
        %v2041 = vmul.f32 %v2039, %v1349
        %v2042 = vadd.f32 %v2037, %v2040
        %v2043 = vadd.f32 %v2038, %v2041
        %v2044 = vmul.f32 %v2042, %v2042
        %v2045 = vmul.f32 %v2043, %v2043
        %v2046 = vadd.f32 %v2044, %v2045
        %v2047 = vrot.slane %v2046, 4
        %v2048 = vadd.f32 %v2046, %v2047
        %v2049 = vrot.slane %v2048, 2
        %v2050 = vadd.f32 %v2048, %v2049
        %v2051 = vrot.slane %v2050, 1
        %v2052 = vadd.f32 %v2050, %v2051
        %v2053 = vrsqrt.pop %v2052
        %v2054 = vmul.f32 %v2052, %v2053
        %vm2055 = vcmp.eq.f32.partialorder %v2052, inf
        %v2056 = vsel %vm2055, %v2052, %v2054
        %vm2057 = vcmp.eq.f32.partialorder %v2052, 0.0
        %v2058 = vand.u32 %v2052, 2147483648
        %v2059 = vsel %vm2057, %v2058, %v2056
        %v2060 = vmul.f32 %v2042, %v2059
        %v2061 = vmul.f32 %v2043, %v2059
        %v2062 = vadd.f32 %v2052, 1.0
        %v2063 = vrcp.pop %v2062
        %v2064 = vmul.f32 %v2060, %v2063
        %v2065 = vmul.f32 %v2061, %v2063
        %2066 = vst [vmem:[%s197] sm:$0xff] %v2064
        %2067 = vst [vmem:[%s197 + $0x8] sm:$0xff] %v2065
        %s2068 = sand.u32 %s82, 1
        %s2069 = scalar_lea.sflag [#allocation4], %s2068
        %s2070 = sand.u32 %s82, 1
        %s2071 = smul.addr %s2070, 16
        %s2072 = scalar_lea.vmem [#allocation7], %s2071
        // Predicated region
        $region37: #{tpu_custom_call.1} parent=27 // pred_check
          %p2073 = pneg %p92
        $region38: #{tpu_custom_call.1} parent=27 // pred_check_branch
          %2075 = sbr.rel (%p2073) target = $region40
        $region39: #{tpu_custom_call.1} parent=27 // pred_region
          %s2077 = ssub.s32 256, 256
          %2078 = vsyncadd %s2069, %s2077
          %s2079 = smul.addr %s22, 128
          %s2080 = scalar_lea.hbm %s2, %s2079
          %s2081 = sshll.u32 %s2072, 4
          %s2082 = int_to_ptr.vmem [resolvable:$true] %s2081
          %2087 = dma.vmem_to_hbm [thread:$0]  %s2082, 256, %s2080, %s2069, 128, 256, 8
        $region40: #{tpu_custom_call.1} parent=27 // pred_fallthru
          _
      $region28: #{tpu_custom_call.1} parent=5 // pred_fallthru
        _
      %p2088 = scmp.le.s32.totalorder 2, %s17
      // Predicated region
      $region41: #{tpu_custom_call.1} parent=5 // pred_check
        %p2089 = pneg %p2088
      $region42: #{tpu_custom_call.1} parent=5 // pred_check_branch
        %2091 = sbr.rel (%p2089) target = $region44
      $region43: #{tpu_custom_call.1} parent=5 // pred_region
        %s2092 = ssub.s32 %s17, 2
        // Predicated region
        $region45: #{tpu_custom_call.1} parent=43 // pred_check
          %p2093 = pneg %p98
        $region46: #{tpu_custom_call.1} parent=43 // pred_check_branch
          %2095 = sbr.rel (%p2093) target = $region48
        $region47: #{tpu_custom_call.1} parent=43 // pred_region
          %s2096 = sand.u32 %s83, 1
          %s2097 = scalar_lea.sflag [#allocation4], %s2096
          %s2098 = sand.u32 %s83, 1
          %s2099 = smul.addr %s2098, 16
          %s2100 = scalar_lea.vmem [#allocation7], %s2099
          %2101 = dma.done %s2097, 256
        $region48: #{tpu_custom_call.1} parent=43 // pred_fallthru
          _
      $region44: #{tpu_custom_call.1} parent=5 // pred_fallthru
        _
    $region6: #{tpu_custom_call.1} parent=1 // loop_footer
      %s21 = sadd.s32 1, %s17
    $region7: #{tpu_custom_call.1} parent=1 // loop_footer_branch
      %16 = sbr.rel target = $region3
    $region8: #{tpu_custom_call.1} parent=1 // loop_exit
      _
    %2102 = vsyncpa [#allocation3], 1
    %s2103 = scalar_lea.sflag [#allocation3], 1
    %2104 = vsyncpa %s2103, 1
    %2105 = vsyncpa [#allocation6], 1
    %s2106 = scalar_lea.sflag [#allocation6], 1
    %2107 = vsyncpa %s2106, 1
    %2108 = vsyncpa [#allocation4], 1
    %s2109 = scalar_lea.sflag [#allocation4], 1
    %2110 = vsyncpa %s2109, 1

</llo_original>
